<compile_context>
chip_gen: v7x
topology: tpu7x:2x2x1
jax: 0.10.0
libtpu: 0.0.40
codegen_flags: <defaults>
</compile_context>

<pallas_src>
import jax
import jax.numpy as jnp
from jax import lax
from jax.experimental import pallas as pl
from jax.experimental.pallas import tpu as pltpu


# Static network dimensions (implied by Linear(196 -> 11) after two 2x2 pools
# of a 1-channel input: 28x28 MNIST-like images).
H1 = W1 = 28          # conv1 spatial size
C1 = 4                # conv1 out channels (= conv2 in channels)
H2 = W2 = 14          # conv2 spatial size (after pool1)
C2 = 4                # conv2 out channels
H3 = W3 = 7           # spatial size after pool2
FC_IN = C2 * H3 * W3  # 196
N_OUT = 11
FC_PAD = 128          # lane-padded fc output width


# ---------------------------------------------------------------------------
# In-kernel helpers
# ---------------------------------------------------------------------------
def _maxpool2x2(x):
    """Exact 2x2 / stride-2 max pool of a packed [R, C] slab via 0/1 selection
    matmuls.  R, C are even; because 2*k stays inside the same channel block
    (even block width), the co*W + w lane packing is preserved."""
    f32 = jnp.float32
    R, C = x.shape
    Ro, Co = R // 2, C // 2
    i = lax.broadcasted_iota(jnp.int32, (Ro, R), 1)
    j = lax.broadcasted_iota(jnp.int32, (Ro, R), 0)
    row_e = (i == 2 * j).astype(f32)                       # picks even rows
    row_o = (i == 2 * j + 1).astype(f32)                   # picks odd rows
    i = lax.broadcasted_iota(jnp.int32, (C, Co), 0)
    j = lax.broadcasted_iota(jnp.int32, (C, Co), 1)
    col_e = (i == 2 * j).astype(f32)                       # picks even cols
    col_o = (i == 2 * j + 1).astype(f32)                   # picks odd cols
    rows = jnp.maximum(jnp.dot(row_e, x, preferred_element_type=f32),
                       jnp.dot(row_o, x, preferred_element_type=f32))
    return jnp.maximum(jnp.dot(rows, col_e, preferred_element_type=f32),
                       jnp.dot(rows, col_o, preferred_element_type=f32))


# ---------------------------------------------------------------------------
# Single fused kernel: one grid step = one batch element, full network.
# ---------------------------------------------------------------------------
def _cnn_kernel(x_ref, w1_ref, b1_ref, w2_ref, b2_ref, wfc_ref, bfc_ref,
                out_ref, xpad1_ref, xpad2_ref):
    f32 = jnp.float32

    # ---- layer 1: pad -> conv3x3 (BN folded) -> ReLU -> maxpool -------------
    xpad1_ref[...] = jnp.zeros_like(xpad1_ref)
    xpad1_ref[1:H1 + 1, 1:W1 + 1] = x_ref[0, 0, :, :]

    acc1 = jnp.broadcast_to(b1_ref[...], (H1, C1 * W1))     # bias pre-added
    for dy in range(3):
        for dx in range(3):
            k = dy * 3 + dx
            shifted = xpad1_ref[dy:dy + H1, dx:dx + W1]      # [H1, W1]
            tiled = jnp.concatenate([shifted] * C1, axis=1)  # [H1, C1*W1]
            acc1 = acc1 + tiled * w1_ref[k:k + 1, :]
    h1 = jnp.maximum(acc1, 0.0)
    pooled1 = _maxpool2x2(h1)                                # [H2, C1*W2]

    # ---- layer 2: pad -> conv3x3 (BN folded) -> ReLU -> maxpool -------------
    xpad2_ref[...] = jnp.zeros_like(xpad2_ref)
    for c in range(C1):
        xpad2_ref[c, 1:H2 + 1, 1:W2 + 1] = pooled1[:, c * W2:(c + 1) * W2]

    acc2 = jnp.broadcast_to(b2_ref[...], (H2, C2 * W2))
    for ci in range(C1):
        for dy in range(3):
            for dx in range(3):
                k = ci * 9 + dy * 3 + dx
                shifted = xpad2_ref[ci, dy:dy + H2, dx:dx + W2]   # [H2, W2]
                tiled = jnp.concatenate([shifted] * C2, axis=1)   # [H2, C2*W2]
                acc2 = acc2 + tiled * w2_ref[k:k + 1, :]
    h2 = jnp.maximum(acc2, 0.0)
    pooled2 = _maxpool2x2(h2)                                # [H3, C2*W3]

    # ---- flatten (h-major lane concat; fc weight pre-permuted to match) + fc
    flat = jnp.concatenate([pooled2[h:h + 1, :] for h in range(H3)],
                           axis=1)                           # [1, FC_IN]
    res = jnp.dot(flat, wfc_ref[...], preferred_element_type=f32) + bfc_ref[...]
    out_ref[0, :, :] = res[:, :N_OUT]


# ---------------------------------------------------------------------------
# Parameter packing (done once; BN fold + lane packing + fc permute/pad)
# ---------------------------------------------------------------------------
def _fold_bn_into_conv(w, b, gamma, beta, mean, var, eps):
    scale = gamma / jnp.sqrt(var + eps)                      # [Cout]
    w_eff = w * scale[:, None, None, None]
    b_eff = b * scale + (beta - mean * scale)
    return w_eff, b_eff


def pack_params(p, eps=1e-5):
    w1e, b1e = _fold_bn_into_conv(p["w1"], p["b1"], p["g1"], p["bt1"],
                                  p["m1"], p["v1"], eps)
    w2e, b2e = _fold_bn_into_conv(p["w2"], p["b2"], p["g2"], p["bt2"],
                                  p["m2"], p["v2"], eps)

    # conv1: [Cout,1,3,3] -> per-tap lane vector [9, Cout*W1]
    w1p = jnp.repeat(w1e.reshape(C1, 9).T[:, :, None], W1,
                     axis=2).reshape(9, C1 * W1)
    b1p = jnp.repeat(b1e, W1).reshape(1, C1 * W1)

    # conv2: [Cout,Cin,3,3] -> per-(ci,tap) lane vector [Cin*9, Cout*W2]
    w2t = jnp.transpose(w2e, (1, 2, 3, 0)).reshape(C1 * 9, C2)   # [ci*9+tap, co]
    w2p = jnp.repeat(w2t[:, :, None], W2, axis=2).reshape(C1 * 9, C2 * W2)
    b2p = jnp.repeat(b2e, W2).reshape(1, C2 * W2)

    # fc: torch flatten is (c,h,w); kernel flatten is (h,c,w).  Permute once
    # and zero-pad the output dim to a lane-friendly width.
    wfc_perm = jnp.transpose(p["wfc"].reshape(N_OUT, C2, H3, W3),
                             (2, 1, 3, 0)).reshape(FC_IN, N_OUT)
    wfcp = jnp.zeros((FC_IN, FC_PAD), jnp.float32).at[:, :N_OUT].set(wfc_perm)
    bfcp = jnp.zeros((1, FC_PAD), jnp.float32).at[0, :N_OUT].set(p["bfc"])

    return {"w1p": w1p, "b1p": b1p, "w2p": w2p, "b2p": b2p,
            "wfcp": wfcp, "bfcp": bfcp}


# ---------------------------------------------------------------------------
# Full model (single fused Pallas call) + pure-JAX reference for validation
# ---------------------------------------------------------------------------
def cnn_forward_pallas(x, pp):
    B = x.shape[0]
    out = pl.pallas_call(
        _cnn_kernel,
        out_shape=jax.ShapeDtypeStruct((B, 1, N_OUT), jnp.float32),
        grid=(B,),
        in_specs=[
            pl.BlockSpec((1, 1, H1, W1), lambda b: (b, 0, 0, 0)),
            pl.BlockSpec((9, C1 * W1), lambda b: (0, 0)),
            pl.BlockSpec((1, C1 * W1), lambda b: (0, 0)),
            pl.BlockSpec((C1 * 9, C2 * W2), lambda b: (0, 0)),
            pl.BlockSpec((1, C2 * W2), lambda b: (0, 0)),
            pl.BlockSpec((FC_IN, FC_PAD), lambda b: (0, 0)),
            pl.BlockSpec((1, FC_PAD), lambda b: (0, 0)),
        ],
        out_specs=pl.BlockSpec((1, 1, N_OUT), lambda b: (b, 0, 0)),
        scratch_shapes=[
            pltpu.VMEM((H1 + 2, W1 + 2), jnp.float32),        # padded conv1 in
            pltpu.VMEM((C1, H2 + 2, W2 + 2), jnp.float32),    # padded conv2 in
        ],
        compiler_params=pltpu.CompilerParams(
            dimension_semantics=("parallel",)),
    )(x, pp["w1p"], pp["b1p"], pp["w2p"], pp["b2p"], pp["wfcp"], pp["bfcp"])
    return out.reshape(B, N_OUT)


def cnn_forward_reference(x, p, eps=1e-5):
    def conv(x, w, b):
        y = lax.conv_general_dilated(x, w, (1, 1), ((1, 1), (1, 1)),
                                     dimension_numbers=("NCHW", "OIHW", "NCHW"))
        return y + b.reshape(1, -1, 1, 1)

    def bn(x, g, bt, m, v):
        return (g.reshape(1, -1, 1, 1) * (x - m.reshape(1, -1, 1, 1))
                / jnp.sqrt(v.reshape(1, -1, 1, 1) + eps) + bt.reshape(1, -1, 1, 1))

    def pool(x):
        return lax.reduce_window(x, -jnp.inf, lax.max,
                                 (1, 1, 2, 2), (1, 1, 2, 2), "VALID")

    h = pool(jax.nn.relu(bn(conv(x, p["w1"], p["b1"]),
                            p["g1"], p["bt1"], p["m1"], p["v1"])))
    h = pool(jax.nn.relu(bn(conv(h, p["w2"], p["b2"]),
                            p["g2"], p["bt2"], p["m2"], p["v2"])))
    h = h.reshape(h.shape[0], -1)
    return h @ p["wfc"].T + p["bfc"]


def make_params(key):
    ks = jax.random.split(key, 16)
    f32 = jnp.float32
    return {
        "w1": jax.random.normal(ks[0], (4, 1, 3, 3), f32) * 0.3,
        "b1": jax.random.normal(ks[1], (4,), f32) * 0.1,
        "g1": 1.0 + 0.1 * jax.random.normal(ks[2], (4,), f32),
        "bt1": 0.1 * jax.random.normal(ks[3], (4,), f32),
        "m1": 0.1 * jax.random.normal(ks[4], (4,), f32),
        "v1": jax.random.uniform(ks[5], (4,), f32, 0.5, 1.5),
        "w2": jax.random.normal(ks[6], (4, 4, 3, 3), f32) * 0.2,
        "b2": jax.random.normal(ks[7], (4,), f32) * 0.1,
        "g2": 1.0 + 0.1 * jax.random.normal(ks[8], (4,), f32),
        "bt2": 0.1 * jax.random.normal(ks[9], (4,), f32),
        "m2": 0.1 * jax.random.normal(ks[10], (4,), f32),
        "v2": jax.random.uniform(ks[11], (4,), f32, 0.5, 1.5),
        "wfc": jax.random.normal(ks[12], (11, 196), f32) * 0.05,
        "bfc": jax.random.normal(ks[13], (11,), f32) * 0.1,
    }


if __name__ == "__main__":
    key = jax.random.PRNGKey(0)
    k_x, k_p = jax.random.split(key)
    params = make_params(k_p)
    packed = pack_params(params)          # one-time parameter packing / BN fold

    # Input implied by fc(196 -> 11) after two 2x2 pools of a 1-channel image:
    # 28x28 (MNIST-like).  Small batch = 2.
    x = jax.random.normal(k_x, (2, 1, 28, 28), jnp.float32)

    out = cnn_forward_pallas(x, packed)
    out = jax.block_until_ready(out)
    assert out.shape == (2, 11) and out.dtype == jnp.float32

    ref = jax.block_until_ready(cnn_forward_reference(x, params))
    assert jnp.allclose(out, ref, atol=1e-3, rtol=1e-3), (
        f"max abs err {jnp.max(jnp.abs(out - ref))}")

    print("KERNEL_OK")
</pallas_src>

<mosaic_0001>
module attributes {stable_mosaic.version = 11 : i64} {
  func.func @_cnn_kernel(%arg0: i32, %arg1: memref<1x1x28x28xf32, #tpu.memory_space<vmem>>, %arg2: memref<9x112xf32, #tpu.memory_space<vmem>>, %arg3: memref<1x112xf32, #tpu.memory_space<vmem>>, %arg4: memref<36x56xf32, #tpu.memory_space<vmem>>, %arg5: memref<1x56xf32, #tpu.memory_space<vmem>>, %arg6: memref<196x128xf32, #tpu.memory_space<vmem>>, %arg7: memref<1x128xf32, #tpu.memory_space<vmem>>, %arg8: memref<1x1x11xf32, #tpu.memory_space<vmem>>, %arg9: memref<30x30xf32, #tpu.memory_space<vmem>>, %arg10: memref<4x16x16xf32, #tpu.memory_space<vmem>>) attributes {dimension_semantics = [#tpu.dimension_semantics<parallel>], iteration_bounds = array<i64: 2>, scalar_prefetch = 0 : i64, scratch_operands = 2 : i64, tpu.core_type = #tpu.core_type<tc>, window_params = [{transform_indices = @transform_0, window_bounds = array<i64: 1, 1, 28, 28>}, {pipeline_mode = #tpu.pipeline_mode<synchronous>, transform_indices = @transform_1, window_bounds = array<i64: 9, 112>}, {pipeline_mode = #tpu.pipeline_mode<synchronous>, transform_indices = @transform_2, window_bounds = array<i64: 1, 112>}, {pipeline_mode = #tpu.pipeline_mode<synchronous>, transform_indices = @transform_3, window_bounds = array<i64: 36, 56>}, {pipeline_mode = #tpu.pipeline_mode<synchronous>, transform_indices = @transform_4, window_bounds = array<i64: 1, 56>}, {pipeline_mode = #tpu.pipeline_mode<synchronous>, transform_indices = @transform_5, window_bounds = array<i64: 196, 128>}, {pipeline_mode = #tpu.pipeline_mode<synchronous>, transform_indices = @transform_6, window_bounds = array<i64: 1, 128>}, {transform_indices = @transform_7, window_bounds = array<i64: 1, 1, 11>}]} {
    %cst = arith.constant 0.000000e+00 : f32
    %0 = vector.broadcast %cst : f32 to vector<30x30xf32>
    %c0 = arith.constant 0 : index
    %c0_0 = arith.constant 0 : index
    %1 = vector.load %arg9[%c0, %c0_0] : memref<30x30xf32, #tpu.memory_space<vmem>>, vector<30x30xf32>
    tpu.vector_store %arg9[%c0, %c0_0], %0 {strides = array<i32>} : memref<30x30xf32, #tpu.memory_space<vmem>>, vector<30x30xf32>,
    %c0_1 = arith.constant 0 : index
    %c0_2 = arith.constant 0 : index
    %c0_3 = arith.constant 0 : index
    %c0_4 = arith.constant 0 : index
    %2 = vector.load %arg1[%c0_1, %c0_2, %c0_3, %c0_4] : memref<1x1x28x28xf32, #tpu.memory_space<vmem>>, vector<1x1x28x28xf32>
    %3 = vector.shape_cast %2 : vector<1x1x28x28xf32> to vector<28x28xf32>
    %c1 = arith.constant 1 : index
    %c1_5 = arith.constant 1 : index
    %4 = vector.load %arg9[%c1, %c1_5] : memref<30x30xf32, #tpu.memory_space<vmem>>, vector<28x28xf32>
    tpu.vector_store %arg9[%c1, %c1_5], %3 {strides = array<i32>} : memref<30x30xf32, #tpu.memory_space<vmem>>, vector<28x28xf32>,
    %c0_6 = arith.constant 0 : index
    %c0_7 = arith.constant 0 : index
    %5 = vector.load %arg3[%c0_6, %c0_7] : memref<1x112xf32, #tpu.memory_space<vmem>>, vector<1x112xf32>
    %6 = vector.shape_cast %5 : vector<1x112xf32> to vector<1x112xf32>
    %7 = vector.broadcast %6 : vector<1x112xf32> to vector<28x112xf32>
    %c0_8 = arith.constant 0 : index
    %c0_9 = arith.constant 0 : index
    %8 = vector.load %arg9[%c0_8, %c0_9] : memref<30x30xf32, #tpu.memory_space<vmem>>, vector<28x28xf32>
    %9 = tpu.concatenate %8, %8, %8, %8 in 1 : vector<28x28xf32>, vector<28x28xf32>, vector<28x28xf32>, vector<28x28xf32> -> vector<28x112xf32>
    %c0_10 = arith.constant 0 : index
    %c0_11 = arith.constant 0 : index
    %10 = vector.load %arg2[%c0_10, %c0_11] : memref<9x112xf32, #tpu.memory_space<vmem>>, vector<1x112xf32>
    %11 = vector.broadcast %10 : vector<1x112xf32> to vector<28x112xf32>
    %12 = arith.mulf %9, %11 : vector<28x112xf32>
    %13 = arith.addf %7, %12 : vector<28x112xf32>
    %c0_12 = arith.constant 0 : index
    %c1_13 = arith.constant 1 : index
    %14 = vector.load %arg9[%c0_12, %c1_13] : memref<30x30xf32, #tpu.memory_space<vmem>>, vector<28x28xf32>
    %15 = tpu.concatenate %14, %14, %14, %14 in 1 : vector<28x28xf32>, vector<28x28xf32>, vector<28x28xf32>, vector<28x28xf32> -> vector<28x112xf32>
    %c1_14 = arith.constant 1 : index
    %c0_15 = arith.constant 0 : index
    %16 = vector.load %arg2[%c1_14, %c0_15] : memref<9x112xf32, #tpu.memory_space<vmem>>, vector<1x112xf32>
    %17 = vector.broadcast %16 : vector<1x112xf32> to vector<28x112xf32>
    %18 = arith.mulf %15, %17 : vector<28x112xf32>
    %19 = arith.addf %13, %18 : vector<28x112xf32>
    %c0_16 = arith.constant 0 : index
    %c2 = arith.constant 2 : index
    %20 = vector.load %arg9[%c0_16, %c2] : memref<30x30xf32, #tpu.memory_space<vmem>>, vector<28x28xf32>
    %21 = tpu.concatenate %20, %20, %20, %20 in 1 : vector<28x28xf32>, vector<28x28xf32>, vector<28x28xf32>, vector<28x28xf32> -> vector<28x112xf32>
    %c2_17 = arith.constant 2 : index
    %c0_18 = arith.constant 0 : index
    %22 = vector.load %arg2[%c2_17, %c0_18] : memref<9x112xf32, #tpu.memory_space<vmem>>, vector<1x112xf32>
    %23 = vector.broadcast %22 : vector<1x112xf32> to vector<28x112xf32>
    %24 = arith.mulf %21, %23 : vector<28x112xf32>
    %25 = arith.addf %19, %24 : vector<28x112xf32>
    %c1_19 = arith.constant 1 : index
    %c0_20 = arith.constant 0 : index
    %26 = vector.load %arg9[%c1_19, %c0_20] : memref<30x30xf32, #tpu.memory_space<vmem>>, vector<28x28xf32>
    %27 = tpu.concatenate %26, %26, %26, %26 in 1 : vector<28x28xf32>, vector<28x28xf32>, vector<28x28xf32>, vector<28x28xf32> -> vector<28x112xf32>
    %c3 = arith.constant 3 : index
    %c0_21 = arith.constant 0 : index
    %28 = vector.load %arg2[%c3, %c0_21] : memref<9x112xf32, #tpu.memory_space<vmem>>, vector<1x112xf32>
    %29 = vector.broadcast %28 : vector<1x112xf32> to vector<28x112xf32>
    %30 = arith.mulf %27, %29 : vector<28x112xf32>
    %31 = arith.addf %25, %30 : vector<28x112xf32>
    %c1_22 = arith.constant 1 : index
    %c1_23 = arith.constant 1 : index
    %32 = vector.load %arg9[%c1_22, %c1_23] : memref<30x30xf32, #tpu.memory_space<vmem>>, vector<28x28xf32>
    %33 = tpu.concatenate %32, %32, %32, %32 in 1 : vector<28x28xf32>, vector<28x28xf32>, vector<28x28xf32>, vector<28x28xf32> -> vector<28x112xf32>
    %c4 = arith.constant 4 : index
    %c0_24 = arith.constant 0 : index
    %34 = vector.load %arg2[%c4, %c0_24] : memref<9x112xf32, #tpu.memory_space<vmem>>, vector<1x112xf32>
    %35 = vector.broadcast %34 : vector<1x112xf32> to vector<28x112xf32>
    %36 = arith.mulf %33, %35 : vector<28x112xf32>
    %37 = arith.addf %31, %36 : vector<28x112xf32>
    %c1_25 = arith.constant 1 : index
    %c2_26 = arith.constant 2 : index
    %38 = vector.load %arg9[%c1_25, %c2_26] : memref<30x30xf32, #tpu.memory_space<vmem>>, vector<28x28xf32>
    %39 = tpu.concatenate %38, %38, %38, %38 in 1 : vector<28x28xf32>, vector<28x28xf32>, vector<28x28xf32>, vector<28x28xf32> -> vector<28x112xf32>
    %c5 = arith.constant 5 : index
    %c0_27 = arith.constant 0 : index
    %40 = vector.load %arg2[%c5, %c0_27] : memref<9x112xf32, #tpu.memory_space<vmem>>, vector<1x112xf32>
    %41 = vector.broadcast %40 : vector<1x112xf32> to vector<28x112xf32>
    %42 = arith.mulf %39, %41 : vector<28x112xf32>
    %43 = arith.addf %37, %42 : vector<28x112xf32>
    %c2_28 = arith.constant 2 : index
    %c0_29 = arith.constant 0 : index
    %44 = vector.load %arg9[%c2_28, %c0_29] : memref<30x30xf32, #tpu.memory_space<vmem>>, vector<28x28xf32>
    %45 = tpu.concatenate %44, %44, %44, %44 in 1 : vector<28x28xf32>, vector<28x28xf32>, vector<28x28xf32>, vector<28x28xf32> -> vector<28x112xf32>
    %c6 = arith.constant 6 : index
    %c0_30 = arith.constant 0 : index
    %46 = vector.load %arg2[%c6, %c0_30] : memref<9x112xf32, #tpu.memory_space<vmem>>, vector<1x112xf32>
    %47 = vector.broadcast %46 : vector<1x112xf32> to vector<28x112xf32>
    %48 = arith.mulf %45, %47 : vector<28x112xf32>
    %49 = arith.addf %43, %48 : vector<28x112xf32>
    %c2_31 = arith.constant 2 : index
    %c1_32 = arith.constant 1 : index
    %50 = vector.load %arg9[%c2_31, %c1_32] : memref<30x30xf32, #tpu.memory_space<vmem>>, vector<28x28xf32>
    %51 = tpu.concatenate %50, %50, %50, %50 in 1 : vector<28x28xf32>, vector<28x28xf32>, vector<28x28xf32>, vector<28x28xf32> -> vector<28x112xf32>
    %c7 = arith.constant 7 : index
    %c0_33 = arith.constant 0 : index
    %52 = vector.load %arg2[%c7, %c0_33] : memref<9x112xf32, #tpu.memory_space<vmem>>, vector<1x112xf32>
    %53 = vector.broadcast %52 : vector<1x112xf32> to vector<28x112xf32>
    %54 = arith.mulf %51, %53 : vector<28x112xf32>
    %55 = arith.addf %49, %54 : vector<28x112xf32>
    %c2_34 = arith.constant 2 : index
    %c2_35 = arith.constant 2 : index
    %56 = vector.load %arg9[%c2_34, %c2_35] : memref<30x30xf32, #tpu.memory_space<vmem>>, vector<28x28xf32>
    %57 = tpu.concatenate %56, %56, %56, %56 in 1 : vector<28x28xf32>, vector<28x28xf32>, vector<28x28xf32>, vector<28x28xf32> -> vector<28x112xf32>
    %c8 = arith.constant 8 : index
    %c0_36 = arith.constant 0 : index
    %58 = vector.load %arg2[%c8, %c0_36] : memref<9x112xf32, #tpu.memory_space<vmem>>, vector<1x112xf32>
    %59 = vector.broadcast %58 : vector<1x112xf32> to vector<28x112xf32>
    %60 = arith.mulf %57, %59 : vector<28x112xf32>
    %61 = arith.addf %55, %60 : vector<28x112xf32>
    %cst_37 = arith.constant 0.000000e+00 : f32
    %62 = vector.broadcast %cst_37 : f32 to vector<28x112xf32>
    %63 = arith.maximumf %61, %62 : vector<28x112xf32>
    %64 = tpu.iota {dimensions = array<i32: 1>} : vector<14x28xi32>
    %65 = tpu.iota {dimensions = array<i32: 0>} : vector<14x28xi32>
    %c2_i32 = arith.constant 2 : i32
    %66 = vector.broadcast %c2_i32 : i32 to vector<14x28xi32>
    %67 = arith.muli %66, %65 : vector<14x28xi32>
    %68 = arith.cmpi eq, %64, %67 : vector<14x28xi32>
    %69 = arith.extui %68 : vector<14x28xi1> to vector<14x28xi32>
    %70 = arith.sitofp %69 : vector<14x28xi32> to vector<14x28xf32>
    %c2_i32_38 = arith.constant 2 : i32
    %71 = vector.broadcast %c2_i32_38 : i32 to vector<14x28xi32>
    %72 = arith.muli %71, %65 : vector<14x28xi32>
    %c1_i32 = arith.constant 1 : i32
    %73 = vector.broadcast %c1_i32 : i32 to vector<14x28xi32>
    %74 = arith.addi %72, %73 : vector<14x28xi32>
    %75 = arith.cmpi eq, %64, %74 : vector<14x28xi32>
    %76 = arith.extui %75 : vector<14x28xi1> to vector<14x28xi32>
    %77 = arith.sitofp %76 : vector<14x28xi32> to vector<14x28xf32>
    %78 = tpu.iota {dimensions = array<i32: 0>} : vector<112x56xi32>
    %79 = tpu.iota {dimensions = array<i32: 1>} : vector<112x56xi32>
    %c2_i32_39 = arith.constant 2 : i32
    %80 = vector.broadcast %c2_i32_39 : i32 to vector<112x56xi32>
    %81 = arith.muli %80, %79 : vector<112x56xi32>
    %82 = arith.cmpi eq, %78, %81 : vector<112x56xi32>
    %83 = arith.extui %82 : vector<112x56xi1> to vector<112x56xi32>
    %84 = arith.sitofp %83 : vector<112x56xi32> to vector<112x56xf32>
    %c2_i32_40 = arith.constant 2 : i32
    %85 = vector.broadcast %c2_i32_40 : i32 to vector<112x56xi32>
    %86 = arith.muli %85, %79 : vector<112x56xi32>
    %c1_i32_41 = arith.constant 1 : i32
    %87 = vector.broadcast %c1_i32_41 : i32 to vector<112x56xi32>
    %88 = arith.addi %86, %87 : vector<112x56xi32>
    %89 = arith.cmpi eq, %78, %88 : vector<112x56xi32>
    %90 = arith.extui %89 : vector<112x56xi1> to vector<112x56xi32>
    %91 = arith.sitofp %90 : vector<112x56xi32> to vector<112x56xf32>
    %cst_42 = arith.constant dense<0.000000e+00> : vector<14x112xf32>
    %92 = tpu.matmul %70, %63, %cst_42 {dimension_numbers = #tpu.dot_dimension_numbers<[1], [0], [0], [1], [0, 0, 1, 1], [], []>} : vector<14x28xf32>, vector<28x112xf32>, vector<14x112xf32> -> vector<14x112xf32>
    %cst_43 = arith.constant dense<0.000000e+00> : vector<14x112xf32>
    %93 = tpu.matmul %77, %63, %cst_43 {dimension_numbers = #tpu.dot_dimension_numbers<[1], [0], [0], [1], [0, 0, 1, 1], [], []>} : vector<14x28xf32>, vector<28x112xf32>, vector<14x112xf32> -> vector<14x112xf32>
    %94 = arith.maximumf %92, %93 : vector<14x112xf32>
    %cst_44 = arith.constant dense<0.000000e+00> : vector<14x56xf32>
    %95 = tpu.matmul %94, %84, %cst_44 {dimension_numbers = #tpu.dot_dimension_numbers<[1], [0], [0], [1], [0, 0, 1, 1], [], []>} : vector<14x112xf32>, vector<112x56xf32>, vector<14x56xf32> -> vector<14x56xf32>
    %cst_45 = arith.constant dense<0.000000e+00> : vector<14x56xf32>
    %96 = tpu.matmul %94, %91, %cst_45 {dimension_numbers = #tpu.dot_dimension_numbers<[1], [0], [0], [1], [0, 0, 1, 1], [], []>} : vector<14x112xf32>, vector<112x56xf32>, vector<14x56xf32> -> vector<14x56xf32>
    %97 = arith.maximumf %95, %96 : vector<14x56xf32>
    %cst_46 = arith.constant 0.000000e+00 : f32
    %98 = vector.broadcast %cst_46 : f32 to vector<4x16x16xf32>
    %c0_47 = arith.constant 0 : index
    %c0_48 = arith.constant 0 : index
    %c0_49 = arith.constant 0 : index
    %99 = vector.load %arg10[%c0_47, %c0_48, %c0_49] : memref<4x16x16xf32, #tpu.memory_space<vmem>>, vector<4x16x16xf32>
    tpu.vector_store %arg10[%c0_47, %c0_48, %c0_49], %98 {strides = array<i32>} : memref<4x16x16xf32, #tpu.memory_space<vmem>>, vector<4x16x16xf32>,
    %100 = vector.extract_strided_slice %97 {offsets = [0, 0], sizes = [14, 14], strides = [1, 1]} : vector<14x56xf32> to vector<14x14xf32>
    %c0_50 = arith.constant 0 : index
    %c1_51 = arith.constant 1 : index
    %c1_52 = arith.constant 1 : index
    %101 = vector.load %arg10[%c0_50, %c1_51, %c1_52] : memref<4x16x16xf32, #tpu.memory_space<vmem>>, vector<1x14x14xf32>
    %102 = vector.shape_cast %101 : vector<1x14x14xf32> to vector<14x14xf32>
    %103 = vector.shape_cast %100 : vector<14x14xf32> to vector<1x14x14xf32>
    tpu.vector_store %arg10[%c0_50, %c1_51, %c1_52], %103 {strides = array<i32>} : memref<4x16x16xf32, #tpu.memory_space<vmem>>, vector<1x14x14xf32>,
    %104 = vector.extract_strided_slice %97 {offsets = [0, 14], sizes = [14, 14], strides = [1, 1]} : vector<14x56xf32> to vector<14x14xf32>
    %c1_53 = arith.constant 1 : index
    %c1_54 = arith.constant 1 : index
    %c1_55 = arith.constant 1 : index
    %105 = vector.load %arg10[%c1_53, %c1_54, %c1_55] : memref<4x16x16xf32, #tpu.memory_space<vmem>>, vector<1x14x14xf32>
    %106 = vector.shape_cast %105 : vector<1x14x14xf32> to vector<14x14xf32>
    %107 = vector.shape_cast %104 : vector<14x14xf32> to vector<1x14x14xf32>
    tpu.vector_store %arg10[%c1_53, %c1_54, %c1_55], %107 {strides = array<i32>} : memref<4x16x16xf32, #tpu.memory_space<vmem>>, vector<1x14x14xf32>,
    %108 = vector.extract_strided_slice %97 {offsets = [0, 28], sizes = [14, 14], strides = [1, 1]} : vector<14x56xf32> to vector<14x14xf32>
    %c2_56 = arith.constant 2 : index
    %c1_57 = arith.constant 1 : index
    %c1_58 = arith.constant 1 : index
    %109 = vector.load %arg10[%c2_56, %c1_57, %c1_58] : memref<4x16x16xf32, #tpu.memory_space<vmem>>, vector<1x14x14xf32>
    %110 = vector.shape_cast %109 : vector<1x14x14xf32> to vector<14x14xf32>
    %111 = vector.shape_cast %108 : vector<14x14xf32> to vector<1x14x14xf32>
    tpu.vector_store %arg10[%c2_56, %c1_57, %c1_58], %111 {strides = array<i32>} : memref<4x16x16xf32, #tpu.memory_space<vmem>>, vector<1x14x14xf32>,
    %112 = vector.extract_strided_slice %97 {offsets = [0, 42], sizes = [14, 14], strides = [1, 1]} : vector<14x56xf32> to vector<14x14xf32>
    %c3_59 = arith.constant 3 : index
    %c1_60 = arith.constant 1 : index
    %c1_61 = arith.constant 1 : index
    %113 = vector.load %arg10[%c3_59, %c1_60, %c1_61] : memref<4x16x16xf32, #tpu.memory_space<vmem>>, vector<1x14x14xf32>
    %114 = vector.shape_cast %113 : vector<1x14x14xf32> to vector<14x14xf32>
    %115 = vector.shape_cast %112 : vector<14x14xf32> to vector<1x14x14xf32>
    tpu.vector_store %arg10[%c3_59, %c1_60, %c1_61], %115 {strides = array<i32>} : memref<4x16x16xf32, #tpu.memory_space<vmem>>, vector<1x14x14xf32>,
    %c0_62 = arith.constant 0 : index
    %c0_63 = arith.constant 0 : index
    %116 = vector.load %arg5[%c0_62, %c0_63] : memref<1x56xf32, #tpu.memory_space<vmem>>, vector<1x56xf32>
    %117 = vector.shape_cast %116 : vector<1x56xf32> to vector<1x56xf32>
    %118 = vector.broadcast %117 : vector<1x56xf32> to vector<14x56xf32>
    %c0_64 = arith.constant 0 : index
    %c0_65 = arith.constant 0 : index
    %c0_66 = arith.constant 0 : index
    %119 = vector.load %arg10[%c0_64, %c0_65, %c0_66] : memref<4x16x16xf32, #tpu.memory_space<vmem>>, vector<1x14x14xf32>
    %120 = vector.shape_cast %119 : vector<1x14x14xf32> to vector<14x14xf32>
    %121 = tpu.concatenate %120, %120, %120, %120 in 1 : vector<14x14xf32>, vector<14x14xf32>, vector<14x14xf32>, vector<14x14xf32> -> vector<14x56xf32>
    %c0_67 = arith.constant 0 : index
    %c0_68 = arith.constant 0 : index
    %122 = vector.load %arg4[%c0_67, %c0_68] : memref<36x56xf32, #tpu.memory_space<vmem>>, vector<1x56xf32>
    %123 = vector.broadcast %122 : vector<1x56xf32> to vector<14x56xf32>
    %124 = arith.mulf %121, %123 : vector<14x56xf32>
    %125 = arith.addf %118, %124 : vector<14x56xf32>
    %c0_69 = arith.constant 0 : index
    %c0_70 = arith.constant 0 : index
    %c1_71 = arith.constant 1 : index
    %126 = vector.load %arg10[%c0_69, %c0_70, %c1_71] : memref<4x16x16xf32, #tpu.memory_space<vmem>>, vector<1x14x14xf32>
    %127 = vector.shape_cast %126 : vector<1x14x14xf32> to vector<14x14xf32>
    %128 = tpu.concatenate %127, %127, %127, %127 in 1 : vector<14x14xf32>, vector<14x14xf32>, vector<14x14xf32>, vector<14x14xf32> -> vector<14x56xf32>
    %c1_72 = arith.constant 1 : index
    %c0_73 = arith.constant 0 : index
    %129 = vector.load %arg4[%c1_72, %c0_73] : memref<36x56xf32, #tpu.memory_space<vmem>>, vector<1x56xf32>
    %130 = vector.broadcast %129 : vector<1x56xf32> to vector<14x56xf32>
    %131 = arith.mulf %128, %130 : vector<14x56xf32>
    %132 = arith.addf %125, %131 : vector<14x56xf32>
    %c0_74 = arith.constant 0 : index
    %c0_75 = arith.constant 0 : index
    %c2_76 = arith.constant 2 : index
    %133 = vector.load %arg10[%c0_74, %c0_75, %c2_76] : memref<4x16x16xf32, #tpu.memory_space<vmem>>, vector<1x14x14xf32>
    %134 = vector.shape_cast %133 : vector<1x14x14xf32> to vector<14x14xf32>
    %135 = tpu.concatenate %134, %134, %134, %134 in 1 : vector<14x14xf32>, vector<14x14xf32>, vector<14x14xf32>, vector<14x14xf32> -> vector<14x56xf32>
    %c2_77 = arith.constant 2 : index
    %c0_78 = arith.constant 0 : index
    %136 = vector.load %arg4[%c2_77, %c0_78] : memref<36x56xf32, #tpu.memory_space<vmem>>, vector<1x56xf32>
    %137 = vector.broadcast %136 : vector<1x56xf32> to vector<14x56xf32>
    %138 = arith.mulf %135, %137 : vector<14x56xf32>
    %139 = arith.addf %132, %138 : vector<14x56xf32>
    %c0_79 = arith.constant 0 : index
    %c1_80 = arith.constant 1 : index
    %c0_81 = arith.constant 0 : index
    %140 = vector.load %arg10[%c0_79, %c1_80, %c0_81] : memref<4x16x16xf32, #tpu.memory_space<vmem>>, vector<1x14x14xf32>
    %141 = vector.shape_cast %140 : vector<1x14x14xf32> to vector<14x14xf32>
    %142 = tpu.concatenate %141, %141, %141, %141 in 1 : vector<14x14xf32>, vector<14x14xf32>, vector<14x14xf32>, vector<14x14xf32> -> vector<14x56xf32>
    %c3_82 = arith.constant 3 : index
    %c0_83 = arith.constant 0 : index
    %143 = vector.load %arg4[%c3_82, %c0_83] : memref<36x56xf32, #tpu.memory_space<vmem>>, vector<1x56xf32>
    %144 = vector.broadcast %143 : vector<1x56xf32> to vector<14x56xf32>
    %145 = arith.mulf %142, %144 : vector<14x56xf32>
    %146 = arith.addf %139, %145 : vector<14x56xf32>
    %c0_84 = arith.constant 0 : index
    %c1_85 = arith.constant 1 : index
    %c1_86 = arith.constant 1 : index
    %147 = vector.load %arg10[%c0_84, %c1_85, %c1_86] : memref<4x16x16xf32, #tpu.memory_space<vmem>>, vector<1x14x14xf32>
    %148 = vector.shape_cast %147 : vector<1x14x14xf32> to vector<14x14xf32>
    %149 = tpu.concatenate %148, %148, %148, %148 in 1 : vector<14x14xf32>, vector<14x14xf32>, vector<14x14xf32>, vector<14x14xf32> -> vector<14x56xf32>
    %c4_87 = arith.constant 4 : index
    %c0_88 = arith.constant 0 : index
    %150 = vector.load %arg4[%c4_87, %c0_88] : memref<36x56xf32, #tpu.memory_space<vmem>>, vector<1x56xf32>
    %151 = vector.broadcast %150 : vector<1x56xf32> to vector<14x56xf32>
    %152 = arith.mulf %149, %151 : vector<14x56xf32>
    %153 = arith.addf %146, %152 : vector<14x56xf32>
    %c0_89 = arith.constant 0 : index
    %c1_90 = arith.constant 1 : index
    %c2_91 = arith.constant 2 : index
    %154 = vector.load %arg10[%c0_89, %c1_90, %c2_91] : memref<4x16x16xf32, #tpu.memory_space<vmem>>, vector<1x14x14xf32>
    %155 = vector.shape_cast %154 : vector<1x14x14xf32> to vector<14x14xf32>
    %156 = tpu.concatenate %155, %155, %155, %155 in 1 : vector<14x14xf32>, vector<14x14xf32>, vector<14x14xf32>, vector<14x14xf32> -> vector<14x56xf32>
    %c5_92 = arith.constant 5 : index
    %c0_93 = arith.constant 0 : index
    %157 = vector.load %arg4[%c5_92, %c0_93] : memref<36x56xf32, #tpu.memory_space<vmem>>, vector<1x56xf32>
    %158 = vector.broadcast %157 : vector<1x56xf32> to vector<14x56xf32>
    %159 = arith.mulf %156, %158 : vector<14x56xf32>
    %160 = arith.addf %153, %159 : vector<14x56xf32>
    %c0_94 = arith.constant 0 : index
    %c2_95 = arith.constant 2 : index
    %c0_96 = arith.constant 0 : index
    %161 = vector.load %arg10[%c0_94, %c2_95, %c0_96] : memref<4x16x16xf32, #tpu.memory_space<vmem>>, vector<1x14x14xf32>
    %162 = vector.shape_cast %161 : vector<1x14x14xf32> to vector<14x14xf32>
    %163 = tpu.concatenate %162, %162, %162, %162 in 1 : vector<14x14xf32>, vector<14x14xf32>, vector<14x14xf32>, vector<14x14xf32> -> vector<14x56xf32>
    %c6_97 = arith.constant 6 : index
    %c0_98 = arith.constant 0 : index
    %164 = vector.load %arg4[%c6_97, %c0_98] : memref<36x56xf32, #tpu.memory_space<vmem>>, vector<1x56xf32>
    %165 = vector.broadcast %164 : vector<1x56xf32> to vector<14x56xf32>
    %166 = arith.mulf %163, %165 : vector<14x56xf32>
    %167 = arith.addf %160, %166 : vector<14x56xf32>
    %c0_99 = arith.constant 0 : index
    %c2_100 = arith.constant 2 : index
    %c1_101 = arith.constant 1 : index
    %168 = vector.load %arg10[%c0_99, %c2_100, %c1_101] : memref<4x16x16xf32, #tpu.memory_space<vmem>>, vector<1x14x14xf32>
    %169 = vector.shape_cast %168 : vector<1x14x14xf32> to vector<14x14xf32>
    %170 = tpu.concatenate %169, %169, %169, %169 in 1 : vector<14x14xf32>, vector<14x14xf32>, vector<14x14xf32>, vector<14x14xf32> -> vector<14x56xf32>
    %c7_102 = arith.constant 7 : index
    %c0_103 = arith.constant 0 : index
    %171 = vector.load %arg4[%c7_102, %c0_103] : memref<36x56xf32, #tpu.memory_space<vmem>>, vector<1x56xf32>
    %172 = vector.broadcast %171 : vector<1x56xf32> to vector<14x56xf32>
    %173 = arith.mulf %170, %172 : vector<14x56xf32>
    %174 = arith.addf %167, %173 : vector<14x56xf32>
    %c0_104 = arith.constant 0 : index
    %c2_105 = arith.constant 2 : index
    %c2_106 = arith.constant 2 : index
    %175 = vector.load %arg10[%c0_104, %c2_105, %c2_106] : memref<4x16x16xf32, #tpu.memory_space<vmem>>, vector<1x14x14xf32>
    %176 = vector.shape_cast %175 : vector<1x14x14xf32> to vector<14x14xf32>
    %177 = tpu.concatenate %176, %176, %176, %176 in 1 : vector<14x14xf32>, vector<14x14xf32>, vector<14x14xf32>, vector<14x14xf32> -> vector<14x56xf32>
    %c8_107 = arith.constant 8 : index
    %c0_108 = arith.constant 0 : index
    %178 = vector.load %arg4[%c8_107, %c0_108] : memref<36x56xf32, #tpu.memory_space<vmem>>, vector<1x56xf32>
    %179 = vector.broadcast %178 : vector<1x56xf32> to vector<14x56xf32>
    %180 = arith.mulf %177, %179 : vector<14x56xf32>
    %181 = arith.addf %174, %180 : vector<14x56xf32>
    %c1_109 = arith.constant 1 : index
    %c0_110 = arith.constant 0 : index
    %c0_111 = arith.constant 0 : index
    %182 = vector.load %arg10[%c1_109, %c0_110, %c0_111] : memref<4x16x16xf32, #tpu.memory_space<vmem>>, vector<1x14x14xf32>
    %183 = vector.shape_cast %182 : vector<1x14x14xf32> to vector<14x14xf32>
    %184 = tpu.concatenate %183, %183, %183, %183 in 1 : vector<14x14xf32>, vector<14x14xf32>, vector<14x14xf32>, vector<14x14xf32> -> vector<14x56xf32>
    %c9 = arith.constant 9 : index
    %c0_112 = arith.constant 0 : index
    %185 = vector.load %arg4[%c9, %c0_112] : memref<36x56xf32, #tpu.memory_space<vmem>>, vector<1x56xf32>
    %186 = vector.broadcast %185 : vector<1x56xf32> to vector<14x56xf32>
    %187 = arith.mulf %184, %186 : vector<14x56xf32>
    %188 = arith.addf %181, %187 : vector<14x56xf32>
    %c1_113 = arith.constant 1 : index
    %c0_114 = arith.constant 0 : index
    %c1_115 = arith.constant 1 : index
    %189 = vector.load %arg10[%c1_113, %c0_114, %c1_115] : memref<4x16x16xf32, #tpu.memory_space<vmem>>, vector<1x14x14xf32>
    %190 = vector.shape_cast %189 : vector<1x14x14xf32> to vector<14x14xf32>
    %191 = tpu.concatenate %190, %190, %190, %190 in 1 : vector<14x14xf32>, vector<14x14xf32>, vector<14x14xf32>, vector<14x14xf32> -> vector<14x56xf32>
    %c10 = arith.constant 10 : index
    %c0_116 = arith.constant 0 : index
    %192 = vector.load %arg4[%c10, %c0_116] : memref<36x56xf32, #tpu.memory_space<vmem>>, vector<1x56xf32>
    %193 = vector.broadcast %192 : vector<1x56xf32> to vector<14x56xf32>
    %194 = arith.mulf %191, %193 : vector<14x56xf32>
    %195 = arith.addf %188, %194 : vector<14x56xf32>
    %c1_117 = arith.constant 1 : index
    %c0_118 = arith.constant 0 : index
    %c2_119 = arith.constant 2 : index
    %196 = vector.load %arg10[%c1_117, %c0_118, %c2_119] : memref<4x16x16xf32, #tpu.memory_space<vmem>>, vector<1x14x14xf32>
    %197 = vector.shape_cast %196 : vector<1x14x14xf32> to vector<14x14xf32>
    %198 = tpu.concatenate %197, %197, %197, %197 in 1 : vector<14x14xf32>, vector<14x14xf32>, vector<14x14xf32>, vector<14x14xf32> -> vector<14x56xf32>
    %c11 = arith.constant 11 : index
    %c0_120 = arith.constant 0 : index
    %199 = vector.load %arg4[%c11, %c0_120] : memref<36x56xf32, #tpu.memory_space<vmem>>, vector<1x56xf32>
    %200 = vector.broadcast %199 : vector<1x56xf32> to vector<14x56xf32>
    %201 = arith.mulf %198, %200 : vector<14x56xf32>
    %202 = arith.addf %195, %201 : vector<14x56xf32>
    %c1_121 = arith.constant 1 : index
    %c1_122 = arith.constant 1 : index
    %c0_123 = arith.constant 0 : index
    %203 = vector.load %arg10[%c1_121, %c1_122, %c0_123] : memref<4x16x16xf32, #tpu.memory_space<vmem>>, vector<1x14x14xf32>
    %204 = vector.shape_cast %203 : vector<1x14x14xf32> to vector<14x14xf32>
    %205 = tpu.concatenate %204, %204, %204, %204 in 1 : vector<14x14xf32>, vector<14x14xf32>, vector<14x14xf32>, vector<14x14xf32> -> vector<14x56xf32>
    %c12 = arith.constant 12 : index
    %c0_124 = arith.constant 0 : index
    %206 = vector.load %arg4[%c12, %c0_124] : memref<36x56xf32, #tpu.memory_space<vmem>>, vector<1x56xf32>
    %207 = vector.broadcast %206 : vector<1x56xf32> to vector<14x56xf32>
    %208 = arith.mulf %205, %207 : vector<14x56xf32>
    %209 = arith.addf %202, %208 : vector<14x56xf32>
    %c1_125 = arith.constant 1 : index
    %c1_126 = arith.constant 1 : index
    %c1_127 = arith.constant 1 : index
    %210 = vector.load %arg10[%c1_125, %c1_126, %c1_127] : memref<4x16x16xf32, #tpu.memory_space<vmem>>, vector<1x14x14xf32>
    %211 = vector.shape_cast %210 : vector<1x14x14xf32> to vector<14x14xf32>
    %212 = tpu.concatenate %211, %211, %211, %211 in 1 : vector<14x14xf32>, vector<14x14xf32>, vector<14x14xf32>, vector<14x14xf32> -> vector<14x56xf32>
    %c13 = arith.constant 13 : index
    %c0_128 = arith.constant 0 : index
    %213 = vector.load %arg4[%c13, %c0_128] : memref<36x56xf32, #tpu.memory_space<vmem>>, vector<1x56xf32>
    %214 = vector.broadcast %213 : vector<1x56xf32> to vector<14x56xf32>
    %215 = arith.mulf %212, %214 : vector<14x56xf32>
    %216 = arith.addf %209, %215 : vector<14x56xf32>
    %c1_129 = arith.constant 1 : index
    %c1_130 = arith.constant 1 : index
    %c2_131 = arith.constant 2 : index
    %217 = vector.load %arg10[%c1_129, %c1_130, %c2_131] : memref<4x16x16xf32, #tpu.memory_space<vmem>>, vector<1x14x14xf32>
    %218 = vector.shape_cast %217 : vector<1x14x14xf32> to vector<14x14xf32>
    %219 = tpu.concatenate %218, %218, %218, %218 in 1 : vector<14x14xf32>, vector<14x14xf32>, vector<14x14xf32>, vector<14x14xf32> -> vector<14x56xf32>
    %c14 = arith.constant 14 : index
    %c0_132 = arith.constant 0 : index
    %220 = vector.load %arg4[%c14, %c0_132] : memref<36x56xf32, #tpu.memory_space<vmem>>, vector<1x56xf32>
    %221 = vector.broadcast %220 : vector<1x56xf32> to vector<14x56xf32>
    %222 = arith.mulf %219, %221 : vector<14x56xf32>
    %223 = arith.addf %216, %222 : vector<14x56xf32>
    %c1_133 = arith.constant 1 : index
    %c2_134 = arith.constant 2 : index
    %c0_135 = arith.constant 0 : index
    %224 = vector.load %arg10[%c1_133, %c2_134, %c0_135] : memref<4x16x16xf32, #tpu.memory_space<vmem>>, vector<1x14x14xf32>
    %225 = vector.shape_cast %224 : vector<1x14x14xf32> to vector<14x14xf32>
    %226 = tpu.concatenate %225, %225, %225, %225 in 1 : vector<14x14xf32>, vector<14x14xf32>, vector<14x14xf32>, vector<14x14xf32> -> vector<14x56xf32>
    %c15 = arith.constant 15 : index
    %c0_136 = arith.constant 0 : index
    %227 = vector.load %arg4[%c15, %c0_136] : memref<36x56xf32, #tpu.memory_space<vmem>>, vector<1x56xf32>
    %228 = vector.broadcast %227 : vector<1x56xf32> to vector<14x56xf32>
    %229 = arith.mulf %226, %228 : vector<14x56xf32>
    %230 = arith.addf %223, %229 : vector<14x56xf32>
    %c1_137 = arith.constant 1 : index
    %c2_138 = arith.constant 2 : index
    %c1_139 = arith.constant 1 : index
    %231 = vector.load %arg10[%c1_137, %c2_138, %c1_139] : memref<4x16x16xf32, #tpu.memory_space<vmem>>, vector<1x14x14xf32>
    %232 = vector.shape_cast %231 : vector<1x14x14xf32> to vector<14x14xf32>
    %233 = tpu.concatenate %232, %232, %232, %232 in 1 : vector<14x14xf32>, vector<14x14xf32>, vector<14x14xf32>, vector<14x14xf32> -> vector<14x56xf32>
    %c16 = arith.constant 16 : index
    %c0_140 = arith.constant 0 : index
    %234 = vector.load %arg4[%c16, %c0_140] : memref<36x56xf32, #tpu.memory_space<vmem>>, vector<1x56xf32>
    %235 = vector.broadcast %234 : vector<1x56xf32> to vector<14x56xf32>
    %236 = arith.mulf %233, %235 : vector<14x56xf32>
    %237 = arith.addf %230, %236 : vector<14x56xf32>
    %c1_141 = arith.constant 1 : index
    %c2_142 = arith.constant 2 : index
    %c2_143 = arith.constant 2 : index
    %238 = vector.load %arg10[%c1_141, %c2_142, %c2_143] : memref<4x16x16xf32, #tpu.memory_space<vmem>>, vector<1x14x14xf32>
    %239 = vector.shape_cast %238 : vector<1x14x14xf32> to vector<14x14xf32>
    %240 = tpu.concatenate %239, %239, %239, %239 in 1 : vector<14x14xf32>, vector<14x14xf32>, vector<14x14xf32>, vector<14x14xf32> -> vector<14x56xf32>
    %c17 = arith.constant 17 : index
    %c0_144 = arith.constant 0 : index
    %241 = vector.load %arg4[%c17, %c0_144] : memref<36x56xf32, #tpu.memory_space<vmem>>, vector<1x56xf32>
    %242 = vector.broadcast %241 : vector<1x56xf32> to vector<14x56xf32>
    %243 = arith.mulf %240, %242 : vector<14x56xf32>
    %244 = arith.addf %237, %243 : vector<14x56xf32>
    %c2_145 = arith.constant 2 : index
    %c0_146 = arith.constant 0 : index
    %c0_147 = arith.constant 0 : index
    %245 = vector.load %arg10[%c2_145, %c0_146, %c0_147] : memref<4x16x16xf32, #tpu.memory_space<vmem>>, vector<1x14x14xf32>
    %246 = vector.shape_cast %245 : vector<1x14x14xf32> to vector<14x14xf32>
    %247 = tpu.concatenate %246, %246, %246, %246 in 1 : vector<14x14xf32>, vector<14x14xf32>, vector<14x14xf32>, vector<14x14xf32> -> vector<14x56xf32>
    %c18 = arith.constant 18 : index
    %c0_148 = arith.constant 0 : index
    %248 = vector.load %arg4[%c18, %c0_148] : memref<36x56xf32, #tpu.memory_space<vmem>>, vector<1x56xf32>
    %249 = vector.broadcast %248 : vector<1x56xf32> to vector<14x56xf32>
    %250 = arith.mulf %247, %249 : vector<14x56xf32>
    %251 = arith.addf %244, %250 : vector<14x56xf32>
    %c2_149 = arith.constant 2 : index
    %c0_150 = arith.constant 0 : index
    %c1_151 = arith.constant 1 : index
    %252 = vector.load %arg10[%c2_149, %c0_150, %c1_151] : memref<4x16x16xf32, #tpu.memory_space<vmem>>, vector<1x14x14xf32>
    %253 = vector.shape_cast %252 : vector<1x14x14xf32> to vector<14x14xf32>
    %254 = tpu.concatenate %253, %253, %253, %253 in 1 : vector<14x14xf32>, vector<14x14xf32>, vector<14x14xf32>, vector<14x14xf32> -> vector<14x56xf32>
    %c19 = arith.constant 19 : index
    %c0_152 = arith.constant 0 : index
    %255 = vector.load %arg4[%c19, %c0_152] : memref<36x56xf32, #tpu.memory_space<vmem>>, vector<1x56xf32>
    %256 = vector.broadcast %255 : vector<1x56xf32> to vector<14x56xf32>
    %257 = arith.mulf %254, %256 : vector<14x56xf32>
    %258 = arith.addf %251, %257 : vector<14x56xf32>
    %c2_153 = arith.constant 2 : index
    %c0_154 = arith.constant 0 : index
    %c2_155 = arith.constant 2 : index
    %259 = vector.load %arg10[%c2_153, %c0_154, %c2_155] : memref<4x16x16xf32, #tpu.memory_space<vmem>>, vector<1x14x14xf32>
    %260 = vector.shape_cast %259 : vector<1x14x14xf32> to vector<14x14xf32>
    %261 = tpu.concatenate %260, %260, %260, %260 in 1 : vector<14x14xf32>, vector<14x14xf32>, vector<14x14xf32>, vector<14x14xf32> -> vector<14x56xf32>
    %c20 = arith.constant 20 : index
    %c0_156 = arith.constant 0 : index
    %262 = vector.load %arg4[%c20, %c0_156] : memref<36x56xf32, #tpu.memory_space<vmem>>, vector<1x56xf32>
    %263 = vector.broadcast %262 : vector<1x56xf32> to vector<14x56xf32>
    %264 = arith.mulf %261, %263 : vector<14x56xf32>
    %265 = arith.addf %258, %264 : vector<14x56xf32>
    %c2_157 = arith.constant 2 : index
    %c1_158 = arith.constant 1 : index
    %c0_159 = arith.constant 0 : index
    %266 = vector.load %arg10[%c2_157, %c1_158, %c0_159] : memref<4x16x16xf32, #tpu.memory_space<vmem>>, vector<1x14x14xf32>
    %267 = vector.shape_cast %266 : vector<1x14x14xf32> to vector<14x14xf32>
    %268 = tpu.concatenate %267, %267, %267, %267 in 1 : vector<14x14xf32>, vector<14x14xf32>, vector<14x14xf32>, vector<14x14xf32> -> vector<14x56xf32>
    %c21 = arith.constant 21 : index
    %c0_160 = arith.constant 0 : index
    %269 = vector.load %arg4[%c21, %c0_160] : memref<36x56xf32, #tpu.memory_space<vmem>>, vector<1x56xf32>
    %270 = vector.broadcast %269 : vector<1x56xf32> to vector<14x56xf32>
    %271 = arith.mulf %268, %270 : vector<14x56xf32>
    %272 = arith.addf %265, %271 : vector<14x56xf32>
    %c2_161 = arith.constant 2 : index
    %c1_162 = arith.constant 1 : index
    %c1_163 = arith.constant 1 : index
    %273 = vector.load %arg10[%c2_161, %c1_162, %c1_163] : memref<4x16x16xf32, #tpu.memory_space<vmem>>, vector<1x14x14xf32>
    %274 = vector.shape_cast %273 : vector<1x14x14xf32> to vector<14x14xf32>
    %275 = tpu.concatenate %274, %274, %274, %274 in 1 : vector<14x14xf32>, vector<14x14xf32>, vector<14x14xf32>, vector<14x14xf32> -> vector<14x56xf32>
    %c22 = arith.constant 22 : index
    %c0_164 = arith.constant 0 : index
    %276 = vector.load %arg4[%c22, %c0_164] : memref<36x56xf32, #tpu.memory_space<vmem>>, vector<1x56xf32>
    %277 = vector.broadcast %276 : vector<1x56xf32> to vector<14x56xf32>
    %278 = arith.mulf %275, %277 : vector<14x56xf32>
    %279 = arith.addf %272, %278 : vector<14x56xf32>
    %c2_165 = arith.constant 2 : index
    %c1_166 = arith.constant 1 : index
    %c2_167 = arith.constant 2 : index
    %280 = vector.load %arg10[%c2_165, %c1_166, %c2_167] : memref<4x16x16xf32, #tpu.memory_space<vmem>>, vector<1x14x14xf32>
    %281 = vector.shape_cast %280 : vector<1x14x14xf32> to vector<14x14xf32>
    %282 = tpu.concatenate %281, %281, %281, %281 in 1 : vector<14x14xf32>, vector<14x14xf32>, vector<14x14xf32>, vector<14x14xf32> -> vector<14x56xf32>
    %c23 = arith.constant 23 : index
    %c0_168 = arith.constant 0 : index
    %283 = vector.load %arg4[%c23, %c0_168] : memref<36x56xf32, #tpu.memory_space<vmem>>, vector<1x56xf32>
    %284 = vector.broadcast %283 : vector<1x56xf32> to vector<14x56xf32>
    %285 = arith.mulf %282, %284 : vector<14x56xf32>
    %286 = arith.addf %279, %285 : vector<14x56xf32>
    %c2_169 = arith.constant 2 : index
    %c2_170 = arith.constant 2 : index
    %c0_171 = arith.constant 0 : index
    %287 = vector.load %arg10[%c2_169, %c2_170, %c0_171] : memref<4x16x16xf32, #tpu.memory_space<vmem>>, vector<1x14x14xf32>
    %288 = vector.shape_cast %287 : vector<1x14x14xf32> to vector<14x14xf32>
    %289 = tpu.concatenate %288, %288, %288, %288 in 1 : vector<14x14xf32>, vector<14x14xf32>, vector<14x14xf32>, vector<14x14xf32> -> vector<14x56xf32>
    %c24 = arith.constant 24 : index
    %c0_172 = arith.constant 0 : index
    %290 = vector.load %arg4[%c24, %c0_172] : memref<36x56xf32, #tpu.memory_space<vmem>>, vector<1x56xf32>
    %291 = vector.broadcast %290 : vector<1x56xf32> to vector<14x56xf32>
    %292 = arith.mulf %289, %291 : vector<14x56xf32>
    %293 = arith.addf %286, %292 : vector<14x56xf32>
    %c2_173 = arith.constant 2 : index
    %c2_174 = arith.constant 2 : index
    %c1_175 = arith.constant 1 : index
    %294 = vector.load %arg10[%c2_173, %c2_174, %c1_175] : memref<4x16x16xf32, #tpu.memory_space<vmem>>, vector<1x14x14xf32>
    %295 = vector.shape_cast %294 : vector<1x14x14xf32> to vector<14x14xf32>
    %296 = tpu.concatenate %295, %295, %295, %295 in 1 : vector<14x14xf32>, vector<14x14xf32>, vector<14x14xf32>, vector<14x14xf32> -> vector<14x56xf32>
    %c25 = arith.constant 25 : index
    %c0_176 = arith.constant 0 : index
    %297 = vector.load %arg4[%c25, %c0_176] : memref<36x56xf32, #tpu.memory_space<vmem>>, vector<1x56xf32>
    %298 = vector.broadcast %297 : vector<1x56xf32> to vector<14x56xf32>
    %299 = arith.mulf %296, %298 : vector<14x56xf32>
    %300 = arith.addf %293, %299 : vector<14x56xf32>
    %c2_177 = arith.constant 2 : index
    %c2_178 = arith.constant 2 : index
    %c2_179 = arith.constant 2 : index
    %301 = vector.load %arg10[%c2_177, %c2_178, %c2_179] : memref<4x16x16xf32, #tpu.memory_space<vmem>>, vector<1x14x14xf32>
    %302 = vector.shape_cast %301 : vector<1x14x14xf32> to vector<14x14xf32>
    %303 = tpu.concatenate %302, %302, %302, %302 in 1 : vector<14x14xf32>, vector<14x14xf32>, vector<14x14xf32>, vector<14x14xf32> -> vector<14x56xf32>
    %c26 = arith.constant 26 : index
    %c0_180 = arith.constant 0 : index
    %304 = vector.load %arg4[%c26, %c0_180] : memref<36x56xf32, #tpu.memory_space<vmem>>, vector<1x56xf32>
    %305 = vector.broadcast %304 : vector<1x56xf32> to vector<14x56xf32>
    %306 = arith.mulf %303, %305 : vector<14x56xf32>
    %307 = arith.addf %300, %306 : vector<14x56xf32>
    %c3_181 = arith.constant 3 : index
    %c0_182 = arith.constant 0 : index
    %c0_183 = arith.constant 0 : index
    %308 = vector.load %arg10[%c3_181, %c0_182, %c0_183] : memref<4x16x16xf32, #tpu.memory_space<vmem>>, vector<1x14x14xf32>
    %309 = vector.shape_cast %308 : vector<1x14x14xf32> to vector<14x14xf32>
    %310 = tpu.concatenate %309, %309, %309, %309 in 1 : vector<14x14xf32>, vector<14x14xf32>, vector<14x14xf32>, vector<14x14xf32> -> vector<14x56xf32>
    %c27 = arith.constant 27 : index
    %c0_184 = arith.constant 0 : index
    %311 = vector.load %arg4[%c27, %c0_184] : memref<36x56xf32, #tpu.memory_space<vmem>>, vector<1x56xf32>
    %312 = vector.broadcast %311 : vector<1x56xf32> to vector<14x56xf32>
    %313 = arith.mulf %310, %312 : vector<14x56xf32>
    %314 = arith.addf %307, %313 : vector<14x56xf32>
    %c3_185 = arith.constant 3 : index
    %c0_186 = arith.constant 0 : index
    %c1_187 = arith.constant 1 : index
    %315 = vector.load %arg10[%c3_185, %c0_186, %c1_187] : memref<4x16x16xf32, #tpu.memory_space<vmem>>, vector<1x14x14xf32>
    %316 = vector.shape_cast %315 : vector<1x14x14xf32> to vector<14x14xf32>
    %317 = tpu.concatenate %316, %316, %316, %316 in 1 : vector<14x14xf32>, vector<14x14xf32>, vector<14x14xf32>, vector<14x14xf32> -> vector<14x56xf32>
    %c28 = arith.constant 28 : index
    %c0_188 = arith.constant 0 : index
    %318 = vector.load %arg4[%c28, %c0_188] : memref<36x56xf32, #tpu.memory_space<vmem>>, vector<1x56xf32>
    %319 = vector.broadcast %318 : vector<1x56xf32> to vector<14x56xf32>
    %320 = arith.mulf %317, %319 : vector<14x56xf32>
    %321 = arith.addf %314, %320 : vector<14x56xf32>
    %c3_189 = arith.constant 3 : index
    %c0_190 = arith.constant 0 : index
    %c2_191 = arith.constant 2 : index
    %322 = vector.load %arg10[%c3_189, %c0_190, %c2_191] : memref<4x16x16xf32, #tpu.memory_space<vmem>>, vector<1x14x14xf32>
    %323 = vector.shape_cast %322 : vector<1x14x14xf32> to vector<14x14xf32>
    %324 = tpu.concatenate %323, %323, %323, %323 in 1 : vector<14x14xf32>, vector<14x14xf32>, vector<14x14xf32>, vector<14x14xf32> -> vector<14x56xf32>
    %c29 = arith.constant 29 : index
    %c0_192 = arith.constant 0 : index
    %325 = vector.load %arg4[%c29, %c0_192] : memref<36x56xf32, #tpu.memory_space<vmem>>, vector<1x56xf32>
    %326 = vector.broadcast %325 : vector<1x56xf32> to vector<14x56xf32>
    %327 = arith.mulf %324, %326 : vector<14x56xf32>
    %328 = arith.addf %321, %327 : vector<14x56xf32>
    %c3_193 = arith.constant 3 : index
    %c1_194 = arith.constant 1 : index
    %c0_195 = arith.constant 0 : index
    %329 = vector.load %arg10[%c3_193, %c1_194, %c0_195] : memref<4x16x16xf32, #tpu.memory_space<vmem>>, vector<1x14x14xf32>
    %330 = vector.shape_cast %329 : vector<1x14x14xf32> to vector<14x14xf32>
    %331 = tpu.concatenate %330, %330, %330, %330 in 1 : vector<14x14xf32>, vector<14x14xf32>, vector<14x14xf32>, vector<14x14xf32> -> vector<14x56xf32>
    %c30 = arith.constant 30 : index
    %c0_196 = arith.constant 0 : index
    %332 = vector.load %arg4[%c30, %c0_196] : memref<36x56xf32, #tpu.memory_space<vmem>>, vector<1x56xf32>
    %333 = vector.broadcast %332 : vector<1x56xf32> to vector<14x56xf32>
    %334 = arith.mulf %331, %333 : vector<14x56xf32>
    %335 = arith.addf %328, %334 : vector<14x56xf32>
    %c3_197 = arith.constant 3 : index
    %c1_198 = arith.constant 1 : index
    %c1_199 = arith.constant 1 : index
    %336 = vector.load %arg10[%c3_197, %c1_198, %c1_199] : memref<4x16x16xf32, #tpu.memory_space<vmem>>, vector<1x14x14xf32>
    %337 = vector.shape_cast %336 : vector<1x14x14xf32> to vector<14x14xf32>
    %338 = tpu.concatenate %337, %337, %337, %337 in 1 : vector<14x14xf32>, vector<14x14xf32>, vector<14x14xf32>, vector<14x14xf32> -> vector<14x56xf32>
    %c31 = arith.constant 31 : index
    %c0_200 = arith.constant 0 : index
    %339 = vector.load %arg4[%c31, %c0_200] : memref<36x56xf32, #tpu.memory_space<vmem>>, vector<1x56xf32>
    %340 = vector.broadcast %339 : vector<1x56xf32> to vector<14x56xf32>
    %341 = arith.mulf %338, %340 : vector<14x56xf32>
    %342 = arith.addf %335, %341 : vector<14x56xf32>
    %c3_201 = arith.constant 3 : index
    %c1_202 = arith.constant 1 : index
    %c2_203 = arith.constant 2 : index
    %343 = vector.load %arg10[%c3_201, %c1_202, %c2_203] : memref<4x16x16xf32, #tpu.memory_space<vmem>>, vector<1x14x14xf32>
    %344 = vector.shape_cast %343 : vector<1x14x14xf32> to vector<14x14xf32>
    %345 = tpu.concatenate %344, %344, %344, %344 in 1 : vector<14x14xf32>, vector<14x14xf32>, vector<14x14xf32>, vector<14x14xf32> -> vector<14x56xf32>
    %c32 = arith.constant 32 : index
    %c0_204 = arith.constant 0 : index
    %346 = vector.load %arg4[%c32, %c0_204] : memref<36x56xf32, #tpu.memory_space<vmem>>, vector<1x56xf32>
    %347 = vector.broadcast %346 : vector<1x56xf32> to vector<14x56xf32>
    %348 = arith.mulf %345, %347 : vector<14x56xf32>
    %349 = arith.addf %342, %348 : vector<14x56xf32>
    %c3_205 = arith.constant 3 : index
    %c2_206 = arith.constant 2 : index
    %c0_207 = arith.constant 0 : index
    %350 = vector.load %arg10[%c3_205, %c2_206, %c0_207] : memref<4x16x16xf32, #tpu.memory_space<vmem>>, vector<1x14x14xf32>
    %351 = vector.shape_cast %350 : vector<1x14x14xf32> to vector<14x14xf32>
    %352 = tpu.concatenate %351, %351, %351, %351 in 1 : vector<14x14xf32>, vector<14x14xf32>, vector<14x14xf32>, vector<14x14xf32> -> vector<14x56xf32>
    %c33 = arith.constant 33 : index
    %c0_208 = arith.constant 0 : index
    %353 = vector.load %arg4[%c33, %c0_208] : memref<36x56xf32, #tpu.memory_space<vmem>>, vector<1x56xf32>
    %354 = vector.broadcast %353 : vector<1x56xf32> to vector<14x56xf32>
    %355 = arith.mulf %352, %354 : vector<14x56xf32>
    %356 = arith.addf %349, %355 : vector<14x56xf32>
    %c3_209 = arith.constant 3 : index
    %c2_210 = arith.constant 2 : index
    %c1_211 = arith.constant 1 : index
    %357 = vector.load %arg10[%c3_209, %c2_210, %c1_211] : memref<4x16x16xf32, #tpu.memory_space<vmem>>, vector<1x14x14xf32>
    %358 = vector.shape_cast %357 : vector<1x14x14xf32> to vector<14x14xf32>
    %359 = tpu.concatenate %358, %358, %358, %358 in 1 : vector<14x14xf32>, vector<14x14xf32>, vector<14x14xf32>, vector<14x14xf32> -> vector<14x56xf32>
    %c34 = arith.constant 34 : index
    %c0_212 = arith.constant 0 : index
    %360 = vector.load %arg4[%c34, %c0_212] : memref<36x56xf32, #tpu.memory_space<vmem>>, vector<1x56xf32>
    %361 = vector.broadcast %360 : vector<1x56xf32> to vector<14x56xf32>
    %362 = arith.mulf %359, %361 : vector<14x56xf32>
    %363 = arith.addf %356, %362 : vector<14x56xf32>
    %c3_213 = arith.constant 3 : index
    %c2_214 = arith.constant 2 : index
    %c2_215 = arith.constant 2 : index
    %364 = vector.load %arg10[%c3_213, %c2_214, %c2_215] : memref<4x16x16xf32, #tpu.memory_space<vmem>>, vector<1x14x14xf32>
    %365 = vector.shape_cast %364 : vector<1x14x14xf32> to vector<14x14xf32>
    %366 = tpu.concatenate %365, %365, %365, %365 in 1 : vector<14x14xf32>, vector<14x14xf32>, vector<14x14xf32>, vector<14x14xf32> -> vector<14x56xf32>
    %c35 = arith.constant 35 : index
    %c0_216 = arith.constant 0 : index
    %367 = vector.load %arg4[%c35, %c0_216] : memref<36x56xf32, #tpu.memory_space<vmem>>, vector<1x56xf32>
    %368 = vector.broadcast %367 : vector<1x56xf32> to vector<14x56xf32>
    %369 = arith.mulf %366, %368 : vector<14x56xf32>
    %370 = arith.addf %363, %369 : vector<14x56xf32>
    %cst_217 = arith.constant 0.000000e+00 : f32
    %371 = vector.broadcast %cst_217 : f32 to vector<14x56xf32>
    %372 = arith.maximumf %370, %371 : vector<14x56xf32>
    %373 = tpu.iota {dimensions = array<i32: 1>} : vector<7x14xi32>
    %374 = tpu.iota {dimensions = array<i32: 0>} : vector<7x14xi32>
    %c2_i32_218 = arith.constant 2 : i32
    %375 = vector.broadcast %c2_i32_218 : i32 to vector<7x14xi32>
    %376 = arith.muli %375, %374 : vector<7x14xi32>
    %377 = arith.cmpi eq, %373, %376 : vector<7x14xi32>
    %378 = arith.extui %377 : vector<7x14xi1> to vector<7x14xi32>
    %379 = arith.sitofp %378 : vector<7x14xi32> to vector<7x14xf32>
    %c2_i32_219 = arith.constant 2 : i32
    %380 = vector.broadcast %c2_i32_219 : i32 to vector<7x14xi32>
    %381 = arith.muli %380, %374 : vector<7x14xi32>
    %c1_i32_220 = arith.constant 1 : i32
    %382 = vector.broadcast %c1_i32_220 : i32 to vector<7x14xi32>
    %383 = arith.addi %381, %382 : vector<7x14xi32>
    %384 = arith.cmpi eq, %373, %383 : vector<7x14xi32>
    %385 = arith.extui %384 : vector<7x14xi1> to vector<7x14xi32>
    %386 = arith.sitofp %385 : vector<7x14xi32> to vector<7x14xf32>
    %387 = tpu.iota {dimensions = array<i32: 0>} : vector<56x28xi32>
    %388 = tpu.iota {dimensions = array<i32: 1>} : vector<56x28xi32>
    %c2_i32_221 = arith.constant 2 : i32
    %389 = vector.broadcast %c2_i32_221 : i32 to vector<56x28xi32>
    %390 = arith.muli %389, %388 : vector<56x28xi32>
    %391 = arith.cmpi eq, %387, %390 : vector<56x28xi32>
    %392 = arith.extui %391 : vector<56x28xi1> to vector<56x28xi32>
    %393 = arith.sitofp %392 : vector<56x28xi32> to vector<56x28xf32>
    %c2_i32_222 = arith.constant 2 : i32
    %394 = vector.broadcast %c2_i32_222 : i32 to vector<56x28xi32>
    %395 = arith.muli %394, %388 : vector<56x28xi32>
    %c1_i32_223 = arith.constant 1 : i32
    %396 = vector.broadcast %c1_i32_223 : i32 to vector<56x28xi32>
    %397 = arith.addi %395, %396 : vector<56x28xi32>
    %398 = arith.cmpi eq, %387, %397 : vector<56x28xi32>
    %399 = arith.extui %398 : vector<56x28xi1> to vector<56x28xi32>
    %400 = arith.sitofp %399 : vector<56x28xi32> to vector<56x28xf32>
    %cst_224 = arith.constant dense<0.000000e+00> : vector<7x56xf32>
    %401 = tpu.matmul %379, %372, %cst_224 {dimension_numbers = #tpu.dot_dimension_numbers<[1], [0], [0], [1], [0, 0, 1, 1], [], []>} : vector<7x14xf32>, vector<14x56xf32>, vector<7x56xf32> -> vector<7x56xf32>
    %cst_225 = arith.constant dense<0.000000e+00> : vector<7x56xf32>
    %402 = tpu.matmul %386, %372, %cst_225 {dimension_numbers = #tpu.dot_dimension_numbers<[1], [0], [0], [1], [0, 0, 1, 1], [], []>} : vector<7x14xf32>, vector<14x56xf32>, vector<7x56xf32> -> vector<7x56xf32>
    %403 = arith.maximumf %401, %402 : vector<7x56xf32>
    %cst_226 = arith.constant dense<0.000000e+00> : vector<7x28xf32>
    %404 = tpu.matmul %403, %393, %cst_226 {dimension_numbers = #tpu.dot_dimension_numbers<[1], [0], [0], [1], [0, 0, 1, 1], [], []>} : vector<7x56xf32>, vector<56x28xf32>, vector<7x28xf32> -> vector<7x28xf32>
    %cst_227 = arith.constant dense<0.000000e+00> : vector<7x28xf32>
    %405 = tpu.matmul %403, %400, %cst_227 {dimension_numbers = #tpu.dot_dimension_numbers<[1], [0], [0], [1], [0, 0, 1, 1], [], []>} : vector<7x56xf32>, vector<56x28xf32>, vector<7x28xf32> -> vector<7x28xf32>
    %406 = arith.maximumf %404, %405 : vector<7x28xf32>
    %407 = vector.extract_strided_slice %406 {offsets = [0, 0], sizes = [1, 28], strides = [1, 1]} : vector<7x28xf32> to vector<1x28xf32>
    %408 = vector.extract_strided_slice %406 {offsets = [1, 0], sizes = [1, 28], strides = [1, 1]} : vector<7x28xf32> to vector<1x28xf32>
    %409 = vector.extract_strided_slice %406 {offsets = [2, 0], sizes = [1, 28], strides = [1, 1]} : vector<7x28xf32> to vector<1x28xf32>
    %410 = vector.extract_strided_slice %406 {offsets = [3, 0], sizes = [1, 28], strides = [1, 1]} : vector<7x28xf32> to vector<1x28xf32>
    %411 = vector.extract_strided_slice %406 {offsets = [4, 0], sizes = [1, 28], strides = [1, 1]} : vector<7x28xf32> to vector<1x28xf32>
    %412 = vector.extract_strided_slice %406 {offsets = [5, 0], sizes = [1, 28], strides = [1, 1]} : vector<7x28xf32> to vector<1x28xf32>
    %413 = vector.extract_strided_slice %406 {offsets = [6, 0], sizes = [1, 28], strides = [1, 1]} : vector<7x28xf32> to vector<1x28xf32>
    %414 = tpu.concatenate %407, %408, %409, %410, %411, %412, %413 in 1 : vector<1x28xf32>, vector<1x28xf32>, vector<1x28xf32>, vector<1x28xf32>, vector<1x28xf32>, vector<1x28xf32>, vector<1x28xf32> -> vector<1x196xf32>
    %c0_228 = arith.constant 0 : index
    %c0_229 = arith.constant 0 : index
    %415 = vector.load %arg6[%c0_228, %c0_229] : memref<196x128xf32, #tpu.memory_space<vmem>>, vector<196x128xf32>
    %cst_230 = arith.constant dense<0.000000e+00> : vector<1x128xf32>
    %416 = tpu.matmul %414, %415, %cst_230 {dimension_numbers = #tpu.dot_dimension_numbers<[1], [0], [0], [1], [0, 0, 1, 1], [], []>} : vector<1x196xf32>, vector<196x128xf32>, vector<1x128xf32> -> vector<1x128xf32>
    %c0_231 = arith.constant 0 : index
    %c0_232 = arith.constant 0 : index
    %417 = vector.load %arg7[%c0_231, %c0_232] : memref<1x128xf32, #tpu.memory_space<vmem>>, vector<1x128xf32>
    %418 = arith.addf %416, %417 : vector<1x128xf32>
    %419 = vector.extract_strided_slice %418 {offsets = [0, 0], sizes = [1, 11], strides = [1, 1]} : vector<1x128xf32> to vector<1x11xf32>
    %c0_233 = arith.constant 0 : index
    %c0_234 = arith.constant 0 : index
    %c0_235 = arith.constant 0 : index
    %420 = vector.load %arg8[%c0_233, %c0_234, %c0_235] : memref<1x1x11xf32, #tpu.memory_space<vmem>>, vector<1x1x11xf32>
    %421 = vector.shape_cast %420 : vector<1x1x11xf32> to vector<1x11xf32>
    %422 = vector.shape_cast %419 : vector<1x11xf32> to vector<1x1x11xf32>
    tpu.vector_store %arg8[%c0_233, %c0_234, %c0_235], %422 {strides = array<i32>} : memref<1x1x11xf32, #tpu.memory_space<vmem>>, vector<1x1x11xf32>,
    return
  }
  func.func @transform_0(%arg0: i32) -> (i32, i32, i32, i32) {
    %c0_i32 = arith.constant 0 : i32
    %c0_i32_0 = arith.constant 0 : i32
    %c0_i32_1 = arith.constant 0 : i32
    %c0_i32_2 = arith.constant 0 : i32
    return %arg0, %c0_i32, %c0_i32_0, %c0_i32_1 : i32, i32, i32, i32
  }
  func.func @transform_1(%arg0: i32) -> (i32, i32) {
    %c0_i32 = arith.constant 0 : i32
    %c0_i32_0 = arith.constant 0 : i32
    %c0_i32_1 = arith.constant 0 : i32
    return %c0_i32, %c0_i32_0 : i32, i32
  }
  func.func @transform_2(%arg0: i32) -> (i32, i32) {
    %c0_i32 = arith.constant 0 : i32
    %c0_i32_0 = arith.constant 0 : i32
    %c0_i32_1 = arith.constant 0 : i32
    return %c0_i32, %c0_i32_0 : i32, i32
  }
  func.func @transform_3(%arg0: i32) -> (i32, i32) {
    %c0_i32 = arith.constant 0 : i32
    %c0_i32_0 = arith.constant 0 : i32
    %c0_i32_1 = arith.constant 0 : i32
    return %c0_i32, %c0_i32_0 : i32, i32
  }
  func.func @transform_4(%arg0: i32) -> (i32, i32) {
    %c0_i32 = arith.constant 0 : i32
    %c0_i32_0 = arith.constant 0 : i32
    %c0_i32_1 = arith.constant 0 : i32
    return %c0_i32, %c0_i32_0 : i32, i32
  }
  func.func @transform_5(%arg0: i32) -> (i32, i32) {
    %c0_i32 = arith.constant 0 : i32
    %c0_i32_0 = arith.constant 0 : i32
    %c0_i32_1 = arith.constant 0 : i32
    return %c0_i32, %c0_i32_0 : i32, i32
  }
  func.func @transform_6(%arg0: i32) -> (i32, i32) {
    %c0_i32 = arith.constant 0 : i32
    %c0_i32_0 = arith.constant 0 : i32
    %c0_i32_1 = arith.constant 0 : i32
    return %c0_i32, %c0_i32_0 : i32, i32
  }
  func.func @transform_7(%arg0: i32) -> (i32, i32, i32) {
    %c0_i32 = arith.constant 0 : i32
    %c0_i32_0 = arith.constant 0 : i32
    %c0_i32_1 = arith.constant 0 : i32
    return %arg0, %c0_i32, %c0_i32_0 : i32, i32, i32
  }
}

</mosaic_0001>

<llo_original>
// kernel: tpu_custom_call.1
$region0: #{tpu_custom_call.1}
  #allocation0 [shape = 'u32[]', space=smem, size = 0x4, offset = 0x4, fixed_abs, tag = 'smem constant byte address 0x4 - core index']
  #allocation1 [shape = 'u32[144,128]{1,0:T(1,128)}', space=vmem, size = 0x12000, scoped, tag = 'internal scratch']
  #allocation2 [shape = 'f32[30,30]{1,0:T(8,128)}', space=vmem, size = 0x4000, scoped, tag = 'scratch operand']
  #allocation3 [shape = 'f32[4,16,16]{2,1,0:T(8,128)}', space=vmem, size = 0x8000, scoped, tag = 'scratch operand']
  %s0 = inlined_call_operand.vmem [shape: f32[2,1,28,28], index: 0, kind: input, shape index: {}]
  %s1 = inlined_call_operand.vmem [shape: f32[9,112], index: 1, kind: input, shape index: {}]
  %s2 = inlined_call_operand.vmem [shape: f32[1,112], index: 2, kind: input, shape index: {}]
  %s3 = inlined_call_operand.vmem [shape: f32[36,56], index: 3, kind: input, shape index: {}]
  %s4 = inlined_call_operand.vmem [shape: f32[1,56], index: 4, kind: input, shape index: {}]
  %s5 = inlined_call_operand.hbm [shape: f32[196,128], index: 5, kind: input, shape index: {}]
  %s6 = inlined_call_operand.vmem [shape: f32[1,128], index: 6, kind: input, shape index: {}]
  %s7 = inlined_call_operand.hbm [shape: f32[2,1,11], index: 7, kind: output, shape index: {}]
  %s8 = sld [smem:[#allocation0]]
  $region65: #{tpu_custom_call.1} parent=0
    _
  %s10 = ssub.s32 1, %s8
  %s11 = scalar_select 0, %s10, %s8
  $region1: #{tpu_custom_call.1} parent=0
    #allocation4 [shape = 'u8[102400]{0}', space=vmem, size = 0x19000, scoped, tag = 'input window, operand 5, single buffered']
    #allocation5 [shape = 's32[2]{0}', space=sflag, size = 0x8, scoped, tag = 'scoped memory for tpu_custom_call.1']
    #allocation6 [shape = 's32[2]{0}', space=sflag, size = 0x8, scoped, tag = 'scoped memory for tpu_custom_call.1']
    #allocation7 [shape = 'u8[1024]{0}', space=vmem, size = 0x400, scoped, tag = 'output window, operand 0']
    %12 = vsyncpa [#allocation5], 0
    %13 = vsyncpa [#allocation6], 0
    %s14 = scalar_lea.sflag [#allocation6], 1
    %15 = vsyncpa %s14, 0
    loop: start=0, step=1, limit=4
    $region2: #{tpu_custom_call.1} parent=1 // loop_pre_header
      _
    $region3: #{tpu_custom_call.1} parent=1 // loop_header
      %s17 = sphi 0, %s21
      %p18 = scmp.ge.s32.totalorder %s17, 4
      %s27 = sphi 0, %s29
      %s30 = sphi 0, %s27
      %s31 = sphi 0, %s30
      %s47 = sphi 0, %s31
      %s51 = sphi 0, %s51
      %s53 = sphi 0, %s51
      %s54 = sphi 0, %s53
      %s68 = sphi 0, %s54
      %s72 = sphi 0, %s72
      %s74 = sphi 0, %s72
      %s75 = sphi 0, %s74
      %s89 = sphi 0, %s75
      %s93 = sphi 0, %s93
      %s95 = sphi 0, %s93
      %s96 = sphi 0, %s95
      %s110 = sphi 0, %s96
      %s114 = sphi 0, %s114
      %s116 = sphi 0, %s114
      %s117 = sphi 0, %s116
      %s131 = sphi 0, %s117
      %s135 = sphi 0, %s135
      %s137 = sphi 0, %s135
      %s138 = sphi 0, %s137
      %s152 = sphi 0, %s138
      %s156 = sphi 0, %s156
      %s158 = sphi 0, %s156
      %s159 = sphi 0, %s158
      %s173 = sphi 0, %s159
      %s179 = sphi 0, %s181
      %s182 = sphi 0, %s179
      %s183 = sphi 0, %s182
      %s199 = sphi 0, %s183
    $region4: #{tpu_custom_call.1} parent=1 // loop_header_branch
      %20 = sbr.rel (%p18) target = $region8
    $region5: #{tpu_custom_call.1} parent=1 // loop_body
      %s22 = ssub.s32 %s17, 1
      %s23 = ssub.s32 %s17, 2
      %s24 = sadd.s32 %s17, 1
      %s25 = ssub.s32 %s17, %s24
      %p26 = scmp.eq.s32.totalorder %s25, 0
      %s28 = sadd.s32 %s27, 1
      %s29 = scalar_select %p26, %s27, %s28
      %p32 = pneg %p26
      %p33 = scmp.eq.s32.totalorder %s17, 1
      %p34 = por %p32, %p33
      %p35 = scmp.ne.s32.totalorder %s27, %s30
      %p36 = scmp.eq.s32.totalorder %s17, 0
      %p37 = por %p35, %p36
      %p38 = scmp.ne.s32.totalorder %s27, %s30
      %p39 = scmp.eq.s32.totalorder %s22, 1
      %p40 = por %p38, %p39
      %p41 = scmp.ne.s32.totalorder %s30, %s31
      %p42 = scmp.eq.s32.totalorder %s22, 0
      %p43 = por %p41, %p42
      %p44 = scmp.ne.s32.totalorder %s30, %s31
      %p45 = scmp.eq.s32.totalorder %s23, 1
      %p46 = por %p44, %p45
      %p48 = scmp.ne.s32.totalorder %s31, %s47
      %p49 = scmp.eq.s32.totalorder %s23, 0
      %p50 = por %p48, %p49
      %s52 = sadd.s32 %s51, 1
      %p55 = scmp.eq.s32.totalorder %s17, 1
      %p56 = scmp.ne.s32.totalorder %s51, %s53
      %p57 = scmp.eq.s32.totalorder %s17, 0
      %p58 = por %p56, %p57
      %p59 = scmp.ne.s32.totalorder %s51, %s53
      %p60 = scmp.eq.s32.totalorder %s22, 1
      %p61 = por %p59, %p60
      %p62 = scmp.ne.s32.totalorder %s53, %s54
      %p63 = scmp.eq.s32.totalorder %s22, 0
      %p64 = por %p62, %p63
      %p65 = scmp.ne.s32.totalorder %s53, %s54
      %p66 = scmp.eq.s32.totalorder %s23, 1
      %p67 = por %p65, %p66
      %p69 = scmp.ne.s32.totalorder %s54, %s68
      %p70 = scmp.eq.s32.totalorder %s23, 0
      %p71 = por %p69, %p70
      %s73 = sadd.s32 %s72, 1
      %p76 = scmp.eq.s32.totalorder %s17, 1
      %p77 = scmp.ne.s32.totalorder %s72, %s74
      %p78 = scmp.eq.s32.totalorder %s17, 0
      %p79 = por %p77, %p78
      %p80 = scmp.ne.s32.totalorder %s72, %s74
      %p81 = scmp.eq.s32.totalorder %s22, 1
      %p82 = por %p80, %p81
      %p83 = scmp.ne.s32.totalorder %s74, %s75
      %p84 = scmp.eq.s32.totalorder %s22, 0
      %p85 = por %p83, %p84
      %p86 = scmp.ne.s32.totalorder %s74, %s75
      %p87 = scmp.eq.s32.totalorder %s23, 1
      %p88 = por %p86, %p87
      %p90 = scmp.ne.s32.totalorder %s75, %s89
      %p91 = scmp.eq.s32.totalorder %s23, 0
      %p92 = por %p90, %p91
      %s94 = sadd.s32 %s93, 1
      %p97 = scmp.eq.s32.totalorder %s17, 1
      %p98 = scmp.ne.s32.totalorder %s93, %s95
      %p99 = scmp.eq.s32.totalorder %s17, 0
      %p100 = por %p98, %p99
      %p101 = scmp.ne.s32.totalorder %s93, %s95
      %p102 = scmp.eq.s32.totalorder %s22, 1
      %p103 = por %p101, %p102
      %p104 = scmp.ne.s32.totalorder %s95, %s96
      %p105 = scmp.eq.s32.totalorder %s22, 0
      %p106 = por %p104, %p105
      %p107 = scmp.ne.s32.totalorder %s95, %s96
      %p108 = scmp.eq.s32.totalorder %s23, 1
      %p109 = por %p107, %p108
      %p111 = scmp.ne.s32.totalorder %s96, %s110
      %p112 = scmp.eq.s32.totalorder %s23, 0
      %p113 = por %p111, %p112
      %s115 = sadd.s32 %s114, 1
      %p118 = scmp.eq.s32.totalorder %s17, 1
      %p119 = scmp.ne.s32.totalorder %s114, %s116
      %p120 = scmp.eq.s32.totalorder %s17, 0
      %p121 = por %p119, %p120
      %p122 = scmp.ne.s32.totalorder %s114, %s116
      %p123 = scmp.eq.s32.totalorder %s22, 1
      %p124 = por %p122, %p123
      %p125 = scmp.ne.s32.totalorder %s116, %s117
      %p126 = scmp.eq.s32.totalorder %s22, 0
      %p127 = por %p125, %p126
      %p128 = scmp.ne.s32.totalorder %s116, %s117
      %p129 = scmp.eq.s32.totalorder %s23, 1
      %p130 = por %p128, %p129
      %p132 = scmp.ne.s32.totalorder %s117, %s131
      %p133 = scmp.eq.s32.totalorder %s23, 0
      %p134 = por %p132, %p133
      %s136 = sadd.s32 %s135, 1
      %p139 = scmp.eq.s32.totalorder %s17, 1
      %p140 = scmp.ne.s32.totalorder %s135, %s137
      %p141 = scmp.eq.s32.totalorder %s17, 0
      %p142 = por %p140, %p141
      %p143 = scmp.ne.s32.totalorder %s135, %s137
      %p144 = scmp.eq.s32.totalorder %s22, 1
      %p145 = por %p143, %p144
      %p146 = scmp.ne.s32.totalorder %s137, %s138
      %p147 = scmp.eq.s32.totalorder %s22, 0
      %p148 = por %p146, %p147
      %p149 = scmp.ne.s32.totalorder %s137, %s138
      %p150 = scmp.eq.s32.totalorder %s23, 1
      %p151 = por %p149, %p150
      %p153 = scmp.ne.s32.totalorder %s138, %s152
      %p154 = scmp.eq.s32.totalorder %s23, 0
      %p155 = por %p153, %p154
      %s157 = sadd.s32 %s156, 1
      %p160 = scmp.eq.s32.totalorder %s17, 1
      %p161 = scmp.ne.s32.totalorder %s156, %s158
      %p162 = scmp.eq.s32.totalorder %s17, 0
      %p163 = por %p161, %p162
      %p164 = scmp.ne.s32.totalorder %s156, %s158
      %p165 = scmp.eq.s32.totalorder %s22, 1
      %p166 = por %p164, %p165
      %p167 = scmp.ne.s32.totalorder %s158, %s159
      %p168 = scmp.eq.s32.totalorder %s22, 0
      %p169 = por %p167, %p168
      %p170 = scmp.ne.s32.totalorder %s158, %s159
      %p171 = scmp.eq.s32.totalorder %s23, 1
      %p172 = por %p170, %p171
      %p174 = scmp.ne.s32.totalorder %s159, %s173
      %p175 = scmp.eq.s32.totalorder %s23, 0
      %p176 = por %p174, %p175
      %s177 = ssub.s32 %s17, %s24
      %p178 = scmp.eq.s32.totalorder %s177, 0
      %s180 = sadd.s32 %s179, 1
      %s181 = scalar_select %p178, %s179, %s180
      %p184 = pneg %p178
      %p185 = scmp.eq.s32.totalorder %s17, 1
      %p186 = por %p184, %p185
      %p187 = scmp.ne.s32.totalorder %s179, %s182
      %p188 = scmp.eq.s32.totalorder %s17, 0
      %p189 = por %p187, %p188
      %p190 = scmp.ne.s32.totalorder %s179, %s182
      %p191 = scmp.eq.s32.totalorder %s22, 1
      %p192 = por %p190, %p191
      %p193 = scmp.ne.s32.totalorder %s182, %s183
      %p194 = scmp.eq.s32.totalorder %s22, 0
      %p195 = por %p193, %p194
      %p196 = scmp.ne.s32.totalorder %s182, %s183
      %p197 = scmp.eq.s32.totalorder %s23, 1
      %p198 = por %p196, %p197
      %p200 = scmp.ne.s32.totalorder %s183, %s199
      %p201 = scmp.eq.s32.totalorder %s23, 0
      %p202 = por %p200, %p201
      %p203 = scmp.le.s32.totalorder 1, %s17
      %p204 = scmp.lt.s32.totalorder %s17, 3
      %p205 = pnand %p203, %p204
      %p206 = pneg %p205
      // Predicated region
      $region9: #{tpu_custom_call.1} parent=5 // pred_check
        _
      $region10: #{tpu_custom_call.1} parent=5 // pred_check_branch
        %208 = sbr.rel (%p205) target = $region12
      $region11: #{tpu_custom_call.1} parent=5 // pred_region
        %s209 = ssub.s32 %s17, 1
        // Predicated region
        $region13: #{tpu_custom_call.1} parent=11 // pred_check
          %p210 = pneg %p64
        $region14: #{tpu_custom_call.1} parent=11 // pred_check_branch
          %212 = sbr.rel (%p210) target = $region16
        $region15: #{tpu_custom_call.1} parent=11 // pred_region
          _
        $region16: #{tpu_custom_call.1} parent=11 // pred_fallthru
          _
        // Predicated region
        $region17: #{tpu_custom_call.1} parent=11 // pred_check
          %p213 = pneg %p85
        $region18: #{tpu_custom_call.1} parent=11 // pred_check_branch
          %215 = sbr.rel (%p213) target = $region20
        $region19: #{tpu_custom_call.1} parent=11 // pred_region
          _
        $region20: #{tpu_custom_call.1} parent=11 // pred_fallthru
          _
        // Predicated region
        $region21: #{tpu_custom_call.1} parent=11 // pred_check
          %p216 = pneg %p106
        $region22: #{tpu_custom_call.1} parent=11 // pred_check_branch
          %218 = sbr.rel (%p216) target = $region24
        $region23: #{tpu_custom_call.1} parent=11 // pred_region
          _
        $region24: #{tpu_custom_call.1} parent=11 // pred_fallthru
          _
        // Predicated region
        $region25: #{tpu_custom_call.1} parent=11 // pred_check
          %p219 = pneg %p127
        $region26: #{tpu_custom_call.1} parent=11 // pred_check_branch
          %221 = sbr.rel (%p219) target = $region28
        $region27: #{tpu_custom_call.1} parent=11 // pred_region
          _
        $region28: #{tpu_custom_call.1} parent=11 // pred_fallthru
          _
        // Predicated region
        $region29: #{tpu_custom_call.1} parent=11 // pred_check
          %p222 = pneg %p148
        $region30: #{tpu_custom_call.1} parent=11 // pred_check_branch
          %224 = sbr.rel (%p222) target = $region32
        $region31: #{tpu_custom_call.1} parent=11 // pred_region
          %s226 = ssub.s32 3200, 3200
          %227 = vsyncadd [#allocation5], %s226
          %s228 = sshll.u32 [#allocation4], 4
          %s229 = int_to_ptr.vmem [resolvable:$true] %s228
          %234 = dma.hbm_to_vmem [thread:$0]  %s5, 3200, %s229, [#allocation5], 128, 128, 8
        $region32: #{tpu_custom_call.1} parent=11 // pred_fallthru
          _
        // Predicated region
        $region33: #{tpu_custom_call.1} parent=11 // pred_check
          %p235 = pneg %p169
        $region34: #{tpu_custom_call.1} parent=11 // pred_check_branch
          %237 = sbr.rel (%p235) target = $region36
        $region35: #{tpu_custom_call.1} parent=11 // pred_region
          _
        $region36: #{tpu_custom_call.1} parent=11 // pred_fallthru
          _
      $region12: #{tpu_custom_call.1} parent=5 // pred_fallthru
        _
      %p238 = scmp.lt.s32.totalorder %s17, 2
      // Predicated region
      $region37: #{tpu_custom_call.1} parent=5 // pred_check
        %p239 = pneg %p238
      $region38: #{tpu_custom_call.1} parent=5 // pred_check_branch
        %241 = sbr.rel (%p239) target = $region40
      $region39: #{tpu_custom_call.1} parent=5 // pred_region
        // Predicated region
        $region41: #{tpu_custom_call.1} parent=39 // pred_check
          %p242 = pneg %p37
        $region42: #{tpu_custom_call.1} parent=39 // pred_check_branch
          %244 = sbr.rel (%p242) target = $region44
        $region43: #{tpu_custom_call.1} parent=39 // pred_region
          %p245 = scmp.lt.s32.totalorder %s17, 1
          %s246 = scalar_select %p245, %s17, 1
          %s247 = smul.addr %s246, 4
          %s248 = smul.addr %s247, 8
          %s249 = scalar_lea.vmem %s0, %s248
        $region44: #{tpu_custom_call.1} parent=39 // pred_fallthru
          _
      $region40: #{tpu_custom_call.1} parent=5 // pred_fallthru
        _
      %p250 = scmp.le.s32.totalorder 1, %s17
      %p251 = scmp.lt.s32.totalorder %s17, 3
      %p252 = pnand %p250, %p251
      %p253 = pneg %p252
      // Predicated region
      $region45: #{tpu_custom_call.1} parent=5 // pred_check
        _
      $region46: #{tpu_custom_call.1} parent=5 // pred_check_branch
        %255 = sbr.rel (%p252) target = $region48
      $region47: #{tpu_custom_call.1} parent=5 // pred_region
        %s256 = ssub.s32 %s17, 1
        // Predicated region
        $region49: #{tpu_custom_call.1} parent=47 // pred_check
          %p257 = pneg %p148
        $region50: #{tpu_custom_call.1} parent=47 // pred_check_branch
          %259 = sbr.rel (%p257) target = $region52
        $region51: #{tpu_custom_call.1} parent=47 // pred_region
          %260 = dma.done [#allocation5], 3200
        $region52: #{tpu_custom_call.1} parent=47 // pred_fallthru
          _
        %p261 = scmp.lt.s32.totalorder %s22, 1
        %s262 = scalar_select %p261, %s22, 1
        %s263 = smul.addr %s262, 4
        %s264 = smul.addr %s263, 8
        %s265 = scalar_lea.vmem %s0, %s264
        %p266 = pneg %p43
        %p267 = pneg %p40
        %p268 = pneg %p64
        %p269 = pneg %p61
        %p270 = pneg %p85
        %p271 = pneg %p82
        %p272 = pneg %p106
        %p273 = pneg %p103
        %p274 = pneg %p127
        %p275 = pneg %p124
        %p276 = pneg %p148
        %p277 = pneg %p145
        %p278 = pneg %p169
        %p279 = pneg %p166
        %p280 = pneg %p195
        %p281 = pneg %p192
        %s282 = sand.u32 %s182, 1
        %s283 = scalar_lea.sflag [#allocation6], %s282
        %s284 = sand.u32 %s182, 1
        %s285 = scalar_lea.vmem [#allocation7], %s284
        %p286 = scmp.lt.s32.totalorder %s22, 1
        %s287 = scalar_select %p286, %s22, 1
        %s288 = smul.addr %s287, 4
        %s289 = smul.addr %s288, 8
        %s290 = scalar_lea.vmem %s0, %s289
        %vm291 = vcmask 244736
        %292 = vst.msk [vmem:[#allocation2] sm:$0xff] %vm291, 0.0
        %293 = vst.msk [vmem:[#allocation2 + $0x8] sm:$0xff] %vm291, 0.0
        %294 = vst.msk [vmem:[#allocation2 + $0x10] sm:$0xff] %vm291, 0.0
        %vm295 = vcmask 242688
        %296 = vst.msk [vmem:[#allocation2 + $0x18] sm:$0x3f] %vm295, 0.0
        %v297 = vld [vmem:[%s290] sm:$0xff]
        %v298 = vld [vmem:[%s290 + $0x8] sm:$0xff]
        %v299 = vld [vmem:[%s290 + $0x10] sm:$0xff]
        %v300 = vld [vmem:[%s290 + $0x18] sm:$0xf]
        %305 = vrot.lane.b32.xlu0 %v297, 1
        %v306 = vpop.permute.xlu0 %305
        %307 = vrot.lane.b32.xlu0 %v298, 1
        %v308 = vpop.permute.xlu0 %307
        %309 = vrot.lane.b32.xlu0 %v299, 1
        %v310 = vpop.permute.xlu0 %309
        %311 = vrot.lane.b32.xlu0 %v300, 1
        %v312 = vpop.permute.xlu0 %311
        %vm317 = vcmask 236552
        %318 = vst.msk [vmem:[#allocation2 + $0x1] sm:$0xff] %vm317, %v306
        %319 = vst.msk [vmem:[#allocation2 + $0x9] sm:$0xff] %vm317, %v308
        %320 = vst.msk [vmem:[#allocation2 + $0x11] sm:$0xff] %vm317, %v310
        %vm321 = vcmask 232456
        %322 = vst.msk [vmem:[#allocation2 + $0x19] sm:$0xf] %vm321, %v312
        %v323 = vld [vmem:[%s2] sm:$0x1]
        %v325 = vlaneseq
        %v326 = vshrl.u32 %v325, 7
        %v327 = vsub.s32 0, %v326
        %v328 = vrot.slane %v323, %v327
        %v330 = vld [vmem:[#allocation2] sm:$0xff]
        %v331 = vld [vmem:[#allocation2 + $0x8] sm:$0xff]
        %v332 = vld [vmem:[#allocation2 + $0x10] sm:$0xff]
        %v333 = vld [vmem:[#allocation2 + $0x18] sm:$0xf]
        %338 = vrot.lane.b32.xlu0 %v330, 28
        %v339 = vpop.permute.xlu0 %338
        %340 = vrot.lane.b32.xlu0 %v331, 28
        %v341 = vpop.permute.xlu0 %340
        %342 = vrot.lane.b32.xlu0 %v332, 28
        %v343 = vpop.permute.xlu0 %342
        %344 = vrot.lane.b32.xlu0 %v333, 28
        %v345 = vpop.permute.xlu0 %344
        %350 = vrot.lane.b32.xlu0 %v330, 56
        %v351 = vpop.permute.xlu0 %350
        %352 = vrot.lane.b32.xlu0 %v331, 56
        %v353 = vpop.permute.xlu0 %352
        %354 = vrot.lane.b32.xlu0 %v332, 56
        %v355 = vpop.permute.xlu0 %354
        %356 = vrot.lane.b32.xlu0 %v333, 56
        %v357 = vpop.permute.xlu0 %356
        %362 = vrot.lane.b32.xlu0 %v330, 84
        %v363 = vpop.permute.xlu0 %362
        %364 = vrot.lane.b32.xlu0 %v331, 84
        %v365 = vpop.permute.xlu0 %364
        %366 = vrot.lane.b32.xlu0 %v332, 84
        %v367 = vpop.permute.xlu0 %366
        %368 = vrot.lane.b32.xlu0 %v333, 84
        %v369 = vpop.permute.xlu0 %368
        %vm374 = vcmask 228352
        %v375 = vsel %vm374, %v330, %v339
        %v376 = vsel %vm374, %v331, %v341
        %v377 = vsel %vm374, %v332, %v343
        %v378 = vsel %vm374, %v333, %v345
        %vm379 = vcmask 457728
        %v380 = vsel %vm379, %v375, %v351
        %v381 = vsel %vm379, %v376, %v353
        %v382 = vsel %vm379, %v377, %v355
        %v383 = vsel %vm379, %v378, %v357
        %vm384 = vcmask 687104
        %v385 = vsel %vm384, %v380, %v363
        %v386 = vsel %vm384, %v381, %v365
        %v387 = vsel %vm384, %v382, %v367
        %v388 = vsel %vm384, %v383, %v369
        %v389 = vld [vmem:[%s1] sm:$0x1]
        %v390 = vlaneseq
        %v391 = vshrl.u32 %v390, 7
        %v392 = vsub.s32 0, %v391
        %v393 = vrot.slane %v389, %v392
        %v394 = vmul.f32 %v385, %v393
        %v395 = vmul.f32 %v386, %v393
        %v396 = vmul.f32 %v387, %v393
        %v397 = vmul.f32 %v388, %v393
        %v398 = vadd.f32 %v328, %v394
        %v399 = vadd.f32 %v328, %v395
        %v400 = vadd.f32 %v328, %v396
        %v401 = vadd.f32 %v328, %v397
        %402 = vrot.lane.b32.xlu0 %v330, 127
        %v403 = vpop.permute.xlu0 %402
        %404 = vrot.lane.b32.xlu0 %v331, 127
        %v405 = vpop.permute.xlu0 %404
        %406 = vrot.lane.b32.xlu0 %v332, 127
        %v407 = vpop.permute.xlu0 %406
        %408 = vrot.lane.b32.xlu0 %v333, 127
        %v409 = vpop.permute.xlu0 %408
        %414 = vrot.lane.b32.xlu0 %v330, 27
        %v415 = vpop.permute.xlu0 %414
        %416 = vrot.lane.b32.xlu0 %v331, 27
        %v417 = vpop.permute.xlu0 %416
        %418 = vrot.lane.b32.xlu0 %v332, 27
        %v419 = vpop.permute.xlu0 %418
        %420 = vrot.lane.b32.xlu0 %v333, 27
        %v421 = vpop.permute.xlu0 %420
        %426 = vrot.lane.b32.xlu0 %v330, 55
        %v427 = vpop.permute.xlu0 %426
        %428 = vrot.lane.b32.xlu0 %v331, 55
        %v429 = vpop.permute.xlu0 %428
        %430 = vrot.lane.b32.xlu0 %v332, 55
        %v431 = vpop.permute.xlu0 %430
        %432 = vrot.lane.b32.xlu0 %v333, 55
        %v433 = vpop.permute.xlu0 %432
        %438 = vrot.lane.b32.xlu0 %v330, 83
        %v439 = vpop.permute.xlu0 %438
        %440 = vrot.lane.b32.xlu0 %v331, 83
        %v441 = vpop.permute.xlu0 %440
        %442 = vrot.lane.b32.xlu0 %v332, 83
        %v443 = vpop.permute.xlu0 %442
        %444 = vrot.lane.b32.xlu0 %v333, 83
        %v445 = vpop.permute.xlu0 %444
        %v450 = vsel %vm374, %v403, %v415
        %v451 = vsel %vm374, %v405, %v417
        %v452 = vsel %vm374, %v407, %v419
        %v453 = vsel %vm374, %v409, %v421
        %v454 = vsel %vm379, %v450, %v427
        %v455 = vsel %vm379, %v451, %v429
        %v456 = vsel %vm379, %v452, %v431
        %v457 = vsel %vm379, %v453, %v433
        %v458 = vsel %vm384, %v454, %v439
        %v459 = vsel %vm384, %v455, %v441
        %v460 = vsel %vm384, %v456, %v443
        %v461 = vsel %vm384, %v457, %v445
        %v462 = vld [vmem:[%s1 + $0x1] sm:$0x1]
        %v463 = vlaneseq
        %v464 = vshrl.u32 %v463, 7
        %v465 = vsub.s32 0, %v464
        %v466 = vrot.slane %v462, %v465
        %v467 = vmul.f32 %v458, %v466
        %v468 = vmul.f32 %v459, %v466
        %v469 = vmul.f32 %v460, %v466
        %v470 = vmul.f32 %v461, %v466
        %v471 = vadd.f32 %v398, %v467
        %v472 = vadd.f32 %v399, %v468
        %v473 = vadd.f32 %v400, %v469
        %v474 = vadd.f32 %v401, %v470
        %475 = vrot.lane.b32.xlu0 %v330, 126
        %v476 = vpop.permute.xlu0 %475
        %477 = vrot.lane.b32.xlu0 %v331, 126
        %v478 = vpop.permute.xlu0 %477
        %479 = vrot.lane.b32.xlu0 %v332, 126
        %v480 = vpop.permute.xlu0 %479
        %481 = vrot.lane.b32.xlu0 %v333, 126
        %v482 = vpop.permute.xlu0 %481
        %487 = vrot.lane.b32.xlu0 %v330, 26
        %v488 = vpop.permute.xlu0 %487
        %489 = vrot.lane.b32.xlu0 %v331, 26
        %v490 = vpop.permute.xlu0 %489
        %491 = vrot.lane.b32.xlu0 %v332, 26
        %v492 = vpop.permute.xlu0 %491
        %493 = vrot.lane.b32.xlu0 %v333, 26
        %v494 = vpop.permute.xlu0 %493
        %499 = vrot.lane.b32.xlu0 %v330, 54
        %v500 = vpop.permute.xlu0 %499
        %501 = vrot.lane.b32.xlu0 %v331, 54
        %v502 = vpop.permute.xlu0 %501
        %503 = vrot.lane.b32.xlu0 %v332, 54
        %v504 = vpop.permute.xlu0 %503
        %505 = vrot.lane.b32.xlu0 %v333, 54
        %v506 = vpop.permute.xlu0 %505
        %511 = vrot.lane.b32.xlu0 %v330, 82
        %v512 = vpop.permute.xlu0 %511
        %513 = vrot.lane.b32.xlu0 %v331, 82
        %v514 = vpop.permute.xlu0 %513
        %515 = vrot.lane.b32.xlu0 %v332, 82
        %v516 = vpop.permute.xlu0 %515
        %517 = vrot.lane.b32.xlu0 %v333, 82
        %v518 = vpop.permute.xlu0 %517
        %v523 = vsel %vm374, %v476, %v488
        %v524 = vsel %vm374, %v478, %v490
        %v525 = vsel %vm374, %v480, %v492
        %v526 = vsel %vm374, %v482, %v494
        %v527 = vsel %vm379, %v523, %v500
        %v528 = vsel %vm379, %v524, %v502
        %v529 = vsel %vm379, %v525, %v504
        %v530 = vsel %vm379, %v526, %v506
        %v531 = vsel %vm384, %v527, %v512
        %v532 = vsel %vm384, %v528, %v514
        %v533 = vsel %vm384, %v529, %v516
        %v534 = vsel %vm384, %v530, %v518
        %v535 = vld [vmem:[%s1 + $0x2] sm:$0x1]
        %v536 = vlaneseq
        %v537 = vshrl.u32 %v536, 7
        %v538 = vsub.s32 0, %v537
        %v539 = vrot.slane %v535, %v538
        %v540 = vmul.f32 %v531, %v539
        %v541 = vmul.f32 %v532, %v539
        %v542 = vmul.f32 %v533, %v539
        %v543 = vmul.f32 %v534, %v539
        %v544 = vadd.f32 %v471, %v540
        %v545 = vadd.f32 %v472, %v541
        %v546 = vadd.f32 %v473, %v542
        %v547 = vadd.f32 %v474, %v543
        %v548 = vld [vmem:[#allocation2 + $0x1] sm:$0xff]
        %v549 = vld [vmem:[#allocation2 + $0x9] sm:$0xff]
        %v550 = vld [vmem:[#allocation2 + $0x11] sm:$0xff]
        %v551 = vld [vmem:[#allocation2 + $0x19] sm:$0xf]
        %556 = vrot.lane.b32.xlu0 %v548, 28
        %v557 = vpop.permute.xlu0 %556
        %558 = vrot.lane.b32.xlu0 %v549, 28
        %v559 = vpop.permute.xlu0 %558
        %560 = vrot.lane.b32.xlu0 %v550, 28
        %v561 = vpop.permute.xlu0 %560
        %562 = vrot.lane.b32.xlu0 %v551, 28
        %v563 = vpop.permute.xlu0 %562
        %568 = vrot.lane.b32.xlu0 %v548, 56
        %v569 = vpop.permute.xlu0 %568
        %570 = vrot.lane.b32.xlu0 %v549, 56
        %v571 = vpop.permute.xlu0 %570
        %572 = vrot.lane.b32.xlu0 %v550, 56
        %v573 = vpop.permute.xlu0 %572
        %574 = vrot.lane.b32.xlu0 %v551, 56
        %v575 = vpop.permute.xlu0 %574
        %580 = vrot.lane.b32.xlu0 %v548, 84
        %v581 = vpop.permute.xlu0 %580
        %582 = vrot.lane.b32.xlu0 %v549, 84
        %v583 = vpop.permute.xlu0 %582
        %584 = vrot.lane.b32.xlu0 %v550, 84
        %v585 = vpop.permute.xlu0 %584
        %586 = vrot.lane.b32.xlu0 %v551, 84
        %v587 = vpop.permute.xlu0 %586
        %v592 = vsel %vm374, %v548, %v557
        %v593 = vsel %vm374, %v549, %v559
        %v594 = vsel %vm374, %v550, %v561
        %v595 = vsel %vm374, %v551, %v563
        %v596 = vsel %vm379, %v592, %v569
        %v597 = vsel %vm379, %v593, %v571
        %v598 = vsel %vm379, %v594, %v573
        %v599 = vsel %vm379, %v595, %v575
        %v600 = vsel %vm384, %v596, %v581
        %v601 = vsel %vm384, %v597, %v583
        %v602 = vsel %vm384, %v598, %v585
        %v603 = vsel %vm384, %v599, %v587
        %v604 = vld [vmem:[%s1 + $0x3] sm:$0x1]
        %v605 = vlaneseq
        %v606 = vshrl.u32 %v605, 7
        %v607 = vsub.s32 0, %v606
        %v608 = vrot.slane %v604, %v607
        %v609 = vmul.f32 %v600, %v608
        %v610 = vmul.f32 %v601, %v608
        %v611 = vmul.f32 %v602, %v608
        %v612 = vmul.f32 %v603, %v608
        %v613 = vadd.f32 %v544, %v609
        %v614 = vadd.f32 %v545, %v610
        %v615 = vadd.f32 %v546, %v611
        %v616 = vadd.f32 %v547, %v612
        %617 = vrot.lane.b32.xlu0 %v548, 127
        %v618 = vpop.permute.xlu0 %617
        %619 = vrot.lane.b32.xlu0 %v549, 127
        %v620 = vpop.permute.xlu0 %619
        %621 = vrot.lane.b32.xlu0 %v550, 127
        %v622 = vpop.permute.xlu0 %621
        %623 = vrot.lane.b32.xlu0 %v551, 127
        %v624 = vpop.permute.xlu0 %623
        %629 = vrot.lane.b32.xlu0 %v548, 27
        %v630 = vpop.permute.xlu0 %629
        %631 = vrot.lane.b32.xlu0 %v549, 27
        %v632 = vpop.permute.xlu0 %631
        %633 = vrot.lane.b32.xlu0 %v550, 27
        %v634 = vpop.permute.xlu0 %633
        %635 = vrot.lane.b32.xlu0 %v551, 27
        %v636 = vpop.permute.xlu0 %635
        %641 = vrot.lane.b32.xlu0 %v548, 55
        %v642 = vpop.permute.xlu0 %641
        %643 = vrot.lane.b32.xlu0 %v549, 55
        %v644 = vpop.permute.xlu0 %643
        %645 = vrot.lane.b32.xlu0 %v550, 55
        %v646 = vpop.permute.xlu0 %645
        %647 = vrot.lane.b32.xlu0 %v551, 55
        %v648 = vpop.permute.xlu0 %647
        %653 = vrot.lane.b32.xlu0 %v548, 83
        %v654 = vpop.permute.xlu0 %653
        %655 = vrot.lane.b32.xlu0 %v549, 83
        %v656 = vpop.permute.xlu0 %655
        %657 = vrot.lane.b32.xlu0 %v550, 83
        %v658 = vpop.permute.xlu0 %657
        %659 = vrot.lane.b32.xlu0 %v551, 83
        %v660 = vpop.permute.xlu0 %659
        %v665 = vsel %vm374, %v618, %v630
        %v666 = vsel %vm374, %v620, %v632
        %v667 = vsel %vm374, %v622, %v634
        %v668 = vsel %vm374, %v624, %v636
        %v669 = vsel %vm379, %v665, %v642
        %v670 = vsel %vm379, %v666, %v644
        %v671 = vsel %vm379, %v667, %v646
        %v672 = vsel %vm379, %v668, %v648
        %v673 = vsel %vm384, %v669, %v654
        %v674 = vsel %vm384, %v670, %v656
        %v675 = vsel %vm384, %v671, %v658
        %v676 = vsel %vm384, %v672, %v660
        %v677 = vld [vmem:[%s1 + $0x4] sm:$0x1]
        %v678 = vlaneseq
        %v679 = vshrl.u32 %v678, 7
        %v680 = vsub.s32 0, %v679
        %v681 = vrot.slane %v677, %v680
        %v682 = vmul.f32 %v673, %v681
        %v683 = vmul.f32 %v674, %v681
        %v684 = vmul.f32 %v675, %v681
        %v685 = vmul.f32 %v676, %v681
        %v686 = vadd.f32 %v613, %v682
        %v687 = vadd.f32 %v614, %v683
        %v688 = vadd.f32 %v615, %v684
        %v689 = vadd.f32 %v616, %v685
        %690 = vrot.lane.b32.xlu0 %v548, 126
        %v691 = vpop.permute.xlu0 %690
        %692 = vrot.lane.b32.xlu0 %v549, 126
        %v693 = vpop.permute.xlu0 %692
        %694 = vrot.lane.b32.xlu0 %v550, 126
        %v695 = vpop.permute.xlu0 %694
        %696 = vrot.lane.b32.xlu0 %v551, 126
        %v697 = vpop.permute.xlu0 %696
        %702 = vrot.lane.b32.xlu0 %v548, 26
        %v703 = vpop.permute.xlu0 %702
        %704 = vrot.lane.b32.xlu0 %v549, 26
        %v705 = vpop.permute.xlu0 %704
        %706 = vrot.lane.b32.xlu0 %v550, 26
        %v707 = vpop.permute.xlu0 %706
        %708 = vrot.lane.b32.xlu0 %v551, 26
        %v709 = vpop.permute.xlu0 %708
        %714 = vrot.lane.b32.xlu0 %v548, 54
        %v715 = vpop.permute.xlu0 %714
        %716 = vrot.lane.b32.xlu0 %v549, 54
        %v717 = vpop.permute.xlu0 %716
        %718 = vrot.lane.b32.xlu0 %v550, 54
        %v719 = vpop.permute.xlu0 %718
        %720 = vrot.lane.b32.xlu0 %v551, 54
        %v721 = vpop.permute.xlu0 %720
        %726 = vrot.lane.b32.xlu0 %v548, 82
        %v727 = vpop.permute.xlu0 %726
        %728 = vrot.lane.b32.xlu0 %v549, 82
        %v729 = vpop.permute.xlu0 %728
        %730 = vrot.lane.b32.xlu0 %v550, 82
        %v731 = vpop.permute.xlu0 %730
        %732 = vrot.lane.b32.xlu0 %v551, 82
        %v733 = vpop.permute.xlu0 %732
        %v738 = vsel %vm374, %v691, %v703
        %v739 = vsel %vm374, %v693, %v705
        %v740 = vsel %vm374, %v695, %v707
        %v741 = vsel %vm374, %v697, %v709
        %v742 = vsel %vm379, %v738, %v715
        %v743 = vsel %vm379, %v739, %v717
        %v744 = vsel %vm379, %v740, %v719
        %v745 = vsel %vm379, %v741, %v721
        %v746 = vsel %vm384, %v742, %v727
        %v747 = vsel %vm384, %v743, %v729
        %v748 = vsel %vm384, %v744, %v731
        %v749 = vsel %vm384, %v745, %v733
        %v750 = vld [vmem:[%s1 + $0x5] sm:$0x1]
        %v751 = vlaneseq
        %v752 = vshrl.u32 %v751, 7
        %v753 = vsub.s32 0, %v752
        %v754 = vrot.slane %v750, %v753
        %v755 = vmul.f32 %v746, %v754
        %v756 = vmul.f32 %v747, %v754
        %v757 = vmul.f32 %v748, %v754
        %v758 = vmul.f32 %v749, %v754
        %v759 = vadd.f32 %v686, %v755
        %v760 = vadd.f32 %v687, %v756
        %v761 = vadd.f32 %v688, %v757
        %v762 = vadd.f32 %v689, %v758
        %v763 = vld [vmem:[#allocation2 + $0x2] sm:$0xff]
        %v764 = vld [vmem:[#allocation2 + $0xa] sm:$0xff]
        %v765 = vld [vmem:[#allocation2 + $0x12] sm:$0xff]
        %v766 = vld [vmem:[#allocation2 + $0x1a] sm:$0xf]
        %771 = vrot.lane.b32.xlu0 %v763, 28
        %v772 = vpop.permute.xlu0 %771
        %773 = vrot.lane.b32.xlu0 %v764, 28
        %v774 = vpop.permute.xlu0 %773
        %775 = vrot.lane.b32.xlu0 %v765, 28
        %v776 = vpop.permute.xlu0 %775
        %777 = vrot.lane.b32.xlu0 %v766, 28
        %v778 = vpop.permute.xlu0 %777
        %783 = vrot.lane.b32.xlu0 %v763, 56
        %v784 = vpop.permute.xlu0 %783
        %785 = vrot.lane.b32.xlu0 %v764, 56
        %v786 = vpop.permute.xlu0 %785
        %787 = vrot.lane.b32.xlu0 %v765, 56
        %v788 = vpop.permute.xlu0 %787
        %789 = vrot.lane.b32.xlu0 %v766, 56
        %v790 = vpop.permute.xlu0 %789
        %795 = vrot.lane.b32.xlu0 %v763, 84
        %v796 = vpop.permute.xlu0 %795
        %797 = vrot.lane.b32.xlu0 %v764, 84
        %v798 = vpop.permute.xlu0 %797
        %799 = vrot.lane.b32.xlu0 %v765, 84
        %v800 = vpop.permute.xlu0 %799
        %801 = vrot.lane.b32.xlu0 %v766, 84
        %v802 = vpop.permute.xlu0 %801
        %v807 = vsel %vm374, %v763, %v772
        %v808 = vsel %vm374, %v764, %v774
        %v809 = vsel %vm374, %v765, %v776
        %v810 = vsel %vm374, %v766, %v778
        %v811 = vsel %vm379, %v807, %v784
        %v812 = vsel %vm379, %v808, %v786
        %v813 = vsel %vm379, %v809, %v788
        %v814 = vsel %vm379, %v810, %v790
        %v815 = vsel %vm384, %v811, %v796
        %v816 = vsel %vm384, %v812, %v798
        %v817 = vsel %vm384, %v813, %v800
        %v818 = vsel %vm384, %v814, %v802
        %v819 = vld [vmem:[%s1 + $0x6] sm:$0x1]
        %v820 = vlaneseq
        %v821 = vshrl.u32 %v820, 7
        %v822 = vsub.s32 0, %v821
        %v823 = vrot.slane %v819, %v822
        %v824 = vmul.f32 %v815, %v823
        %v825 = vmul.f32 %v816, %v823
        %v826 = vmul.f32 %v817, %v823
        %v827 = vmul.f32 %v818, %v823
        %v828 = vadd.f32 %v759, %v824
        %v829 = vadd.f32 %v760, %v825
        %v830 = vadd.f32 %v761, %v826
        %v831 = vadd.f32 %v762, %v827
        %832 = vrot.lane.b32.xlu0 %v763, 127
        %v833 = vpop.permute.xlu0 %832
        %834 = vrot.lane.b32.xlu0 %v764, 127
        %v835 = vpop.permute.xlu0 %834
        %836 = vrot.lane.b32.xlu0 %v765, 127
        %v837 = vpop.permute.xlu0 %836
        %838 = vrot.lane.b32.xlu0 %v766, 127
        %v839 = vpop.permute.xlu0 %838
        %844 = vrot.lane.b32.xlu0 %v763, 27
        %v845 = vpop.permute.xlu0 %844
        %846 = vrot.lane.b32.xlu0 %v764, 27
        %v847 = vpop.permute.xlu0 %846
        %848 = vrot.lane.b32.xlu0 %v765, 27
        %v849 = vpop.permute.xlu0 %848
        %850 = vrot.lane.b32.xlu0 %v766, 27
        %v851 = vpop.permute.xlu0 %850
        %856 = vrot.lane.b32.xlu0 %v763, 55
        %v857 = vpop.permute.xlu0 %856
        %858 = vrot.lane.b32.xlu0 %v764, 55
        %v859 = vpop.permute.xlu0 %858
        %860 = vrot.lane.b32.xlu0 %v765, 55
        %v861 = vpop.permute.xlu0 %860
        %862 = vrot.lane.b32.xlu0 %v766, 55
        %v863 = vpop.permute.xlu0 %862
        %868 = vrot.lane.b32.xlu0 %v763, 83
        %v869 = vpop.permute.xlu0 %868
        %870 = vrot.lane.b32.xlu0 %v764, 83
        %v871 = vpop.permute.xlu0 %870
        %872 = vrot.lane.b32.xlu0 %v765, 83
        %v873 = vpop.permute.xlu0 %872
        %874 = vrot.lane.b32.xlu0 %v766, 83
        %v875 = vpop.permute.xlu0 %874
        %v880 = vsel %vm374, %v833, %v845
        %v881 = vsel %vm374, %v835, %v847
        %v882 = vsel %vm374, %v837, %v849
        %v883 = vsel %vm374, %v839, %v851
        %v884 = vsel %vm379, %v880, %v857
        %v885 = vsel %vm379, %v881, %v859
        %v886 = vsel %vm379, %v882, %v861
        %v887 = vsel %vm379, %v883, %v863
        %v888 = vsel %vm384, %v884, %v869
        %v889 = vsel %vm384, %v885, %v871
        %v890 = vsel %vm384, %v886, %v873
        %v891 = vsel %vm384, %v887, %v875
        %v892 = vld [vmem:[%s1 + $0x7] sm:$0x1]
        %v893 = vlaneseq
        %v894 = vshrl.u32 %v893, 7
        %v895 = vsub.s32 0, %v894
        %v896 = vrot.slane %v892, %v895
        %v897 = vmul.f32 %v888, %v896
        %v898 = vmul.f32 %v889, %v896
        %v899 = vmul.f32 %v890, %v896
        %v900 = vmul.f32 %v891, %v896
        %v901 = vadd.f32 %v828, %v897
        %v902 = vadd.f32 %v829, %v898
        %v903 = vadd.f32 %v830, %v899
        %v904 = vadd.f32 %v831, %v900
        %905 = vrot.lane.b32.xlu0 %v763, 126
        %v906 = vpop.permute.xlu0 %905
        %907 = vrot.lane.b32.xlu0 %v764, 126
        %v908 = vpop.permute.xlu0 %907
        %909 = vrot.lane.b32.xlu0 %v765, 126
        %v910 = vpop.permute.xlu0 %909
        %911 = vrot.lane.b32.xlu0 %v766, 126
        %v912 = vpop.permute.xlu0 %911
        %917 = vrot.lane.b32.xlu0 %v763, 26
        %v918 = vpop.permute.xlu0 %917
        %919 = vrot.lane.b32.xlu0 %v764, 26
        %v920 = vpop.permute.xlu0 %919
        %921 = vrot.lane.b32.xlu0 %v765, 26
        %v922 = vpop.permute.xlu0 %921
        %923 = vrot.lane.b32.xlu0 %v766, 26
        %v924 = vpop.permute.xlu0 %923
        %929 = vrot.lane.b32.xlu0 %v763, 54
        %v930 = vpop.permute.xlu0 %929
        %931 = vrot.lane.b32.xlu0 %v764, 54
        %v932 = vpop.permute.xlu0 %931
        %933 = vrot.lane.b32.xlu0 %v765, 54
        %v934 = vpop.permute.xlu0 %933
        %935 = vrot.lane.b32.xlu0 %v766, 54
        %v936 = vpop.permute.xlu0 %935
        %941 = vrot.lane.b32.xlu0 %v763, 82
        %v942 = vpop.permute.xlu0 %941
        %943 = vrot.lane.b32.xlu0 %v764, 82
        %v944 = vpop.permute.xlu0 %943
        %945 = vrot.lane.b32.xlu0 %v765, 82
        %v946 = vpop.permute.xlu0 %945
        %947 = vrot.lane.b32.xlu0 %v766, 82
        %v948 = vpop.permute.xlu0 %947
        %v953 = vsel %vm374, %v906, %v918
        %v954 = vsel %vm374, %v908, %v920
        %v955 = vsel %vm374, %v910, %v922
        %v956 = vsel %vm374, %v912, %v924
        %v957 = vsel %vm379, %v953, %v930
        %v958 = vsel %vm379, %v954, %v932
        %v959 = vsel %vm379, %v955, %v934
        %v960 = vsel %vm379, %v956, %v936
        %v961 = vsel %vm384, %v957, %v942
        %v962 = vsel %vm384, %v958, %v944
        %v963 = vsel %vm384, %v959, %v946
        %v964 = vsel %vm384, %v960, %v948
        %v965 = vld [vmem:[%s1 + $0x8] sm:$0x1]
        %v966 = vlaneseq
        %v967 = vshrl.u32 %v966, 7
        %v968 = vsub.s32 0, %v967
        %v969 = vrot.slane %v965, %v968
        %v970 = vmul.f32 %v961, %v969
        %v971 = vmul.f32 %v962, %v969
        %v972 = vmul.f32 %v963, %v969
        %v973 = vmul.f32 %v964, %v969
        %v974 = vadd.f32 %v901, %v970
        %v975 = vadd.f32 %v902, %v971
        %v976 = vadd.f32 %v903, %v972
        %v977 = vadd.f32 %v904, %v973
        %v978 = vmax.f32 %v974, 0.0
        %v979 = vmax.f32 %v975, 0.0
        %v980 = vmax.f32 %v976, 0.0
        %v981 = vmax.f32 %v977, 0.0
        %v982 = vlaneseq
        %v983 = vand.u32 %v982, 127
        %v984 = vlaneseq
        %v985 = vshrl.u32 %v984, 7
        %v986 = vadd.s32 %v985, 8
        %v987 = vmul.u32 %v985, 2
        %v988 = vmul.u32 %v986, 2
        %vm989 = vcmp.eq.s32.totalorder %v983, %v987
        %vm990 = vcmp.eq.s32.totalorder %v983, %v988
        %v991 = vsel %vm989, 1, 0
        %v992 = vsel %vm990, 1, 0
        %v993 = vcvt.s32.f32 %v991
        %v994 = vcvt.s32.f32 %v992
        %v995 = vadd.s32 %v987, 1
        %v996 = vadd.s32 %v988, 1
        %vm997 = vcmp.eq.s32.totalorder %v983, %v995
        %vm998 = vcmp.eq.s32.totalorder %v983, %v996
        %v999 = vsel %vm997, 1, 0
        %v1000 = vsel %vm998, 1, 0
        %v1001 = vcvt.s32.f32 %v999
        %v1002 = vcvt.s32.f32 %v1000
        %v1003 = vadd.s32 %v985, 16
        %v1004 = vadd.s32 %v985, 24
        %v1005 = vadd.s32 %v985, 32
        %v1006 = vadd.s32 %v985, 40
        %v1007 = vadd.s32 %v985, 48
        %v1008 = vadd.s32 %v985, 56
        %v1009 = vadd.s32 %v985, 64
        %v1010 = vadd.s32 %v985, 72
        %v1011 = vadd.s32 %v985, 80
        %v1012 = vadd.s32 %v985, 88
        %v1013 = vadd.s32 %v985, 96
        %v1014 = vadd.s32 %v985, 104
        %v1015 = vmul.u32 %v983, 2
        %vm1016 = vcmp.eq.s32.totalorder %v985, %v1015
        %vm1017 = vcmp.eq.s32.totalorder %v986, %v1015
        %vm1018 = vcmp.eq.s32.totalorder %v1003, %v1015
        %vm1019 = vcmp.eq.s32.totalorder %v1004, %v1015
        %vm1020 = vcmp.eq.s32.totalorder %v1005, %v1015
        %vm1021 = vcmp.eq.s32.totalorder %v1006, %v1015
        %vm1022 = vcmp.eq.s32.totalorder %v1007, %v1015
        %vm1023 = vcmp.eq.s32.totalorder %v1008, %v1015
        %vm1024 = vcmp.eq.s32.totalorder %v1009, %v1015
        %vm1025 = vcmp.eq.s32.totalorder %v1010, %v1015
        %vm1026 = vcmp.eq.s32.totalorder %v1011, %v1015
        %vm1027 = vcmp.eq.s32.totalorder %v1012, %v1015
        %vm1028 = vcmp.eq.s32.totalorder %v1013, %v1015
        %vm1029 = vcmp.eq.s32.totalorder %v1014, %v1015
        %v1030 = vsel %vm1016, 1, 0
        %v1031 = vsel %vm1017, 1, 0
        %v1032 = vsel %vm1018, 1, 0
        %v1033 = vsel %vm1019, 1, 0
        %v1034 = vsel %vm1020, 1, 0
        %v1035 = vsel %vm1021, 1, 0
        %v1036 = vsel %vm1022, 1, 0
        %v1037 = vsel %vm1023, 1, 0
        %v1038 = vsel %vm1024, 1, 0
        %v1039 = vsel %vm1025, 1, 0
        %v1040 = vsel %vm1026, 1, 0
        %v1041 = vsel %vm1027, 1, 0
        %v1042 = vsel %vm1028, 1, 0
        %v1043 = vsel %vm1029, 1, 0
        %v1044 = vcvt.s32.f32 %v1030
        %v1045 = vcvt.s32.f32 %v1031
        %v1046 = vcvt.s32.f32 %v1032
        %v1047 = vcvt.s32.f32 %v1033
        %v1048 = vcvt.s32.f32 %v1034
        %v1049 = vcvt.s32.f32 %v1035
        %v1050 = vcvt.s32.f32 %v1036
        %v1051 = vcvt.s32.f32 %v1037
        %v1052 = vcvt.s32.f32 %v1038
        %v1053 = vcvt.s32.f32 %v1039
        %v1054 = vcvt.s32.f32 %v1040
        %v1055 = vcvt.s32.f32 %v1041
        %v1056 = vcvt.s32.f32 %v1042
        %v1057 = vcvt.s32.f32 %v1043
        %v1058 = vadd.s32 %v1015, 1
        %vm1059 = vcmp.eq.s32.totalorder %v985, %v1058
        %vm1060 = vcmp.eq.s32.totalorder %v986, %v1058
        %vm1061 = vcmp.eq.s32.totalorder %v1003, %v1058
        %vm1062 = vcmp.eq.s32.totalorder %v1004, %v1058
        %vm1063 = vcmp.eq.s32.totalorder %v1005, %v1058
        %vm1064 = vcmp.eq.s32.totalorder %v1006, %v1058
        %vm1065 = vcmp.eq.s32.totalorder %v1007, %v1058
        %vm1066 = vcmp.eq.s32.totalorder %v1008, %v1058
        %vm1067 = vcmp.eq.s32.totalorder %v1009, %v1058
        %vm1068 = vcmp.eq.s32.totalorder %v1010, %v1058
        %vm1069 = vcmp.eq.s32.totalorder %v1011, %v1058
        %vm1070 = vcmp.eq.s32.totalorder %v1012, %v1058
        %vm1071 = vcmp.eq.s32.totalorder %v1013, %v1058
        %vm1072 = vcmp.eq.s32.totalorder %v1014, %v1058
        %v1073 = vsel %vm1059, 1, 0
        %v1074 = vsel %vm1060, 1, 0
        %v1075 = vsel %vm1061, 1, 0
        %v1076 = vsel %vm1062, 1, 0
        %v1077 = vsel %vm1063, 1, 0
        %v1078 = vsel %vm1064, 1, 0
        %v1079 = vsel %vm1065, 1, 0
        %v1080 = vsel %vm1066, 1, 0
        %v1081 = vsel %vm1067, 1, 0
        %v1082 = vsel %vm1068, 1, 0
        %v1083 = vsel %vm1069, 1, 0
        %v1084 = vsel %vm1070, 1, 0
        %v1085 = vsel %vm1071, 1, 0
        %v1086 = vsel %vm1072, 1, 0
        %v1087 = vcvt.s32.f32 %v1073
        %v1088 = vcvt.s32.f32 %v1074
        %v1089 = vcvt.s32.f32 %v1075
        %v1090 = vcvt.s32.f32 %v1076
        %v1091 = vcvt.s32.f32 %v1077
        %v1092 = vcvt.s32.f32 %v1078
        %v1093 = vcvt.s32.f32 %v1079
        %v1094 = vcvt.s32.f32 %v1080
        %v1095 = vcvt.s32.f32 %v1081
        %v1096 = vcvt.s32.f32 %v1082
        %v1097 = vcvt.s32.f32 %v1083
        %v1098 = vcvt.s32.f32 %v1084
        %v1099 = vcvt.s32.f32 %v1085
        %v1100 = vcvt.s32.f32 %v1086
        %v1102 = vsel %vm374, %v993, 0
        %v1105 = vsel %vm374, %v994, 0
        %vm1107 = vcmask 1043456
        %v1109 = vsel %vm1107, %v981, 0
        %1111 = vmatprep.subr.mxu0 0.0
        %1112 = vmatpush1.msra.mxu0 %v978
        %1113 = vmatprep.subr.mxu0 0.0
        %1114 = vmatpush1.msra.mxu0 %v979
        %1115 = vmatprep.subr.mxu0 0.0
        %1116 = vmatpush1.msra.mxu0 %v980
        %1117 = vmatprep.subr.mxu0 0.0
        %1118 = vmatpush1.msra.mxu0 %v1109
        %1119 = vmatprep.subr.mxu0 0.0
        %1120 = vmatpush1.msra.mxu0 0.0
        %1121 = vmatprep.subr.mxu0 0.0
        %1122 = vmatpush1.msra.mxu0 0.0
        %1123 = vmatprep.subr.mxu0 0.0
        %1124 = vmatpush1.msra.mxu0 0.0
        %1125 = vmatprep.subr.mxu0 0.0
        %1126 = vmatpush1.msra.mxu0 0.0
        %1127 = vmatprep.subr.mxu0 0.0
        %1128 = vmatpush1.msra.mxu0 0.0
        %1129 = vmatprep.subr.mxu0 0.0
        %1130 = vmatpush1.msra.mxu0 0.0
        %1131 = vmatprep.subr.mxu0 0.0
        %1132 = vmatpush1.msra.mxu0 0.0
        %1133 = vmatprep.subr.mxu0 0.0
        %1134 = vmatpush1.msra.mxu0 0.0
        %1135 = vmatprep.subr.mxu0 0.0
        %1136 = vmatpush1.msra.mxu0 0.0
        %1137 = vmatprep.subr.mxu0 0.0
        %1138 = vmatpush1.msra.mxu0 0.0
        %1139 = vmatprep.subr.mxu0 0.0
        %1140 = vmatpush1.msra.mxu0 0.0
        %1141 = vmatprep.subr.mxu0 0.0
        %1142 = vmatpush1.msra.mxu0 0.0
        %1143 = vmatprep.subr.mxu0 0.0
        %1144 = vmatpush1.msra.mxu0 0.0
        %1145 = vmatprep.subr.mxu0 0.0
        %1146 = vmatpush1.msra.mxu0 0.0
        %1147 = vmatprep.subr.mxu0 0.0
        %1148 = vmatpush1.msra.mxu0 0.0
        %1149 = vmatprep.subr.mxu0 0.0
        %1150 = vmatpush1.msra.mxu0 0.0
        %1151 = vmatprep.subr.mxu0 0.0
        %1152 = vmatpush1.msra.mxu0 0.0
        %1153 = vmatprep.subr.mxu0 0.0
        %1154 = vmatpush1.msra.mxu0 0.0
        %1155 = vmatprep.subr.mxu0 0.0
        %1156 = vmatpush1.msra.mxu0 0.0
        %1157 = vmatprep.subr.mxu0 0.0
        %1158 = vmatpush1.msra.mxu0 0.0
        %1159 = vmatprep.subr.mxu0 0.0
        %1160 = vmatpush1.msra.mxu0 0.0
        %1161 = vmatprep.subr.mxu0 0.0
        %1162 = vmatpush1.msra.mxu0 0.0
        %1163 = vmatprep.subr.mxu0 0.0
        %1164 = vmatpush1.msra.mxu0 0.0
        %1165 = vmatprep.subr.mxu0 0.0
        %1166 = vmatpush1.msra.mxu0 0.0
        %1167 = vmatprep.subr.mxu0 0.0
        %1168 = vmatpush1.msra.mxu0 0.0
        %1169 = vmatprep.subr.mxu0 0.0
        %1170 = vmatpush1.msra.mxu0 0.0
        %1171 = vmatprep.subr.mxu0 0.0
        %1172 = vmatpush1.msra.mxu0 0.0
        %1173 = vmatprep.subr.mxu0 0.0
        %1174 = vmatpush1.msra.mxu0 0.0
        %1175 = vmatprep.mubr.f32.mxu0 0.0
        %1176 = vmatmul.mubr.f32.gmra.mrb[0].mxu0 %v1102
        %v1177 = vpop.f32.mrb[0].mxu0
        %v1178 = vadd.f32 0.0, %v1177
        %v1179 = vpop.f32.mrb[0].mxu0
        %1180 = vmatprep.mubr.f32.mxu0 0.0
        %1181 = vmatmul.mubr.f32.gmra.mrb[0].mxu0 %v1105
        %v1182 = vpop.f32.mrb[0].mxu0
        %v1183 = vadd.f32 0.0, %v1182
        %v1184 = vpop.f32.mrb[0].mxu0
        %1185 = vdwg.mxu0
        %v1187 = vsel %vm374, %v1001, 0
        %v1190 = vsel %vm374, %v1002, 0
        %1192 = vmatprep.subr.mxu0 0.0
        %1193 = vmatpush1.msra.mxu0 %v978
        %1194 = vmatprep.subr.mxu0 0.0
        %1195 = vmatpush1.msra.mxu0 %v979
        %1196 = vmatprep.subr.mxu0 0.0
        %1197 = vmatpush1.msra.mxu0 %v980
        %1198 = vmatprep.subr.mxu0 0.0
        %1199 = vmatpush1.msra.mxu0 %v1109
        %1200 = vmatprep.subr.mxu0 0.0
        %1201 = vmatpush1.msra.mxu0 0.0
        %1202 = vmatprep.subr.mxu0 0.0
        %1203 = vmatpush1.msra.mxu0 0.0
        %1204 = vmatprep.subr.mxu0 0.0
        %1205 = vmatpush1.msra.mxu0 0.0
        %1206 = vmatprep.subr.mxu0 0.0
        %1207 = vmatpush1.msra.mxu0 0.0
        %1208 = vmatprep.subr.mxu0 0.0
        %1209 = vmatpush1.msra.mxu0 0.0
        %1210 = vmatprep.subr.mxu0 0.0
        %1211 = vmatpush1.msra.mxu0 0.0
        %1212 = vmatprep.subr.mxu0 0.0
        %1213 = vmatpush1.msra.mxu0 0.0
        %1214 = vmatprep.subr.mxu0 0.0
        %1215 = vmatpush1.msra.mxu0 0.0
        %1216 = vmatprep.subr.mxu0 0.0
        %1217 = vmatpush1.msra.mxu0 0.0
        %1218 = vmatprep.subr.mxu0 0.0
        %1219 = vmatpush1.msra.mxu0 0.0
        %1220 = vmatprep.subr.mxu0 0.0
        %1221 = vmatpush1.msra.mxu0 0.0
        %1222 = vmatprep.subr.mxu0 0.0
        %1223 = vmatpush1.msra.mxu0 0.0
        %1224 = vmatprep.subr.mxu0 0.0
        %1225 = vmatpush1.msra.mxu0 0.0
        %1226 = vmatprep.subr.mxu0 0.0
        %1227 = vmatpush1.msra.mxu0 0.0
        %1228 = vmatprep.subr.mxu0 0.0
        %1229 = vmatpush1.msra.mxu0 0.0
        %1230 = vmatprep.subr.mxu0 0.0
        %1231 = vmatpush1.msra.mxu0 0.0
        %1232 = vmatprep.subr.mxu0 0.0
        %1233 = vmatpush1.msra.mxu0 0.0
        %1234 = vmatprep.subr.mxu0 0.0
        %1235 = vmatpush1.msra.mxu0 0.0
        %1236 = vmatprep.subr.mxu0 0.0
        %1237 = vmatpush1.msra.mxu0 0.0
        %1238 = vmatprep.subr.mxu0 0.0
        %1239 = vmatpush1.msra.mxu0 0.0
        %1240 = vmatprep.subr.mxu0 0.0
        %1241 = vmatpush1.msra.mxu0 0.0
        %1242 = vmatprep.subr.mxu0 0.0
        %1243 = vmatpush1.msra.mxu0 0.0
        %1244 = vmatprep.subr.mxu0 0.0
        %1245 = vmatpush1.msra.mxu0 0.0
        %1246 = vmatprep.subr.mxu0 0.0
        %1247 = vmatpush1.msra.mxu0 0.0
        %1248 = vmatprep.subr.mxu0 0.0
        %1249 = vmatpush1.msra.mxu0 0.0
        %1250 = vmatprep.subr.mxu0 0.0
        %1251 = vmatpush1.msra.mxu0 0.0
        %1252 = vmatprep.subr.mxu0 0.0
        %1253 = vmatpush1.msra.mxu0 0.0
        %1254 = vmatprep.subr.mxu0 0.0
        %1255 = vmatpush1.msra.mxu0 0.0
        %1256 = vmatprep.mubr.f32.mxu0 0.0
        %1257 = vmatmul.mubr.f32.gmra.mrb[0].mxu0 %v1187
        %v1258 = vpop.f32.mrb[0].mxu0
        %v1259 = vadd.f32 0.0, %v1258
        %v1260 = vpop.f32.mrb[0].mxu0
        %1261 = vmatprep.mubr.f32.mxu0 0.0
        %1262 = vmatmul.mubr.f32.gmra.mrb[0].mxu0 %v1190
        %v1263 = vpop.f32.mrb[0].mxu0
        %v1264 = vadd.f32 0.0, %v1263
        %v1265 = vpop.f32.mrb[0].mxu0
        %1266 = vdwg.mxu0
        %v1267 = vmax.f32 %v1178, %v1259
        %v1268 = vmax.f32 %v1183, %v1264
        %vm1269 = vcmask 916480
        %v1271 = vsel %vm1269, %v1267, 0
        %v1274 = vsel %vm1269, %v1268, 0
        %1276 = vmatprep.subr.mxu0 0.0
        %1277 = vmatpush1.msra.mxu0 %v1044
        %1278 = vmatprep.subr.mxu0 0.0
        %1279 = vmatpush1.msra.mxu0 %v1045
        %1280 = vmatprep.subr.mxu0 0.0
        %1281 = vmatpush1.msra.mxu0 %v1046
        %1282 = vmatprep.subr.mxu0 0.0
        %1283 = vmatpush1.msra.mxu0 %v1047
        %1284 = vmatprep.subr.mxu0 0.0
        %1285 = vmatpush1.msra.mxu0 %v1048
        %1286 = vmatprep.subr.mxu0 0.0
        %1287 = vmatpush1.msra.mxu0 %v1049
        %1288 = vmatprep.subr.mxu0 0.0
        %1289 = vmatpush1.msra.mxu0 %v1050
        %1290 = vmatprep.subr.mxu0 0.0
        %1291 = vmatpush1.msra.mxu0 %v1051
        %1292 = vmatprep.subr.mxu0 0.0
        %1293 = vmatpush1.msra.mxu0 %v1052
        %1294 = vmatprep.subr.mxu0 0.0
        %1295 = vmatpush1.msra.mxu0 %v1053
        %1296 = vmatprep.subr.mxu0 0.0
        %1297 = vmatpush1.msra.mxu0 %v1054
        %1298 = vmatprep.subr.mxu0 0.0
        %1299 = vmatpush1.msra.mxu0 %v1055
        %1300 = vmatprep.subr.mxu0 0.0
        %1301 = vmatpush1.msra.mxu0 %v1056
        %1302 = vmatprep.subr.mxu0 0.0
        %1303 = vmatpush1.msra.mxu0 %v1057
        %1304 = vmatprep.subr.mxu0 0.0
        %1305 = vmatpush1.msra.mxu0 0.0
        %1306 = vmatprep.subr.mxu0 0.0
        %1307 = vmatpush1.msra.mxu0 0.0
        %1308 = vmatprep.subr.mxu0 0.0
        %1309 = vmatpush1.msra.mxu0 0.0
        %1310 = vmatprep.subr.mxu0 0.0
        %1311 = vmatpush1.msra.mxu0 0.0
        %1312 = vmatprep.subr.mxu0 0.0
        %1313 = vmatpush1.msra.mxu0 0.0
        %1314 = vmatprep.subr.mxu0 0.0
        %1315 = vmatpush1.msra.mxu0 0.0
        %1316 = vmatprep.subr.mxu0 0.0
        %1317 = vmatpush1.msra.mxu0 0.0
        %1318 = vmatprep.subr.mxu0 0.0
        %1319 = vmatpush1.msra.mxu0 0.0
        %1320 = vmatprep.subr.mxu0 0.0
        %1321 = vmatpush1.msra.mxu0 0.0
        %1322 = vmatprep.subr.mxu0 0.0
        %1323 = vmatpush1.msra.mxu0 0.0
        %1324 = vmatprep.subr.mxu0 0.0
        %1325 = vmatpush1.msra.mxu0 0.0
        %1326 = vmatprep.subr.mxu0 0.0
        %1327 = vmatpush1.msra.mxu0 0.0
        %1328 = vmatprep.subr.mxu0 0.0
        %1329 = vmatpush1.msra.mxu0 0.0
        %1330 = vmatprep.subr.mxu0 0.0
        %1331 = vmatpush1.msra.mxu0 0.0
        %1332 = vmatprep.subr.mxu0 0.0
        %1333 = vmatpush1.msra.mxu0 0.0
        %1334 = vmatprep.subr.mxu0 0.0
        %1335 = vmatpush1.msra.mxu0 0.0
        %1336 = vmatprep.subr.mxu0 0.0
        %1337 = vmatpush1.msra.mxu0 0.0
        %1338 = vmatprep.subr.mxu0 0.0
        %1339 = vmatpush1.msra.mxu0 0.0
        %1340 = vmatprep.mubr.f32.mxu0 0.0
        %1341 = vmatmul.mubr.f32.gmra.mrb[0].mxu0 %v1271
        %v1342 = vpop.f32.mrb[0].mxu0
        %v1343 = vadd.f32 0.0, %v1342
        %v1344 = vpop.f32.mrb[0].mxu0
        %1345 = vmatprep.mubr.f32.mxu0 0.0
        %1346 = vmatmul.mubr.f32.gmra.mrb[0].mxu0 %v1274
        %v1347 = vpop.f32.mrb[0].mxu0
        %v1348 = vadd.f32 0.0, %v1347
        %v1349 = vpop.f32.mrb[0].mxu0
        %1350 = vdwg.mxu0
        %1351 = vmatprep.subr.mxu0 0.0
        %1352 = vmatpush1.msra.mxu0 %v1087
        %1353 = vmatprep.subr.mxu0 0.0
        %1354 = vmatpush1.msra.mxu0 %v1088
        %1355 = vmatprep.subr.mxu0 0.0
        %1356 = vmatpush1.msra.mxu0 %v1089
        %1357 = vmatprep.subr.mxu0 0.0
        %1358 = vmatpush1.msra.mxu0 %v1090
        %1359 = vmatprep.subr.mxu0 0.0
        %1360 = vmatpush1.msra.mxu0 %v1091
        %1361 = vmatprep.subr.mxu0 0.0
        %1362 = vmatpush1.msra.mxu0 %v1092
        %1363 = vmatprep.subr.mxu0 0.0
        %1364 = vmatpush1.msra.mxu0 %v1093
        %1365 = vmatprep.subr.mxu0 0.0
        %1366 = vmatpush1.msra.mxu0 %v1094
        %1367 = vmatprep.subr.mxu0 0.0
        %1368 = vmatpush1.msra.mxu0 %v1095
        %1369 = vmatprep.subr.mxu0 0.0
        %1370 = vmatpush1.msra.mxu0 %v1096
        %1371 = vmatprep.subr.mxu0 0.0
        %1372 = vmatpush1.msra.mxu0 %v1097
        %1373 = vmatprep.subr.mxu0 0.0
        %1374 = vmatpush1.msra.mxu0 %v1098
        %1375 = vmatprep.subr.mxu0 0.0
        %1376 = vmatpush1.msra.mxu0 %v1099
        %1377 = vmatprep.subr.mxu0 0.0
        %1378 = vmatpush1.msra.mxu0 %v1100
        %1379 = vmatprep.subr.mxu0 0.0
        %1380 = vmatpush1.msra.mxu0 0.0
        %1381 = vmatprep.subr.mxu0 0.0
        %1382 = vmatpush1.msra.mxu0 0.0
        %1383 = vmatprep.subr.mxu0 0.0
        %1384 = vmatpush1.msra.mxu0 0.0
        %1385 = vmatprep.subr.mxu0 0.0
        %1386 = vmatpush1.msra.mxu0 0.0
        %1387 = vmatprep.subr.mxu0 0.0
        %1388 = vmatpush1.msra.mxu0 0.0
        %1389 = vmatprep.subr.mxu0 0.0
        %1390 = vmatpush1.msra.mxu0 0.0
        %1391 = vmatprep.subr.mxu0 0.0
        %1392 = vmatpush1.msra.mxu0 0.0
        %1393 = vmatprep.subr.mxu0 0.0
        %1394 = vmatpush1.msra.mxu0 0.0
        %1395 = vmatprep.subr.mxu0 0.0
        %1396 = vmatpush1.msra.mxu0 0.0
        %1397 = vmatprep.subr.mxu0 0.0
        %1398 = vmatpush1.msra.mxu0 0.0
        %1399 = vmatprep.subr.mxu0 0.0
        %1400 = vmatpush1.msra.mxu0 0.0
        %1401 = vmatprep.subr.mxu0 0.0
        %1402 = vmatpush1.msra.mxu0 0.0
        %1403 = vmatprep.subr.mxu0 0.0
        %1404 = vmatpush1.msra.mxu0 0.0
        %1405 = vmatprep.subr.mxu0 0.0
        %1406 = vmatpush1.msra.mxu0 0.0
        %1407 = vmatprep.subr.mxu0 0.0
        %1408 = vmatpush1.msra.mxu0 0.0
        %1409 = vmatprep.subr.mxu0 0.0
        %1410 = vmatpush1.msra.mxu0 0.0
        %1411 = vmatprep.subr.mxu0 0.0
        %1412 = vmatpush1.msra.mxu0 0.0
        %1413 = vmatprep.subr.mxu0 0.0
        %1414 = vmatpush1.msra.mxu0 0.0
        %1415 = vmatprep.mubr.f32.mxu0 0.0
        %1416 = vmatmul.mubr.f32.gmra.mrb[0].mxu0 %v1271
        %v1417 = vpop.f32.mrb[0].mxu0
        %v1418 = vadd.f32 0.0, %v1417
        %v1419 = vpop.f32.mrb[0].mxu0
        %1420 = vmatprep.mubr.f32.mxu0 0.0
        %1421 = vmatmul.mubr.f32.gmra.mrb[0].mxu0 %v1274
        %v1422 = vpop.f32.mrb[0].mxu0
        %v1423 = vadd.f32 0.0, %v1422
        %v1424 = vpop.f32.mrb[0].mxu0
        %1425 = vdwg.mxu0
        %v1426 = vmax.f32 %v1343, %v1418
        %v1427 = vmax.f32 %v1348, %v1423
        %vm1428 = vcmask 130048
        %1429 = vst.msk [vmem:[#allocation3] sm:$0xff] %vm1428, 0.0
        %1430 = vst.msk [vmem:[#allocation3 + $0x8] sm:$0xff] %vm1428, 0.0
        %1431 = vst.msk [vmem:[#allocation3 + $0x10] sm:$0xff] %vm1428, 0.0
        %1432 = vst.msk [vmem:[#allocation3 + $0x18] sm:$0xff] %vm1428, 0.0
        %1433 = vst.msk [vmem:[#allocation3 + $0x20] sm:$0xff] %vm1428, 0.0
        %1434 = vst.msk [vmem:[#allocation3 + $0x28] sm:$0xff] %vm1428, 0.0
        %1435 = vst.msk [vmem:[#allocation3 + $0x30] sm:$0xff] %vm1428, 0.0
        %1436 = vst.msk [vmem:[#allocation3 + $0x38] sm:$0xff] %vm1428, 0.0
        %1439 = vrot.lane.b32.xlu0 %v1426, 1
        %v1440 = vpop.permute.xlu0 %1439
        %1441 = vrot.lane.b32.xlu0 %v1427, 1
        %v1442 = vpop.permute.xlu0 %1441
        %vm1445 = vcmask 121864
        %1446 = vst.msk [vmem:[#allocation3 + $0x1] sm:$0xff] %vm1445, %v1440
        %vm1447 = vcmask 119816
        %1448 = vst.msk [vmem:[#allocation3 + $0x9] sm:$0x3f] %vm1447, %v1442
        %1449 = vrot.lane.b32.xlu0 %v1426, 115
        %v1450 = vpop.permute.xlu0 %1449
        %1451 = vrot.lane.b32.xlu0 %v1427, 115
        %v1452 = vpop.permute.xlu0 %1451
        %s1455 = scalar_lea.vmem [#allocation3], 16
        %1456 = vst.msk [vmem:[%s1455 + $0x1] sm:$0xff] %vm1445, %v1450
        %1457 = vst.msk [vmem:[%s1455 + $0x9] sm:$0x3f] %vm1447, %v1452
        %1458 = vrot.lane.b32.xlu0 %v1426, 101
        %v1459 = vpop.permute.xlu0 %1458
        %1460 = vrot.lane.b32.xlu0 %v1427, 101
        %v1461 = vpop.permute.xlu0 %1460
        %s1464 = scalar_lea.vmem [#allocation3], 32
        %1465 = vst.msk [vmem:[%s1464 + $0x1] sm:$0xff] %vm1445, %v1459
        %1466 = vst.msk [vmem:[%s1464 + $0x9] sm:$0x3f] %vm1447, %v1461
        %1467 = vrot.lane.b32.xlu0 %v1426, 87
        %v1468 = vpop.permute.xlu0 %1467
        %1469 = vrot.lane.b32.xlu0 %v1427, 87
        %v1470 = vpop.permute.xlu0 %1469
        %s1473 = scalar_lea.vmem [#allocation3], 48
        %1474 = vst.msk [vmem:[%s1473 + $0x1] sm:$0xff] %vm1445, %v1468
        %1475 = vst.msk [vmem:[%s1473 + $0x9] sm:$0x3f] %vm1447, %v1470
        %v1476 = vld [vmem:[%s4] sm:$0x1]
        %v1478 = vlaneseq
        %v1479 = vshrl.u32 %v1478, 7
        %v1480 = vsub.s32 0, %v1479
        %v1481 = vrot.slane %v1476, %v1480
        %v1483 = vld [vmem:[#allocation3] sm:$0xff]
        %v1484 = vld [vmem:[#allocation3 + $0x8] sm:$0x3f]
        %1487 = vrot.lane.b32.xlu0 %v1483, 14
        %v1488 = vpop.permute.xlu0 %1487
        %1489 = vrot.lane.b32.xlu0 %v1484, 14
        %v1490 = vpop.permute.xlu0 %1489
        %1493 = vrot.lane.b32.xlu0 %v1483, 28
        %v1494 = vpop.permute.xlu0 %1493
        %1495 = vrot.lane.b32.xlu0 %v1484, 28
        %v1496 = vpop.permute.xlu0 %1495
        %1499 = vrot.lane.b32.xlu0 %v1483, 42
        %v1500 = vpop.permute.xlu0 %1499
        %1501 = vrot.lane.b32.xlu0 %v1484, 42
        %v1502 = vpop.permute.xlu0 %1501
        %vm1505 = vcmask 113664
        %v1506 = vsel %vm1505, %v1483, %v1488
        %v1507 = vsel %vm1505, %v1484, %v1490
        %v1508 = vsel %vm374, %v1506, %v1494
        %v1509 = vsel %vm374, %v1507, %v1496
        %vm1510 = vcmask 343040
        %v1511 = vsel %vm1510, %v1508, %v1500
        %v1512 = vsel %vm1510, %v1509, %v1502
        %v1513 = vld [vmem:[%s3] sm:$0x1]
        %v1514 = vlaneseq
        %v1515 = vshrl.u32 %v1514, 7
        %v1516 = vsub.s32 0, %v1515
        %v1517 = vrot.slane %v1513, %v1516
        %v1518 = vmul.f32 %v1511, %v1517
        %v1519 = vmul.f32 %v1512, %v1517
        %v1520 = vadd.f32 %v1481, %v1518
        %v1521 = vadd.f32 %v1481, %v1519
        %1522 = vrot.lane.b32.xlu0 %v1483, 127
        %v1523 = vpop.permute.xlu0 %1522
        %1524 = vrot.lane.b32.xlu0 %v1484, 127
        %v1525 = vpop.permute.xlu0 %1524
        %1528 = vrot.lane.b32.xlu0 %v1483, 13
        %v1529 = vpop.permute.xlu0 %1528
        %1530 = vrot.lane.b32.xlu0 %v1484, 13
        %v1531 = vpop.permute.xlu0 %1530
        %1534 = vrot.lane.b32.xlu0 %v1483, 27
        %v1535 = vpop.permute.xlu0 %1534
        %1536 = vrot.lane.b32.xlu0 %v1484, 27
        %v1537 = vpop.permute.xlu0 %1536
        %1540 = vrot.lane.b32.xlu0 %v1483, 41
        %v1541 = vpop.permute.xlu0 %1540
        %1542 = vrot.lane.b32.xlu0 %v1484, 41
        %v1543 = vpop.permute.xlu0 %1542
        %v1546 = vsel %vm1505, %v1523, %v1529
        %v1547 = vsel %vm1505, %v1525, %v1531
        %v1548 = vsel %vm374, %v1546, %v1535
        %v1549 = vsel %vm374, %v1547, %v1537
        %v1550 = vsel %vm1510, %v1548, %v1541
        %v1551 = vsel %vm1510, %v1549, %v1543
        %v1552 = vld [vmem:[%s3 + $0x1] sm:$0x1]
        %v1553 = vlaneseq
        %v1554 = vshrl.u32 %v1553, 7
        %v1555 = vsub.s32 0, %v1554
        %v1556 = vrot.slane %v1552, %v1555
        %v1557 = vmul.f32 %v1550, %v1556
        %v1558 = vmul.f32 %v1551, %v1556
        %v1559 = vadd.f32 %v1520, %v1557
        %v1560 = vadd.f32 %v1521, %v1558
        %1561 = vrot.lane.b32.xlu0 %v1483, 126
        %v1562 = vpop.permute.xlu0 %1561
        %1563 = vrot.lane.b32.xlu0 %v1484, 126
        %v1564 = vpop.permute.xlu0 %1563
        %1567 = vrot.lane.b32.xlu0 %v1483, 12
        %v1568 = vpop.permute.xlu0 %1567
        %1569 = vrot.lane.b32.xlu0 %v1484, 12
        %v1570 = vpop.permute.xlu0 %1569
        %1573 = vrot.lane.b32.xlu0 %v1483, 26
        %v1574 = vpop.permute.xlu0 %1573
        %1575 = vrot.lane.b32.xlu0 %v1484, 26
        %v1576 = vpop.permute.xlu0 %1575
        %1579 = vrot.lane.b32.xlu0 %v1483, 40
        %v1580 = vpop.permute.xlu0 %1579
        %1581 = vrot.lane.b32.xlu0 %v1484, 40
        %v1582 = vpop.permute.xlu0 %1581
        %v1585 = vsel %vm1505, %v1562, %v1568
        %v1586 = vsel %vm1505, %v1564, %v1570
        %v1587 = vsel %vm374, %v1585, %v1574
        %v1588 = vsel %vm374, %v1586, %v1576
        %v1589 = vsel %vm1510, %v1587, %v1580
        %v1590 = vsel %vm1510, %v1588, %v1582
        %v1591 = vld [vmem:[%s3 + $0x2] sm:$0x1]
        %v1592 = vlaneseq
        %v1593 = vshrl.u32 %v1592, 7
        %v1594 = vsub.s32 0, %v1593
        %v1595 = vrot.slane %v1591, %v1594
        %v1596 = vmul.f32 %v1589, %v1595
        %v1597 = vmul.f32 %v1590, %v1595
        %v1598 = vadd.f32 %v1559, %v1596
        %v1599 = vadd.f32 %v1560, %v1597
        %v1600 = vld [vmem:[#allocation3 + $0x1] sm:$0xff]
        %v1601 = vld [vmem:[#allocation3 + $0x9] sm:$0x3f]
        %1604 = vrot.lane.b32.xlu0 %v1600, 14
        %v1605 = vpop.permute.xlu0 %1604
        %1606 = vrot.lane.b32.xlu0 %v1601, 14
        %v1607 = vpop.permute.xlu0 %1606
        %1610 = vrot.lane.b32.xlu0 %v1600, 28
        %v1611 = vpop.permute.xlu0 %1610
        %1612 = vrot.lane.b32.xlu0 %v1601, 28
        %v1613 = vpop.permute.xlu0 %1612
        %1616 = vrot.lane.b32.xlu0 %v1600, 42
        %v1617 = vpop.permute.xlu0 %1616
        %1618 = vrot.lane.b32.xlu0 %v1601, 42
        %v1619 = vpop.permute.xlu0 %1618
        %v1622 = vsel %vm1505, %v1600, %v1605
        %v1623 = vsel %vm1505, %v1601, %v1607
        %v1624 = vsel %vm374, %v1622, %v1611
        %v1625 = vsel %vm374, %v1623, %v1613
        %v1626 = vsel %vm1510, %v1624, %v1617
        %v1627 = vsel %vm1510, %v1625, %v1619
        %v1628 = vld [vmem:[%s3 + $0x3] sm:$0x1]
        %v1629 = vlaneseq
        %v1630 = vshrl.u32 %v1629, 7
        %v1631 = vsub.s32 0, %v1630
        %v1632 = vrot.slane %v1628, %v1631
        %v1633 = vmul.f32 %v1626, %v1632
        %v1634 = vmul.f32 %v1627, %v1632
        %v1635 = vadd.f32 %v1598, %v1633
        %v1636 = vadd.f32 %v1599, %v1634
        %1637 = vrot.lane.b32.xlu0 %v1600, 127
        %v1638 = vpop.permute.xlu0 %1637
        %1639 = vrot.lane.b32.xlu0 %v1601, 127
        %v1640 = vpop.permute.xlu0 %1639
        %1643 = vrot.lane.b32.xlu0 %v1600, 13
        %v1644 = vpop.permute.xlu0 %1643
        %1645 = vrot.lane.b32.xlu0 %v1601, 13
        %v1646 = vpop.permute.xlu0 %1645
        %1649 = vrot.lane.b32.xlu0 %v1600, 27
        %v1650 = vpop.permute.xlu0 %1649
        %1651 = vrot.lane.b32.xlu0 %v1601, 27
        %v1652 = vpop.permute.xlu0 %1651
        %1655 = vrot.lane.b32.xlu0 %v1600, 41
        %v1656 = vpop.permute.xlu0 %1655
        %1657 = vrot.lane.b32.xlu0 %v1601, 41
        %v1658 = vpop.permute.xlu0 %1657
        %v1661 = vsel %vm1505, %v1638, %v1644
        %v1662 = vsel %vm1505, %v1640, %v1646
        %v1663 = vsel %vm374, %v1661, %v1650
        %v1664 = vsel %vm374, %v1662, %v1652
        %v1665 = vsel %vm1510, %v1663, %v1656
        %v1666 = vsel %vm1510, %v1664, %v1658
        %v1667 = vld [vmem:[%s3 + $0x4] sm:$0x1]
        %v1668 = vlaneseq
        %v1669 = vshrl.u32 %v1668, 7
        %v1670 = vsub.s32 0, %v1669
        %v1671 = vrot.slane %v1667, %v1670
        %v1672 = vmul.f32 %v1665, %v1671
        %v1673 = vmul.f32 %v1666, %v1671
        %v1674 = vadd.f32 %v1635, %v1672
        %v1675 = vadd.f32 %v1636, %v1673
        %1676 = vrot.lane.b32.xlu0 %v1600, 126
        %v1677 = vpop.permute.xlu0 %1676
        %1678 = vrot.lane.b32.xlu0 %v1601, 126
        %v1679 = vpop.permute.xlu0 %1678
        %1682 = vrot.lane.b32.xlu0 %v1600, 12
        %v1683 = vpop.permute.xlu0 %1682
        %1684 = vrot.lane.b32.xlu0 %v1601, 12
        %v1685 = vpop.permute.xlu0 %1684
        %1688 = vrot.lane.b32.xlu0 %v1600, 26
        %v1689 = vpop.permute.xlu0 %1688
        %1690 = vrot.lane.b32.xlu0 %v1601, 26
        %v1691 = vpop.permute.xlu0 %1690
        %1694 = vrot.lane.b32.xlu0 %v1600, 40
        %v1695 = vpop.permute.xlu0 %1694
        %1696 = vrot.lane.b32.xlu0 %v1601, 40
        %v1697 = vpop.permute.xlu0 %1696
        %v1700 = vsel %vm1505, %v1677, %v1683
        %v1701 = vsel %vm1505, %v1679, %v1685
        %v1702 = vsel %vm374, %v1700, %v1689
        %v1703 = vsel %vm374, %v1701, %v1691
        %v1704 = vsel %vm1510, %v1702, %v1695
        %v1705 = vsel %vm1510, %v1703, %v1697
        %v1706 = vld [vmem:[%s3 + $0x5] sm:$0x1]
        %v1707 = vlaneseq
        %v1708 = vshrl.u32 %v1707, 7
        %v1709 = vsub.s32 0, %v1708
        %v1710 = vrot.slane %v1706, %v1709
        %v1711 = vmul.f32 %v1704, %v1710
        %v1712 = vmul.f32 %v1705, %v1710
        %v1713 = vadd.f32 %v1674, %v1711
        %v1714 = vadd.f32 %v1675, %v1712
        %v1715 = vld [vmem:[#allocation3 + $0x2] sm:$0xff]
        %v1716 = vld [vmem:[#allocation3 + $0xa] sm:$0x3f]
        %1719 = vrot.lane.b32.xlu0 %v1715, 14
        %v1720 = vpop.permute.xlu0 %1719
        %1721 = vrot.lane.b32.xlu0 %v1716, 14
        %v1722 = vpop.permute.xlu0 %1721
        %1725 = vrot.lane.b32.xlu0 %v1715, 28
        %v1726 = vpop.permute.xlu0 %1725
        %1727 = vrot.lane.b32.xlu0 %v1716, 28
        %v1728 = vpop.permute.xlu0 %1727
        %1731 = vrot.lane.b32.xlu0 %v1715, 42
        %v1732 = vpop.permute.xlu0 %1731
        %1733 = vrot.lane.b32.xlu0 %v1716, 42
        %v1734 = vpop.permute.xlu0 %1733
        %v1737 = vsel %vm1505, %v1715, %v1720
        %v1738 = vsel %vm1505, %v1716, %v1722
        %v1739 = vsel %vm374, %v1737, %v1726
        %v1740 = vsel %vm374, %v1738, %v1728
        %v1741 = vsel %vm1510, %v1739, %v1732
        %v1742 = vsel %vm1510, %v1740, %v1734
        %v1743 = vld [vmem:[%s3 + $0x6] sm:$0x1]
        %v1744 = vlaneseq
        %v1745 = vshrl.u32 %v1744, 7
        %v1746 = vsub.s32 0, %v1745
        %v1747 = vrot.slane %v1743, %v1746
        %v1748 = vmul.f32 %v1741, %v1747
        %v1749 = vmul.f32 %v1742, %v1747
        %v1750 = vadd.f32 %v1713, %v1748
        %v1751 = vadd.f32 %v1714, %v1749
        %1752 = vrot.lane.b32.xlu0 %v1715, 127
        %v1753 = vpop.permute.xlu0 %1752
        %1754 = vrot.lane.b32.xlu0 %v1716, 127
        %v1755 = vpop.permute.xlu0 %1754
        %1758 = vrot.lane.b32.xlu0 %v1715, 13
        %v1759 = vpop.permute.xlu0 %1758
        %1760 = vrot.lane.b32.xlu0 %v1716, 13
        %v1761 = vpop.permute.xlu0 %1760
        %1764 = vrot.lane.b32.xlu0 %v1715, 27
        %v1765 = vpop.permute.xlu0 %1764
        %1766 = vrot.lane.b32.xlu0 %v1716, 27
        %v1767 = vpop.permute.xlu0 %1766
        %1770 = vrot.lane.b32.xlu0 %v1715, 41
        %v1771 = vpop.permute.xlu0 %1770
        %1772 = vrot.lane.b32.xlu0 %v1716, 41
        %v1773 = vpop.permute.xlu0 %1772
        %v1776 = vsel %vm1505, %v1753, %v1759
        %v1777 = vsel %vm1505, %v1755, %v1761
        %v1778 = vsel %vm374, %v1776, %v1765
        %v1779 = vsel %vm374, %v1777, %v1767
        %v1780 = vsel %vm1510, %v1778, %v1771
        %v1781 = vsel %vm1510, %v1779, %v1773
        %v1782 = vld [vmem:[%s3 + $0x7] sm:$0x1]
        %v1783 = vlaneseq
        %v1784 = vshrl.u32 %v1783, 7
        %v1785 = vsub.s32 0, %v1784
        %v1786 = vrot.slane %v1782, %v1785
        %v1787 = vmul.f32 %v1780, %v1786
        %v1788 = vmul.f32 %v1781, %v1786
        %v1789 = vadd.f32 %v1750, %v1787
        %v1790 = vadd.f32 %v1751, %v1788
        %1791 = vrot.lane.b32.xlu0 %v1715, 126
        %v1792 = vpop.permute.xlu0 %1791
        %1793 = vrot.lane.b32.xlu0 %v1716, 126
        %v1794 = vpop.permute.xlu0 %1793
        %1797 = vrot.lane.b32.xlu0 %v1715, 12
        %v1798 = vpop.permute.xlu0 %1797
        %1799 = vrot.lane.b32.xlu0 %v1716, 12
        %v1800 = vpop.permute.xlu0 %1799
        %1803 = vrot.lane.b32.xlu0 %v1715, 26
        %v1804 = vpop.permute.xlu0 %1803
        %1805 = vrot.lane.b32.xlu0 %v1716, 26
        %v1806 = vpop.permute.xlu0 %1805
        %1809 = vrot.lane.b32.xlu0 %v1715, 40
        %v1810 = vpop.permute.xlu0 %1809
        %1811 = vrot.lane.b32.xlu0 %v1716, 40
        %v1812 = vpop.permute.xlu0 %1811
        %v1815 = vsel %vm1505, %v1792, %v1798
        %v1816 = vsel %vm1505, %v1794, %v1800
        %v1817 = vsel %vm374, %v1815, %v1804
        %v1818 = vsel %vm374, %v1816, %v1806
        %v1819 = vsel %vm1510, %v1817, %v1810
        %v1820 = vsel %vm1510, %v1818, %v1812
        %v1821 = vld [vmem:[%s3 + $0x8] sm:$0x1]
        %v1822 = vlaneseq
        %v1823 = vshrl.u32 %v1822, 7
        %v1824 = vsub.s32 0, %v1823
        %v1825 = vrot.slane %v1821, %v1824
        %v1826 = vmul.f32 %v1819, %v1825
        %v1827 = vmul.f32 %v1820, %v1825
        %v1828 = vadd.f32 %v1789, %v1826
        %v1829 = vadd.f32 %v1790, %v1827
        %v1830 = vld [vmem:[%s1455] sm:$0xff]
        %v1831 = vld [vmem:[%s1455 + $0x8] sm:$0x3f]
        %1834 = vrot.lane.b32.xlu0 %v1830, 14
        %v1835 = vpop.permute.xlu0 %1834
        %1836 = vrot.lane.b32.xlu0 %v1831, 14
        %v1837 = vpop.permute.xlu0 %1836
        %1840 = vrot.lane.b32.xlu0 %v1830, 28
        %v1841 = vpop.permute.xlu0 %1840
        %1842 = vrot.lane.b32.xlu0 %v1831, 28
        %v1843 = vpop.permute.xlu0 %1842
        %1846 = vrot.lane.b32.xlu0 %v1830, 42
        %v1847 = vpop.permute.xlu0 %1846
        %1848 = vrot.lane.b32.xlu0 %v1831, 42
        %v1849 = vpop.permute.xlu0 %1848
        %v1852 = vsel %vm1505, %v1830, %v1835
        %v1853 = vsel %vm1505, %v1831, %v1837
        %v1854 = vsel %vm374, %v1852, %v1841
        %v1855 = vsel %vm374, %v1853, %v1843
        %v1856 = vsel %vm1510, %v1854, %v1847
        %v1857 = vsel %vm1510, %v1855, %v1849
        %v1858 = vld [vmem:[%s3 + $0x9] sm:$0x1]
        %v1859 = vlaneseq
        %v1860 = vshrl.u32 %v1859, 7
        %v1861 = vsub.s32 0, %v1860
        %v1862 = vrot.slane %v1858, %v1861
        %v1863 = vmul.f32 %v1856, %v1862
        %v1864 = vmul.f32 %v1857, %v1862
        %v1865 = vadd.f32 %v1828, %v1863
        %v1866 = vadd.f32 %v1829, %v1864
        %1867 = vrot.lane.b32.xlu0 %v1830, 127
        %v1868 = vpop.permute.xlu0 %1867
        %1869 = vrot.lane.b32.xlu0 %v1831, 127
        %v1870 = vpop.permute.xlu0 %1869
        %1873 = vrot.lane.b32.xlu0 %v1830, 13
        %v1874 = vpop.permute.xlu0 %1873
        %1875 = vrot.lane.b32.xlu0 %v1831, 13
        %v1876 = vpop.permute.xlu0 %1875
        %1879 = vrot.lane.b32.xlu0 %v1830, 27
        %v1880 = vpop.permute.xlu0 %1879
        %1881 = vrot.lane.b32.xlu0 %v1831, 27
        %v1882 = vpop.permute.xlu0 %1881
        %1885 = vrot.lane.b32.xlu0 %v1830, 41
        %v1886 = vpop.permute.xlu0 %1885
        %1887 = vrot.lane.b32.xlu0 %v1831, 41
        %v1888 = vpop.permute.xlu0 %1887
        %v1891 = vsel %vm1505, %v1868, %v1874
        %v1892 = vsel %vm1505, %v1870, %v1876
        %v1893 = vsel %vm374, %v1891, %v1880
        %v1894 = vsel %vm374, %v1892, %v1882
        %v1895 = vsel %vm1510, %v1893, %v1886
        %v1896 = vsel %vm1510, %v1894, %v1888
        %v1897 = vld [vmem:[%s3 + $0xa] sm:$0x1]
        %v1898 = vlaneseq
        %v1899 = vshrl.u32 %v1898, 7
        %v1900 = vsub.s32 0, %v1899
        %v1901 = vrot.slane %v1897, %v1900
        %v1902 = vmul.f32 %v1895, %v1901
        %v1903 = vmul.f32 %v1896, %v1901
        %v1904 = vadd.f32 %v1865, %v1902
        %v1905 = vadd.f32 %v1866, %v1903
        %1906 = vrot.lane.b32.xlu0 %v1830, 126
        %v1907 = vpop.permute.xlu0 %1906
        %1908 = vrot.lane.b32.xlu0 %v1831, 126
        %v1909 = vpop.permute.xlu0 %1908
        %1912 = vrot.lane.b32.xlu0 %v1830, 12
        %v1913 = vpop.permute.xlu0 %1912
        %1914 = vrot.lane.b32.xlu0 %v1831, 12
        %v1915 = vpop.permute.xlu0 %1914
        %1918 = vrot.lane.b32.xlu0 %v1830, 26
        %v1919 = vpop.permute.xlu0 %1918
        %1920 = vrot.lane.b32.xlu0 %v1831, 26
        %v1921 = vpop.permute.xlu0 %1920
        %1924 = vrot.lane.b32.xlu0 %v1830, 40
        %v1925 = vpop.permute.xlu0 %1924
        %1926 = vrot.lane.b32.xlu0 %v1831, 40
        %v1927 = vpop.permute.xlu0 %1926
        %v1930 = vsel %vm1505, %v1907, %v1913
        %v1931 = vsel %vm1505, %v1909, %v1915
        %v1932 = vsel %vm374, %v1930, %v1919
        %v1933 = vsel %vm374, %v1931, %v1921
        %v1934 = vsel %vm1510, %v1932, %v1925
        %v1935 = vsel %vm1510, %v1933, %v1927
        %v1936 = vld [vmem:[%s3 + $0xb] sm:$0x1]
        %v1937 = vlaneseq
        %v1938 = vshrl.u32 %v1937, 7
        %v1939 = vsub.s32 0, %v1938
        %v1940 = vrot.slane %v1936, %v1939
        %v1941 = vmul.f32 %v1934, %v1940
        %v1942 = vmul.f32 %v1935, %v1940
        %v1943 = vadd.f32 %v1904, %v1941
        %v1944 = vadd.f32 %v1905, %v1942
        %v1945 = vld [vmem:[%s1455 + $0x1] sm:$0xff]
        %v1946 = vld [vmem:[%s1455 + $0x9] sm:$0x3f]
        %1949 = vrot.lane.b32.xlu0 %v1945, 14
        %v1950 = vpop.permute.xlu0 %1949
        %1951 = vrot.lane.b32.xlu0 %v1946, 14
        %v1952 = vpop.permute.xlu0 %1951
        %1955 = vrot.lane.b32.xlu0 %v1945, 28
        %v1956 = vpop.permute.xlu0 %1955
        %1957 = vrot.lane.b32.xlu0 %v1946, 28
        %v1958 = vpop.permute.xlu0 %1957
        %1961 = vrot.lane.b32.xlu0 %v1945, 42
        %v1962 = vpop.permute.xlu0 %1961
        %1963 = vrot.lane.b32.xlu0 %v1946, 42
        %v1964 = vpop.permute.xlu0 %1963
        %v1967 = vsel %vm1505, %v1945, %v1950
        %v1968 = vsel %vm1505, %v1946, %v1952
        %v1969 = vsel %vm374, %v1967, %v1956
        %v1970 = vsel %vm374, %v1968, %v1958
        %v1971 = vsel %vm1510, %v1969, %v1962
        %v1972 = vsel %vm1510, %v1970, %v1964
        %v1973 = vld [vmem:[%s3 + $0xc] sm:$0x1]
        %v1974 = vlaneseq
        %v1975 = vshrl.u32 %v1974, 7
        %v1976 = vsub.s32 0, %v1975
        %v1977 = vrot.slane %v1973, %v1976
        %v1978 = vmul.f32 %v1971, %v1977
        %v1979 = vmul.f32 %v1972, %v1977
        %v1980 = vadd.f32 %v1943, %v1978
        %v1981 = vadd.f32 %v1944, %v1979
        %1982 = vrot.lane.b32.xlu0 %v1945, 127
        %v1983 = vpop.permute.xlu0 %1982
        %1984 = vrot.lane.b32.xlu0 %v1946, 127
        %v1985 = vpop.permute.xlu0 %1984
        %1988 = vrot.lane.b32.xlu0 %v1945, 13
        %v1989 = vpop.permute.xlu0 %1988
        %1990 = vrot.lane.b32.xlu0 %v1946, 13
        %v1991 = vpop.permute.xlu0 %1990
        %1994 = vrot.lane.b32.xlu0 %v1945, 27
        %v1995 = vpop.permute.xlu0 %1994
        %1996 = vrot.lane.b32.xlu0 %v1946, 27
        %v1997 = vpop.permute.xlu0 %1996
        %2000 = vrot.lane.b32.xlu0 %v1945, 41
        %v2001 = vpop.permute.xlu0 %2000
        %2002 = vrot.lane.b32.xlu0 %v1946, 41
        %v2003 = vpop.permute.xlu0 %2002
        %v2006 = vsel %vm1505, %v1983, %v1989
        %v2007 = vsel %vm1505, %v1985, %v1991
        %v2008 = vsel %vm374, %v2006, %v1995
        %v2009 = vsel %vm374, %v2007, %v1997
        %v2010 = vsel %vm1510, %v2008, %v2001
        %v2011 = vsel %vm1510, %v2009, %v2003
        %v2012 = vld [vmem:[%s3 + $0xd] sm:$0x1]
        %v2013 = vlaneseq
        %v2014 = vshrl.u32 %v2013, 7
        %v2015 = vsub.s32 0, %v2014
        %v2016 = vrot.slane %v2012, %v2015
        %v2017 = vmul.f32 %v2010, %v2016
        %v2018 = vmul.f32 %v2011, %v2016
        %v2019 = vadd.f32 %v1980, %v2017
        %v2020 = vadd.f32 %v1981, %v2018
        %2021 = vrot.lane.b32.xlu0 %v1945, 126
        %v2022 = vpop.permute.xlu0 %2021
        %2023 = vrot.lane.b32.xlu0 %v1946, 126
        %v2024 = vpop.permute.xlu0 %2023
        %2027 = vrot.lane.b32.xlu0 %v1945, 12
        %v2028 = vpop.permute.xlu0 %2027
        %2029 = vrot.lane.b32.xlu0 %v1946, 12
        %v2030 = vpop.permute.xlu0 %2029
        %2033 = vrot.lane.b32.xlu0 %v1945, 26
        %v2034 = vpop.permute.xlu0 %2033
        %2035 = vrot.lane.b32.xlu0 %v1946, 26
        %v2036 = vpop.permute.xlu0 %2035
        %2039 = vrot.lane.b32.xlu0 %v1945, 40
        %v2040 = vpop.permute.xlu0 %2039
        %2041 = vrot.lane.b32.xlu0 %v1946, 40
        %v2042 = vpop.permute.xlu0 %2041
        %v2045 = vsel %vm1505, %v2022, %v2028
        %v2046 = vsel %vm1505, %v2024, %v2030
        %v2047 = vsel %vm374, %v2045, %v2034
        %v2048 = vsel %vm374, %v2046, %v2036
        %v2049 = vsel %vm1510, %v2047, %v2040
        %v2050 = vsel %vm1510, %v2048, %v2042
        %v2051 = vld [vmem:[%s3 + $0xe] sm:$0x1]
        %v2052 = vlaneseq
        %v2053 = vshrl.u32 %v2052, 7
        %v2054 = vsub.s32 0, %v2053
        %v2055 = vrot.slane %v2051, %v2054
        %v2056 = vmul.f32 %v2049, %v2055
        %v2057 = vmul.f32 %v2050, %v2055
        %v2058 = vadd.f32 %v2019, %v2056
        %v2059 = vadd.f32 %v2020, %v2057
        %v2060 = vld [vmem:[%s1455 + $0x2] sm:$0xff]
        %v2061 = vld [vmem:[%s1455 + $0xa] sm:$0x3f]
        %2064 = vrot.lane.b32.xlu0 %v2060, 14
        %v2065 = vpop.permute.xlu0 %2064
        %2066 = vrot.lane.b32.xlu0 %v2061, 14
        %v2067 = vpop.permute.xlu0 %2066
        %2070 = vrot.lane.b32.xlu0 %v2060, 28
        %v2071 = vpop.permute.xlu0 %2070
        %2072 = vrot.lane.b32.xlu0 %v2061, 28
        %v2073 = vpop.permute.xlu0 %2072
        %2076 = vrot.lane.b32.xlu0 %v2060, 42
        %v2077 = vpop.permute.xlu0 %2076
        %2078 = vrot.lane.b32.xlu0 %v2061, 42
        %v2079 = vpop.permute.xlu0 %2078
        %v2082 = vsel %vm1505, %v2060, %v2065
        %v2083 = vsel %vm1505, %v2061, %v2067
        %v2084 = vsel %vm374, %v2082, %v2071
        %v2085 = vsel %vm374, %v2083, %v2073
        %v2086 = vsel %vm1510, %v2084, %v2077
        %v2087 = vsel %vm1510, %v2085, %v2079
        %v2088 = vld [vmem:[%s3 + $0xf] sm:$0x1]
        %v2089 = vlaneseq
        %v2090 = vshrl.u32 %v2089, 7
        %v2091 = vsub.s32 0, %v2090
        %v2092 = vrot.slane %v2088, %v2091
        %v2093 = vmul.f32 %v2086, %v2092
        %v2094 = vmul.f32 %v2087, %v2092
        %v2095 = vadd.f32 %v2058, %v2093
        %v2096 = vadd.f32 %v2059, %v2094
        %2097 = vrot.lane.b32.xlu0 %v2060, 127
        %v2098 = vpop.permute.xlu0 %2097
        %2099 = vrot.lane.b32.xlu0 %v2061, 127
        %v2100 = vpop.permute.xlu0 %2099
        %2103 = vrot.lane.b32.xlu0 %v2060, 13
        %v2104 = vpop.permute.xlu0 %2103
        %2105 = vrot.lane.b32.xlu0 %v2061, 13
        %v2106 = vpop.permute.xlu0 %2105
        %2109 = vrot.lane.b32.xlu0 %v2060, 27
        %v2110 = vpop.permute.xlu0 %2109
        %2111 = vrot.lane.b32.xlu0 %v2061, 27
        %v2112 = vpop.permute.xlu0 %2111
        %2115 = vrot.lane.b32.xlu0 %v2060, 41
        %v2116 = vpop.permute.xlu0 %2115
        %2117 = vrot.lane.b32.xlu0 %v2061, 41
        %v2118 = vpop.permute.xlu0 %2117
        %v2121 = vsel %vm1505, %v2098, %v2104
        %v2122 = vsel %vm1505, %v2100, %v2106
        %v2123 = vsel %vm374, %v2121, %v2110
        %v2124 = vsel %vm374, %v2122, %v2112
        %v2125 = vsel %vm1510, %v2123, %v2116
        %v2126 = vsel %vm1510, %v2124, %v2118
        %v2127 = vld [vmem:[%s3 + $0x10] sm:$0x1]
        %v2128 = vlaneseq
        %v2129 = vshrl.u32 %v2128, 7
        %v2130 = vsub.s32 0, %v2129
        %v2131 = vrot.slane %v2127, %v2130
        %v2132 = vmul.f32 %v2125, %v2131
        %v2133 = vmul.f32 %v2126, %v2131
        %v2134 = vadd.f32 %v2095, %v2132
        %v2135 = vadd.f32 %v2096, %v2133
        %2136 = vrot.lane.b32.xlu0 %v2060, 126
        %v2137 = vpop.permute.xlu0 %2136
        %2138 = vrot.lane.b32.xlu0 %v2061, 126
        %v2139 = vpop.permute.xlu0 %2138
        %2142 = vrot.lane.b32.xlu0 %v2060, 12
        %v2143 = vpop.permute.xlu0 %2142
        %2144 = vrot.lane.b32.xlu0 %v2061, 12
        %v2145 = vpop.permute.xlu0 %2144
        %2148 = vrot.lane.b32.xlu0 %v2060, 26
        %v2149 = vpop.permute.xlu0 %2148
        %2150 = vrot.lane.b32.xlu0 %v2061, 26
        %v2151 = vpop.permute.xlu0 %2150
        %2154 = vrot.lane.b32.xlu0 %v2060, 40
        %v2155 = vpop.permute.xlu0 %2154
        %2156 = vrot.lane.b32.xlu0 %v2061, 40
        %v2157 = vpop.permute.xlu0 %2156
        %v2160 = vsel %vm1505, %v2137, %v2143
        %v2161 = vsel %vm1505, %v2139, %v2145
        %v2162 = vsel %vm374, %v2160, %v2149
        %v2163 = vsel %vm374, %v2161, %v2151
        %v2164 = vsel %vm1510, %v2162, %v2155
        %v2165 = vsel %vm1510, %v2163, %v2157
        %v2166 = vld [vmem:[%s3 + $0x11] sm:$0x1]
        %v2167 = vlaneseq
        %v2168 = vshrl.u32 %v2167, 7
        %v2169 = vsub.s32 0, %v2168
        %v2170 = vrot.slane %v2166, %v2169
        %v2171 = vmul.f32 %v2164, %v2170
        %v2172 = vmul.f32 %v2165, %v2170
        %v2173 = vadd.f32 %v2134, %v2171
        %v2174 = vadd.f32 %v2135, %v2172
        %v2175 = vld [vmem:[%s1464] sm:$0xff]
        %v2176 = vld [vmem:[%s1464 + $0x8] sm:$0x3f]
        %2179 = vrot.lane.b32.xlu0 %v2175, 14
        %v2180 = vpop.permute.xlu0 %2179
        %2181 = vrot.lane.b32.xlu0 %v2176, 14
        %v2182 = vpop.permute.xlu0 %2181
        %2185 = vrot.lane.b32.xlu0 %v2175, 28
        %v2186 = vpop.permute.xlu0 %2185
        %2187 = vrot.lane.b32.xlu0 %v2176, 28
        %v2188 = vpop.permute.xlu0 %2187
        %2191 = vrot.lane.b32.xlu0 %v2175, 42
        %v2192 = vpop.permute.xlu0 %2191
        %2193 = vrot.lane.b32.xlu0 %v2176, 42
        %v2194 = vpop.permute.xlu0 %2193
        %v2197 = vsel %vm1505, %v2175, %v2180
        %v2198 = vsel %vm1505, %v2176, %v2182
        %v2199 = vsel %vm374, %v2197, %v2186
        %v2200 = vsel %vm374, %v2198, %v2188
        %v2201 = vsel %vm1510, %v2199, %v2192
        %v2202 = vsel %vm1510, %v2200, %v2194
        %v2203 = vld [vmem:[%s3 + $0x12] sm:$0x1]
        %v2204 = vlaneseq
        %v2205 = vshrl.u32 %v2204, 7
        %v2206 = vsub.s32 0, %v2205
        %v2207 = vrot.slane %v2203, %v2206
        %v2208 = vmul.f32 %v2201, %v2207
        %v2209 = vmul.f32 %v2202, %v2207
        %v2210 = vadd.f32 %v2173, %v2208
        %v2211 = vadd.f32 %v2174, %v2209
        %2212 = vrot.lane.b32.xlu0 %v2175, 127
        %v2213 = vpop.permute.xlu0 %2212
        %2214 = vrot.lane.b32.xlu0 %v2176, 127
        %v2215 = vpop.permute.xlu0 %2214
        %2218 = vrot.lane.b32.xlu0 %v2175, 13
        %v2219 = vpop.permute.xlu0 %2218
        %2220 = vrot.lane.b32.xlu0 %v2176, 13
        %v2221 = vpop.permute.xlu0 %2220
        %2224 = vrot.lane.b32.xlu0 %v2175, 27
        %v2225 = vpop.permute.xlu0 %2224
        %2226 = vrot.lane.b32.xlu0 %v2176, 27
        %v2227 = vpop.permute.xlu0 %2226
        %2230 = vrot.lane.b32.xlu0 %v2175, 41
        %v2231 = vpop.permute.xlu0 %2230
        %2232 = vrot.lane.b32.xlu0 %v2176, 41
        %v2233 = vpop.permute.xlu0 %2232
        %v2236 = vsel %vm1505, %v2213, %v2219
        %v2237 = vsel %vm1505, %v2215, %v2221
        %v2238 = vsel %vm374, %v2236, %v2225
        %v2239 = vsel %vm374, %v2237, %v2227
        %v2240 = vsel %vm1510, %v2238, %v2231
        %v2241 = vsel %vm1510, %v2239, %v2233
        %v2242 = vld [vmem:[%s3 + $0x13] sm:$0x1]
        %v2243 = vlaneseq
        %v2244 = vshrl.u32 %v2243, 7
        %v2245 = vsub.s32 0, %v2244
        %v2246 = vrot.slane %v2242, %v2245
        %v2247 = vmul.f32 %v2240, %v2246
        %v2248 = vmul.f32 %v2241, %v2246
        %v2249 = vadd.f32 %v2210, %v2247
        %v2250 = vadd.f32 %v2211, %v2248
        %2251 = vrot.lane.b32.xlu0 %v2175, 126
        %v2252 = vpop.permute.xlu0 %2251
        %2253 = vrot.lane.b32.xlu0 %v2176, 126
        %v2254 = vpop.permute.xlu0 %2253
        %2257 = vrot.lane.b32.xlu0 %v2175, 12
        %v2258 = vpop.permute.xlu0 %2257
        %2259 = vrot.lane.b32.xlu0 %v2176, 12
        %v2260 = vpop.permute.xlu0 %2259
        %2263 = vrot.lane.b32.xlu0 %v2175, 26
        %v2264 = vpop.permute.xlu0 %2263
        %2265 = vrot.lane.b32.xlu0 %v2176, 26
        %v2266 = vpop.permute.xlu0 %2265
        %2269 = vrot.lane.b32.xlu0 %v2175, 40
        %v2270 = vpop.permute.xlu0 %2269
        %2271 = vrot.lane.b32.xlu0 %v2176, 40
        %v2272 = vpop.permute.xlu0 %2271
        %v2275 = vsel %vm1505, %v2252, %v2258
        %v2276 = vsel %vm1505, %v2254, %v2260
        %v2277 = vsel %vm374, %v2275, %v2264
        %v2278 = vsel %vm374, %v2276, %v2266
        %v2279 = vsel %vm1510, %v2277, %v2270
        %v2280 = vsel %vm1510, %v2278, %v2272
        %v2281 = vld [vmem:[%s3 + $0x14] sm:$0x1]
        %v2282 = vlaneseq
        %v2283 = vshrl.u32 %v2282, 7
        %v2284 = vsub.s32 0, %v2283
        %v2285 = vrot.slane %v2281, %v2284
        %v2286 = vmul.f32 %v2279, %v2285
        %v2287 = vmul.f32 %v2280, %v2285
        %v2288 = vadd.f32 %v2249, %v2286
        %v2289 = vadd.f32 %v2250, %v2287
        %v2290 = vld [vmem:[%s1464 + $0x1] sm:$0xff]
        %v2291 = vld [vmem:[%s1464 + $0x9] sm:$0x3f]
        %2294 = vrot.lane.b32.xlu0 %v2290, 14
        %v2295 = vpop.permute.xlu0 %2294
        %2296 = vrot.lane.b32.xlu0 %v2291, 14
        %v2297 = vpop.permute.xlu0 %2296
        %2300 = vrot.lane.b32.xlu0 %v2290, 28
        %v2301 = vpop.permute.xlu0 %2300
        %2302 = vrot.lane.b32.xlu0 %v2291, 28
        %v2303 = vpop.permute.xlu0 %2302
        %2306 = vrot.lane.b32.xlu0 %v2290, 42
        %v2307 = vpop.permute.xlu0 %2306
        %2308 = vrot.lane.b32.xlu0 %v2291, 42
        %v2309 = vpop.permute.xlu0 %2308
        %v2312 = vsel %vm1505, %v2290, %v2295
        %v2313 = vsel %vm1505, %v2291, %v2297
        %v2314 = vsel %vm374, %v2312, %v2301
        %v2315 = vsel %vm374, %v2313, %v2303
        %v2316 = vsel %vm1510, %v2314, %v2307
        %v2317 = vsel %vm1510, %v2315, %v2309
        %v2318 = vld [vmem:[%s3 + $0x15] sm:$0x1]
        %v2319 = vlaneseq
        %v2320 = vshrl.u32 %v2319, 7
        %v2321 = vsub.s32 0, %v2320
        %v2322 = vrot.slane %v2318, %v2321
        %v2323 = vmul.f32 %v2316, %v2322
        %v2324 = vmul.f32 %v2317, %v2322
        %v2325 = vadd.f32 %v2288, %v2323
        %v2326 = vadd.f32 %v2289, %v2324
        %2327 = vrot.lane.b32.xlu0 %v2290, 127
        %v2328 = vpop.permute.xlu0 %2327
        %2329 = vrot.lane.b32.xlu0 %v2291, 127
        %v2330 = vpop.permute.xlu0 %2329
        %2333 = vrot.lane.b32.xlu0 %v2290, 13
        %v2334 = vpop.permute.xlu0 %2333
        %2335 = vrot.lane.b32.xlu0 %v2291, 13
        %v2336 = vpop.permute.xlu0 %2335
        %2339 = vrot.lane.b32.xlu0 %v2290, 27
        %v2340 = vpop.permute.xlu0 %2339
        %2341 = vrot.lane.b32.xlu0 %v2291, 27
        %v2342 = vpop.permute.xlu0 %2341
        %2345 = vrot.lane.b32.xlu0 %v2290, 41
        %v2346 = vpop.permute.xlu0 %2345
        %2347 = vrot.lane.b32.xlu0 %v2291, 41
        %v2348 = vpop.permute.xlu0 %2347
        %v2351 = vsel %vm1505, %v2328, %v2334
        %v2352 = vsel %vm1505, %v2330, %v2336
        %v2353 = vsel %vm374, %v2351, %v2340
        %v2354 = vsel %vm374, %v2352, %v2342
        %v2355 = vsel %vm1510, %v2353, %v2346
        %v2356 = vsel %vm1510, %v2354, %v2348
        %v2357 = vld [vmem:[%s3 + $0x16] sm:$0x1]
        %v2358 = vlaneseq
        %v2359 = vshrl.u32 %v2358, 7
        %v2360 = vsub.s32 0, %v2359
        %v2361 = vrot.slane %v2357, %v2360
        %v2362 = vmul.f32 %v2355, %v2361
        %v2363 = vmul.f32 %v2356, %v2361
        %v2364 = vadd.f32 %v2325, %v2362
        %v2365 = vadd.f32 %v2326, %v2363
        %2366 = vrot.lane.b32.xlu0 %v2290, 126
        %v2367 = vpop.permute.xlu0 %2366
        %2368 = vrot.lane.b32.xlu0 %v2291, 126
        %v2369 = vpop.permute.xlu0 %2368
        %2372 = vrot.lane.b32.xlu0 %v2290, 12
        %v2373 = vpop.permute.xlu0 %2372
        %2374 = vrot.lane.b32.xlu0 %v2291, 12
        %v2375 = vpop.permute.xlu0 %2374
        %2378 = vrot.lane.b32.xlu0 %v2290, 26
        %v2379 = vpop.permute.xlu0 %2378
        %2380 = vrot.lane.b32.xlu0 %v2291, 26
        %v2381 = vpop.permute.xlu0 %2380
        %2384 = vrot.lane.b32.xlu0 %v2290, 40
        %v2385 = vpop.permute.xlu0 %2384
        %2386 = vrot.lane.b32.xlu0 %v2291, 40
        %v2387 = vpop.permute.xlu0 %2386
        %v2390 = vsel %vm1505, %v2367, %v2373
        %v2391 = vsel %vm1505, %v2369, %v2375
        %v2392 = vsel %vm374, %v2390, %v2379
        %v2393 = vsel %vm374, %v2391, %v2381
        %v2394 = vsel %vm1510, %v2392, %v2385
        %v2395 = vsel %vm1510, %v2393, %v2387
        %v2396 = vld [vmem:[%s3 + $0x17] sm:$0x1]
        %v2397 = vlaneseq
        %v2398 = vshrl.u32 %v2397, 7
        %v2399 = vsub.s32 0, %v2398
        %v2400 = vrot.slane %v2396, %v2399
        %v2401 = vmul.f32 %v2394, %v2400
        %v2402 = vmul.f32 %v2395, %v2400
        %v2403 = vadd.f32 %v2364, %v2401
        %v2404 = vadd.f32 %v2365, %v2402
        %v2405 = vld [vmem:[%s1464 + $0x2] sm:$0xff]
        %v2406 = vld [vmem:[%s1464 + $0xa] sm:$0x3f]
        %2409 = vrot.lane.b32.xlu0 %v2405, 14
        %v2410 = vpop.permute.xlu0 %2409
        %2411 = vrot.lane.b32.xlu0 %v2406, 14
        %v2412 = vpop.permute.xlu0 %2411
        %2415 = vrot.lane.b32.xlu0 %v2405, 28
        %v2416 = vpop.permute.xlu0 %2415
        %2417 = vrot.lane.b32.xlu0 %v2406, 28
        %v2418 = vpop.permute.xlu0 %2417
        %2421 = vrot.lane.b32.xlu0 %v2405, 42
        %v2422 = vpop.permute.xlu0 %2421
        %2423 = vrot.lane.b32.xlu0 %v2406, 42
        %v2424 = vpop.permute.xlu0 %2423
        %v2427 = vsel %vm1505, %v2405, %v2410
        %v2428 = vsel %vm1505, %v2406, %v2412
        %v2429 = vsel %vm374, %v2427, %v2416
        %v2430 = vsel %vm374, %v2428, %v2418
        %v2431 = vsel %vm1510, %v2429, %v2422
        %v2432 = vsel %vm1510, %v2430, %v2424
        %v2433 = vld [vmem:[%s3 + $0x18] sm:$0x1]
        %v2434 = vlaneseq
        %v2435 = vshrl.u32 %v2434, 7
        %v2436 = vsub.s32 0, %v2435
        %v2437 = vrot.slane %v2433, %v2436
        %v2438 = vmul.f32 %v2431, %v2437
        %v2439 = vmul.f32 %v2432, %v2437
        %v2440 = vadd.f32 %v2403, %v2438
        %v2441 = vadd.f32 %v2404, %v2439
        %2442 = vrot.lane.b32.xlu0 %v2405, 127
        %v2443 = vpop.permute.xlu0 %2442
        %2444 = vrot.lane.b32.xlu0 %v2406, 127
        %v2445 = vpop.permute.xlu0 %2444
        %2448 = vrot.lane.b32.xlu0 %v2405, 13
        %v2449 = vpop.permute.xlu0 %2448
        %2450 = vrot.lane.b32.xlu0 %v2406, 13
        %v2451 = vpop.permute.xlu0 %2450
        %2454 = vrot.lane.b32.xlu0 %v2405, 27
        %v2455 = vpop.permute.xlu0 %2454
        %2456 = vrot.lane.b32.xlu0 %v2406, 27
        %v2457 = vpop.permute.xlu0 %2456
        %2460 = vrot.lane.b32.xlu0 %v2405, 41
        %v2461 = vpop.permute.xlu0 %2460
        %2462 = vrot.lane.b32.xlu0 %v2406, 41
        %v2463 = vpop.permute.xlu0 %2462
        %v2466 = vsel %vm1505, %v2443, %v2449
        %v2467 = vsel %vm1505, %v2445, %v2451
        %v2468 = vsel %vm374, %v2466, %v2455
        %v2469 = vsel %vm374, %v2467, %v2457
        %v2470 = vsel %vm1510, %v2468, %v2461
        %v2471 = vsel %vm1510, %v2469, %v2463
        %v2472 = vld [vmem:[%s3 + $0x19] sm:$0x1]
        %v2473 = vlaneseq
        %v2474 = vshrl.u32 %v2473, 7
        %v2475 = vsub.s32 0, %v2474
        %v2476 = vrot.slane %v2472, %v2475
        %v2477 = vmul.f32 %v2470, %v2476
        %v2478 = vmul.f32 %v2471, %v2476
        %v2479 = vadd.f32 %v2440, %v2477
        %v2480 = vadd.f32 %v2441, %v2478
        %2481 = vrot.lane.b32.xlu0 %v2405, 126
        %v2482 = vpop.permute.xlu0 %2481
        %2483 = vrot.lane.b32.xlu0 %v2406, 126
        %v2484 = vpop.permute.xlu0 %2483
        %2487 = vrot.lane.b32.xlu0 %v2405, 12
        %v2488 = vpop.permute.xlu0 %2487
        %2489 = vrot.lane.b32.xlu0 %v2406, 12
        %v2490 = vpop.permute.xlu0 %2489
        %2493 = vrot.lane.b32.xlu0 %v2405, 26
        %v2494 = vpop.permute.xlu0 %2493
        %2495 = vrot.lane.b32.xlu0 %v2406, 26
        %v2496 = vpop.permute.xlu0 %2495
        %2499 = vrot.lane.b32.xlu0 %v2405, 40
        %v2500 = vpop.permute.xlu0 %2499
        %2501 = vrot.lane.b32.xlu0 %v2406, 40
        %v2502 = vpop.permute.xlu0 %2501
        %v2505 = vsel %vm1505, %v2482, %v2488
        %v2506 = vsel %vm1505, %v2484, %v2490
        %v2507 = vsel %vm374, %v2505, %v2494
        %v2508 = vsel %vm374, %v2506, %v2496
        %v2509 = vsel %vm1510, %v2507, %v2500
        %v2510 = vsel %vm1510, %v2508, %v2502
        %v2511 = vld [vmem:[%s3 + $0x1a] sm:$0x1]
        %v2512 = vlaneseq
        %v2513 = vshrl.u32 %v2512, 7
        %v2514 = vsub.s32 0, %v2513
        %v2515 = vrot.slane %v2511, %v2514
        %v2516 = vmul.f32 %v2509, %v2515
        %v2517 = vmul.f32 %v2510, %v2515
        %v2518 = vadd.f32 %v2479, %v2516
        %v2519 = vadd.f32 %v2480, %v2517
        %v2520 = vld [vmem:[%s1473] sm:$0xff]
        %v2521 = vld [vmem:[%s1473 + $0x8] sm:$0x3f]
        %2524 = vrot.lane.b32.xlu0 %v2520, 14
        %v2525 = vpop.permute.xlu0 %2524
        %2526 = vrot.lane.b32.xlu0 %v2521, 14
        %v2527 = vpop.permute.xlu0 %2526
        %2530 = vrot.lane.b32.xlu0 %v2520, 28
        %v2531 = vpop.permute.xlu0 %2530
        %2532 = vrot.lane.b32.xlu0 %v2521, 28
        %v2533 = vpop.permute.xlu0 %2532
        %2536 = vrot.lane.b32.xlu0 %v2520, 42
        %v2537 = vpop.permute.xlu0 %2536
        %2538 = vrot.lane.b32.xlu0 %v2521, 42
        %v2539 = vpop.permute.xlu0 %2538
        %v2542 = vsel %vm1505, %v2520, %v2525
        %v2543 = vsel %vm1505, %v2521, %v2527
        %v2544 = vsel %vm374, %v2542, %v2531
        %v2545 = vsel %vm374, %v2543, %v2533
        %v2546 = vsel %vm1510, %v2544, %v2537
        %v2547 = vsel %vm1510, %v2545, %v2539
        %v2548 = vld [vmem:[%s3 + $0x1b] sm:$0x1]
        %v2549 = vlaneseq
        %v2550 = vshrl.u32 %v2549, 7
        %v2551 = vsub.s32 0, %v2550
        %v2552 = vrot.slane %v2548, %v2551
        %v2553 = vmul.f32 %v2546, %v2552
        %v2554 = vmul.f32 %v2547, %v2552
        %v2555 = vadd.f32 %v2518, %v2553
        %v2556 = vadd.f32 %v2519, %v2554
        %2557 = vrot.lane.b32.xlu0 %v2520, 127
        %v2558 = vpop.permute.xlu0 %2557
        %2559 = vrot.lane.b32.xlu0 %v2521, 127
        %v2560 = vpop.permute.xlu0 %2559
        %2563 = vrot.lane.b32.xlu0 %v2520, 13
        %v2564 = vpop.permute.xlu0 %2563
        %2565 = vrot.lane.b32.xlu0 %v2521, 13
        %v2566 = vpop.permute.xlu0 %2565
        %2569 = vrot.lane.b32.xlu0 %v2520, 27
        %v2570 = vpop.permute.xlu0 %2569
        %2571 = vrot.lane.b32.xlu0 %v2521, 27
        %v2572 = vpop.permute.xlu0 %2571
        %2575 = vrot.lane.b32.xlu0 %v2520, 41
        %v2576 = vpop.permute.xlu0 %2575
        %2577 = vrot.lane.b32.xlu0 %v2521, 41
        %v2578 = vpop.permute.xlu0 %2577
        %v2581 = vsel %vm1505, %v2558, %v2564
        %v2582 = vsel %vm1505, %v2560, %v2566
        %v2583 = vsel %vm374, %v2581, %v2570
        %v2584 = vsel %vm374, %v2582, %v2572
        %v2585 = vsel %vm1510, %v2583, %v2576
        %v2586 = vsel %vm1510, %v2584, %v2578
        %v2587 = vld [vmem:[%s3 + $0x1c] sm:$0x1]
        %v2588 = vlaneseq
        %v2589 = vshrl.u32 %v2588, 7
        %v2590 = vsub.s32 0, %v2589
        %v2591 = vrot.slane %v2587, %v2590
        %v2592 = vmul.f32 %v2585, %v2591
        %v2593 = vmul.f32 %v2586, %v2591
        %v2594 = vadd.f32 %v2555, %v2592
        %v2595 = vadd.f32 %v2556, %v2593
        %2596 = vrot.lane.b32.xlu0 %v2520, 126
        %v2597 = vpop.permute.xlu0 %2596
        %2598 = vrot.lane.b32.xlu0 %v2521, 126
        %v2599 = vpop.permute.xlu0 %2598
        %2602 = vrot.lane.b32.xlu0 %v2520, 12
        %v2603 = vpop.permute.xlu0 %2602
        %2604 = vrot.lane.b32.xlu0 %v2521, 12
        %v2605 = vpop.permute.xlu0 %2604
        %2608 = vrot.lane.b32.xlu0 %v2520, 26
        %v2609 = vpop.permute.xlu0 %2608
        %2610 = vrot.lane.b32.xlu0 %v2521, 26
        %v2611 = vpop.permute.xlu0 %2610
        %2614 = vrot.lane.b32.xlu0 %v2520, 40
        %v2615 = vpop.permute.xlu0 %2614
        %2616 = vrot.lane.b32.xlu0 %v2521, 40
        %v2617 = vpop.permute.xlu0 %2616
        %v2620 = vsel %vm1505, %v2597, %v2603
        %v2621 = vsel %vm1505, %v2599, %v2605
        %v2622 = vsel %vm374, %v2620, %v2609
        %v2623 = vsel %vm374, %v2621, %v2611
        %v2624 = vsel %vm1510, %v2622, %v2615
        %v2625 = vsel %vm1510, %v2623, %v2617
        %v2626 = vld [vmem:[%s3 + $0x1d] sm:$0x1]
        %v2627 = vlaneseq
        %v2628 = vshrl.u32 %v2627, 7
        %v2629 = vsub.s32 0, %v2628
        %v2630 = vrot.slane %v2626, %v2629
        %v2631 = vmul.f32 %v2624, %v2630
        %v2632 = vmul.f32 %v2625, %v2630
        %v2633 = vadd.f32 %v2594, %v2631
        %v2634 = vadd.f32 %v2595, %v2632
        %v2635 = vld [vmem:[%s1473 + $0x1] sm:$0xff]
        %v2636 = vld [vmem:[%s1473 + $0x9] sm:$0x3f]
        %2639 = vrot.lane.b32.xlu0 %v2635, 14
        %v2640 = vpop.permute.xlu0 %2639
        %2641 = vrot.lane.b32.xlu0 %v2636, 14
        %v2642 = vpop.permute.xlu0 %2641
        %2645 = vrot.lane.b32.xlu0 %v2635, 28
        %v2646 = vpop.permute.xlu0 %2645
        %2647 = vrot.lane.b32.xlu0 %v2636, 28
        %v2648 = vpop.permute.xlu0 %2647
        %2651 = vrot.lane.b32.xlu0 %v2635, 42
        %v2652 = vpop.permute.xlu0 %2651
        %2653 = vrot.lane.b32.xlu0 %v2636, 42
        %v2654 = vpop.permute.xlu0 %2653
        %v2657 = vsel %vm1505, %v2635, %v2640
        %v2658 = vsel %vm1505, %v2636, %v2642
        %v2659 = vsel %vm374, %v2657, %v2646
        %v2660 = vsel %vm374, %v2658, %v2648
        %v2661 = vsel %vm1510, %v2659, %v2652
        %v2662 = vsel %vm1510, %v2660, %v2654
        %v2663 = vld [vmem:[%s3 + $0x1e] sm:$0x1]
        %v2664 = vlaneseq
        %v2665 = vshrl.u32 %v2664, 7
        %v2666 = vsub.s32 0, %v2665
        %v2667 = vrot.slane %v2663, %v2666
        %v2668 = vmul.f32 %v2661, %v2667
        %v2669 = vmul.f32 %v2662, %v2667
        %v2670 = vadd.f32 %v2633, %v2668
        %v2671 = vadd.f32 %v2634, %v2669
        %2672 = vrot.lane.b32.xlu0 %v2635, 127
        %v2673 = vpop.permute.xlu0 %2672
        %2674 = vrot.lane.b32.xlu0 %v2636, 127
        %v2675 = vpop.permute.xlu0 %2674
        %2678 = vrot.lane.b32.xlu0 %v2635, 13
        %v2679 = vpop.permute.xlu0 %2678
        %2680 = vrot.lane.b32.xlu0 %v2636, 13
        %v2681 = vpop.permute.xlu0 %2680
        %2684 = vrot.lane.b32.xlu0 %v2635, 27
        %v2685 = vpop.permute.xlu0 %2684
        %2686 = vrot.lane.b32.xlu0 %v2636, 27
        %v2687 = vpop.permute.xlu0 %2686
        %2690 = vrot.lane.b32.xlu0 %v2635, 41
        %v2691 = vpop.permute.xlu0 %2690
        %2692 = vrot.lane.b32.xlu0 %v2636, 41
        %v2693 = vpop.permute.xlu0 %2692
        %v2696 = vsel %vm1505, %v2673, %v2679
        %v2697 = vsel %vm1505, %v2675, %v2681
        %v2698 = vsel %vm374, %v2696, %v2685
        %v2699 = vsel %vm374, %v2697, %v2687
        %v2700 = vsel %vm1510, %v2698, %v2691
        %v2701 = vsel %vm1510, %v2699, %v2693
        %v2702 = vld [vmem:[%s3 + $0x1f] sm:$0x1]
        %v2703 = vlaneseq
        %v2704 = vshrl.u32 %v2703, 7
        %v2705 = vsub.s32 0, %v2704
        %v2706 = vrot.slane %v2702, %v2705
        %v2707 = vmul.f32 %v2700, %v2706
        %v2708 = vmul.f32 %v2701, %v2706
        %v2709 = vadd.f32 %v2670, %v2707
        %v2710 = vadd.f32 %v2671, %v2708
        %2711 = vrot.lane.b32.xlu0 %v2635, 126
        %v2712 = vpop.permute.xlu0 %2711
        %2713 = vrot.lane.b32.xlu0 %v2636, 126
        %v2714 = vpop.permute.xlu0 %2713
        %2717 = vrot.lane.b32.xlu0 %v2635, 12
        %v2718 = vpop.permute.xlu0 %2717
        %2719 = vrot.lane.b32.xlu0 %v2636, 12
        %v2720 = vpop.permute.xlu0 %2719
        %2723 = vrot.lane.b32.xlu0 %v2635, 26
        %v2724 = vpop.permute.xlu0 %2723
        %2725 = vrot.lane.b32.xlu0 %v2636, 26
        %v2726 = vpop.permute.xlu0 %2725
        %2729 = vrot.lane.b32.xlu0 %v2635, 40
        %v2730 = vpop.permute.xlu0 %2729
        %2731 = vrot.lane.b32.xlu0 %v2636, 40
        %v2732 = vpop.permute.xlu0 %2731
        %v2735 = vsel %vm1505, %v2712, %v2718
        %v2736 = vsel %vm1505, %v2714, %v2720
        %v2737 = vsel %vm374, %v2735, %v2724
        %v2738 = vsel %vm374, %v2736, %v2726
        %v2739 = vsel %vm1510, %v2737, %v2730
        %v2740 = vsel %vm1510, %v2738, %v2732
        %v2741 = vld [vmem:[%s3 + $0x20] sm:$0x1]
        %v2742 = vlaneseq
        %v2743 = vshrl.u32 %v2742, 7
        %v2744 = vsub.s32 0, %v2743
        %v2745 = vrot.slane %v2741, %v2744
        %v2746 = vmul.f32 %v2739, %v2745
        %v2747 = vmul.f32 %v2740, %v2745
        %v2748 = vadd.f32 %v2709, %v2746
        %v2749 = vadd.f32 %v2710, %v2747
        %v2750 = vld [vmem:[%s1473 + $0x2] sm:$0xff]
        %v2751 = vld [vmem:[%s1473 + $0xa] sm:$0x3f]
        %2754 = vrot.lane.b32.xlu0 %v2750, 14
        %v2755 = vpop.permute.xlu0 %2754
        %2756 = vrot.lane.b32.xlu0 %v2751, 14
        %v2757 = vpop.permute.xlu0 %2756
        %2760 = vrot.lane.b32.xlu0 %v2750, 28
        %v2761 = vpop.permute.xlu0 %2760
        %2762 = vrot.lane.b32.xlu0 %v2751, 28
        %v2763 = vpop.permute.xlu0 %2762
        %2766 = vrot.lane.b32.xlu0 %v2750, 42
        %v2767 = vpop.permute.xlu0 %2766
        %2768 = vrot.lane.b32.xlu0 %v2751, 42
        %v2769 = vpop.permute.xlu0 %2768
        %v2772 = vsel %vm1505, %v2750, %v2755
        %v2773 = vsel %vm1505, %v2751, %v2757
        %v2774 = vsel %vm374, %v2772, %v2761
        %v2775 = vsel %vm374, %v2773, %v2763
        %v2776 = vsel %vm1510, %v2774, %v2767
        %v2777 = vsel %vm1510, %v2775, %v2769
        %v2778 = vld [vmem:[%s3 + $0x21] sm:$0x1]
        %v2779 = vlaneseq
        %v2780 = vshrl.u32 %v2779, 7
        %v2781 = vsub.s32 0, %v2780
        %v2782 = vrot.slane %v2778, %v2781
        %v2783 = vmul.f32 %v2776, %v2782
        %v2784 = vmul.f32 %v2777, %v2782
        %v2785 = vadd.f32 %v2748, %v2783
        %v2786 = vadd.f32 %v2749, %v2784
        %2787 = vrot.lane.b32.xlu0 %v2750, 127
        %v2788 = vpop.permute.xlu0 %2787
        %2789 = vrot.lane.b32.xlu0 %v2751, 127
        %v2790 = vpop.permute.xlu0 %2789
        %2793 = vrot.lane.b32.xlu0 %v2750, 13
        %v2794 = vpop.permute.xlu0 %2793
        %2795 = vrot.lane.b32.xlu0 %v2751, 13
        %v2796 = vpop.permute.xlu0 %2795
        %2799 = vrot.lane.b32.xlu0 %v2750, 27
        %v2800 = vpop.permute.xlu0 %2799
        %2801 = vrot.lane.b32.xlu0 %v2751, 27
        %v2802 = vpop.permute.xlu0 %2801
        %2805 = vrot.lane.b32.xlu0 %v2750, 41
        %v2806 = vpop.permute.xlu0 %2805
        %2807 = vrot.lane.b32.xlu0 %v2751, 41
        %v2808 = vpop.permute.xlu0 %2807
        %v2811 = vsel %vm1505, %v2788, %v2794
        %v2812 = vsel %vm1505, %v2790, %v2796
        %v2813 = vsel %vm374, %v2811, %v2800
        %v2814 = vsel %vm374, %v2812, %v2802
        %v2815 = vsel %vm1510, %v2813, %v2806
        %v2816 = vsel %vm1510, %v2814, %v2808
        %v2817 = vld [vmem:[%s3 + $0x22] sm:$0x1]
        %v2818 = vlaneseq
        %v2819 = vshrl.u32 %v2818, 7
        %v2820 = vsub.s32 0, %v2819
        %v2821 = vrot.slane %v2817, %v2820
        %v2822 = vmul.f32 %v2815, %v2821
        %v2823 = vmul.f32 %v2816, %v2821
        %v2824 = vadd.f32 %v2785, %v2822
        %v2825 = vadd.f32 %v2786, %v2823
        %2826 = vrot.lane.b32.xlu0 %v2750, 126
        %v2827 = vpop.permute.xlu0 %2826
        %2828 = vrot.lane.b32.xlu0 %v2751, 126
        %v2829 = vpop.permute.xlu0 %2828
        %2832 = vrot.lane.b32.xlu0 %v2750, 12
        %v2833 = vpop.permute.xlu0 %2832
        %2834 = vrot.lane.b32.xlu0 %v2751, 12
        %v2835 = vpop.permute.xlu0 %2834
        %2838 = vrot.lane.b32.xlu0 %v2750, 26
        %v2839 = vpop.permute.xlu0 %2838
        %2840 = vrot.lane.b32.xlu0 %v2751, 26
        %v2841 = vpop.permute.xlu0 %2840
        %2844 = vrot.lane.b32.xlu0 %v2750, 40
        %v2845 = vpop.permute.xlu0 %2844
        %2846 = vrot.lane.b32.xlu0 %v2751, 40
        %v2847 = vpop.permute.xlu0 %2846
        %v2850 = vsel %vm1505, %v2827, %v2833
        %v2851 = vsel %vm1505, %v2829, %v2835
        %v2852 = vsel %vm374, %v2850, %v2839
        %v2853 = vsel %vm374, %v2851, %v2841
        %v2854 = vsel %vm1510, %v2852, %v2845
        %v2855 = vsel %vm1510, %v2853, %v2847
        %v2856 = vld [vmem:[%s3 + $0x23] sm:$0x1]
        %v2857 = vlaneseq
        %v2858 = vshrl.u32 %v2857, 7
        %v2859 = vsub.s32 0, %v2858
        %v2860 = vrot.slane %v2856, %v2859
        %v2861 = vmul.f32 %v2854, %v2860
        %v2862 = vmul.f32 %v2855, %v2860
        %v2863 = vadd.f32 %v2824, %v2861
        %v2864 = vadd.f32 %v2825, %v2862
        %v2865 = vmax.f32 %v2863, 0.0
        %v2866 = vmax.f32 %v2864, 0.0
        %v2867 = vsel %vm1505, %v993, 0
        %vm2869 = vcmask 1045504
        %v2871 = vsel %vm2869, %v2866, 0
        %2873 = vmatprep.subr.mxu0 0.0
        %2874 = vmatpush1.msra.mxu0 %v2865
        %2875 = vmatprep.subr.mxu0 0.0
        %2876 = vmatpush1.msra.mxu0 %v2871
        %2877 = vmatprep.subr.mxu0 0.0
        %2878 = vmatpush1.msra.mxu0 0.0
        %2879 = vmatprep.subr.mxu0 0.0
        %2880 = vmatpush1.msra.mxu0 0.0
        %2881 = vmatprep.subr.mxu0 0.0
        %2882 = vmatpush1.msra.mxu0 0.0
        %2883 = vmatprep.subr.mxu0 0.0
        %2884 = vmatpush1.msra.mxu0 0.0
        %2885 = vmatprep.subr.mxu0 0.0
        %2886 = vmatpush1.msra.mxu0 0.0
        %2887 = vmatprep.subr.mxu0 0.0
        %2888 = vmatpush1.msra.mxu0 0.0
        %2889 = vmatprep.subr.mxu0 0.0
        %2890 = vmatpush1.msra.mxu0 0.0
        %2891 = vmatprep.subr.mxu0 0.0
        %2892 = vmatpush1.msra.mxu0 0.0
        %2893 = vmatprep.subr.mxu0 0.0
        %2894 = vmatpush1.msra.mxu0 0.0
        %2895 = vmatprep.subr.mxu0 0.0
        %2896 = vmatpush1.msra.mxu0 0.0
        %2897 = vmatprep.subr.mxu0 0.0
        %2898 = vmatpush1.msra.mxu0 0.0
        %2899 = vmatprep.subr.mxu0 0.0
        %2900 = vmatpush1.msra.mxu0 0.0
        %2901 = vmatprep.subr.mxu0 0.0
        %2902 = vmatpush1.msra.mxu0 0.0
        %2903 = vmatprep.subr.mxu0 0.0
        %2904 = vmatpush1.msra.mxu0 0.0
        %2905 = vmatprep.subr.mxu0 0.0
        %2906 = vmatpush1.msra.mxu0 0.0
        %2907 = vmatprep.subr.mxu0 0.0
        %2908 = vmatpush1.msra.mxu0 0.0
        %2909 = vmatprep.subr.mxu0 0.0
        %2910 = vmatpush1.msra.mxu0 0.0
        %2911 = vmatprep.subr.mxu0 0.0
        %2912 = vmatpush1.msra.mxu0 0.0
        %2913 = vmatprep.subr.mxu0 0.0
        %2914 = vmatpush1.msra.mxu0 0.0
        %2915 = vmatprep.subr.mxu0 0.0
        %2916 = vmatpush1.msra.mxu0 0.0
        %2917 = vmatprep.subr.mxu0 0.0
        %2918 = vmatpush1.msra.mxu0 0.0
        %2919 = vmatprep.subr.mxu0 0.0
        %2920 = vmatpush1.msra.mxu0 0.0
        %2921 = vmatprep.subr.mxu0 0.0
        %2922 = vmatpush1.msra.mxu0 0.0
        %2923 = vmatprep.subr.mxu0 0.0
        %2924 = vmatpush1.msra.mxu0 0.0
        %2925 = vmatprep.subr.mxu0 0.0
        %2926 = vmatpush1.msra.mxu0 0.0
        %2927 = vmatprep.subr.mxu0 0.0
        %2928 = vmatpush1.msra.mxu0 0.0
        %2929 = vmatprep.subr.mxu0 0.0
        %2930 = vmatpush1.msra.mxu0 0.0
        %2931 = vmatprep.subr.mxu0 0.0
        %2932 = vmatpush1.msra.mxu0 0.0
        %2933 = vmatprep.subr.mxu0 0.0
        %2934 = vmatpush1.msra.mxu0 0.0
        %2935 = vmatprep.subr.mxu0 0.0
        %2936 = vmatpush1.msra.mxu0 0.0
        %2937 = vmatprep.mubr.f32.mxu0 0.0
        %2938 = vmatmul.mubr.f32.gmra.mrb[0].mxu0 %v2867
        %v2939 = vpop.f32.mrb[0].mxu0
        %v2940 = vadd.f32 0.0, %v2939
        %v2941 = vpop.f32.mrb[0].mxu0
        %2942 = vdwg.mxu0
        %v2943 = vsel %vm1505, %v1001, 0
        %2945 = vmatprep.subr.mxu0 0.0
        %2946 = vmatpush1.msra.mxu0 %v2865
        %2947 = vmatprep.subr.mxu0 0.0
        %2948 = vmatpush1.msra.mxu0 %v2871
        %2949 = vmatprep.subr.mxu0 0.0
        %2950 = vmatpush1.msra.mxu0 0.0
        %2951 = vmatprep.subr.mxu0 0.0
        %2952 = vmatpush1.msra.mxu0 0.0
        %2953 = vmatprep.subr.mxu0 0.0
        %2954 = vmatpush1.msra.mxu0 0.0
        %2955 = vmatprep.subr.mxu0 0.0
        %2956 = vmatpush1.msra.mxu0 0.0
        %2957 = vmatprep.subr.mxu0 0.0
        %2958 = vmatpush1.msra.mxu0 0.0
        %2959 = vmatprep.subr.mxu0 0.0
        %2960 = vmatpush1.msra.mxu0 0.0
        %2961 = vmatprep.subr.mxu0 0.0
        %2962 = vmatpush1.msra.mxu0 0.0
        %2963 = vmatprep.subr.mxu0 0.0
        %2964 = vmatpush1.msra.mxu0 0.0
        %2965 = vmatprep.subr.mxu0 0.0
        %2966 = vmatpush1.msra.mxu0 0.0
        %2967 = vmatprep.subr.mxu0 0.0
        %2968 = vmatpush1.msra.mxu0 0.0
        %2969 = vmatprep.subr.mxu0 0.0
        %2970 = vmatpush1.msra.mxu0 0.0
        %2971 = vmatprep.subr.mxu0 0.0
        %2972 = vmatpush1.msra.mxu0 0.0
        %2973 = vmatprep.subr.mxu0 0.0
        %2974 = vmatpush1.msra.mxu0 0.0
        %2975 = vmatprep.subr.mxu0 0.0
        %2976 = vmatpush1.msra.mxu0 0.0
        %2977 = vmatprep.subr.mxu0 0.0
        %2978 = vmatpush1.msra.mxu0 0.0
        %2979 = vmatprep.subr.mxu0 0.0
        %2980 = vmatpush1.msra.mxu0 0.0
        %2981 = vmatprep.subr.mxu0 0.0
        %2982 = vmatpush1.msra.mxu0 0.0
        %2983 = vmatprep.subr.mxu0 0.0
        %2984 = vmatpush1.msra.mxu0 0.0
        %2985 = vmatprep.subr.mxu0 0.0
        %2986 = vmatpush1.msra.mxu0 0.0
        %2987 = vmatprep.subr.mxu0 0.0
        %2988 = vmatpush1.msra.mxu0 0.0
        %2989 = vmatprep.subr.mxu0 0.0
        %2990 = vmatpush1.msra.mxu0 0.0
        %2991 = vmatprep.subr.mxu0 0.0
        %2992 = vmatpush1.msra.mxu0 0.0
        %2993 = vmatprep.subr.mxu0 0.0
        %2994 = vmatpush1.msra.mxu0 0.0
        %2995 = vmatprep.subr.mxu0 0.0
        %2996 = vmatpush1.msra.mxu0 0.0
        %2997 = vmatprep.subr.mxu0 0.0
        %2998 = vmatpush1.msra.mxu0 0.0
        %2999 = vmatprep.subr.mxu0 0.0
        %3000 = vmatpush1.msra.mxu0 0.0
        %3001 = vmatprep.subr.mxu0 0.0
        %3002 = vmatpush1.msra.mxu0 0.0
        %3003 = vmatprep.subr.mxu0 0.0
        %3004 = vmatpush1.msra.mxu0 0.0
        %3005 = vmatprep.subr.mxu0 0.0
        %3006 = vmatpush1.msra.mxu0 0.0
        %3007 = vmatprep.subr.mxu0 0.0
        %3008 = vmatpush1.msra.mxu0 0.0
        %3009 = vmatprep.mubr.f32.mxu0 0.0
        %3010 = vmatmul.mubr.f32.gmra.mrb[0].mxu0 %v2943
        %v3011 = vpop.f32.mrb[0].mxu0
        %v3012 = vadd.f32 0.0, %v3011
        %v3013 = vpop.f32.mrb[0].mxu0
        %3014 = vdwg.mxu0
        %v3015 = vmax.f32 %v2940, %v3012
        %v3017 = vsel %vm379, %v3015, 0
        %3019 = vmatprep.subr.mxu0 0.0
        %3020 = vmatpush1.msra.mxu0 %v1044
        %3021 = vmatprep.subr.mxu0 0.0
        %3022 = vmatpush1.msra.mxu0 %v1045
        %3023 = vmatprep.subr.mxu0 0.0
        %3024 = vmatpush1.msra.mxu0 %v1046
        %3025 = vmatprep.subr.mxu0 0.0
        %3026 = vmatpush1.msra.mxu0 %v1047
        %3027 = vmatprep.subr.mxu0 0.0
        %3028 = vmatpush1.msra.mxu0 %v1048
        %3029 = vmatprep.subr.mxu0 0.0
        %3030 = vmatpush1.msra.mxu0 %v1049
        %3031 = vmatprep.subr.mxu0 0.0
        %3032 = vmatpush1.msra.mxu0 %v1050
        %3033 = vmatprep.subr.mxu0 0.0
        %3034 = vmatpush1.msra.mxu0 0.0
        %3035 = vmatprep.subr.mxu0 0.0
        %3036 = vmatpush1.msra.mxu0 0.0
        %3037 = vmatprep.subr.mxu0 0.0
        %3038 = vmatpush1.msra.mxu0 0.0
        %3039 = vmatprep.subr.mxu0 0.0
        %3040 = vmatpush1.msra.mxu0 0.0
        %3041 = vmatprep.subr.mxu0 0.0
        %3042 = vmatpush1.msra.mxu0 0.0
        %3043 = vmatprep.subr.mxu0 0.0
        %3044 = vmatpush1.msra.mxu0 0.0
        %3045 = vmatprep.subr.mxu0 0.0
        %3046 = vmatpush1.msra.mxu0 0.0
        %3047 = vmatprep.subr.mxu0 0.0
        %3048 = vmatpush1.msra.mxu0 0.0
        %3049 = vmatprep.subr.mxu0 0.0
        %3050 = vmatpush1.msra.mxu0 0.0
        %3051 = vmatprep.subr.mxu0 0.0
        %3052 = vmatpush1.msra.mxu0 0.0
        %3053 = vmatprep.subr.mxu0 0.0
        %3054 = vmatpush1.msra.mxu0 0.0
        %3055 = vmatprep.subr.mxu0 0.0
        %3056 = vmatpush1.msra.mxu0 0.0
        %3057 = vmatprep.subr.mxu0 0.0
        %3058 = vmatpush1.msra.mxu0 0.0
        %3059 = vmatprep.subr.mxu0 0.0
        %3060 = vmatpush1.msra.mxu0 0.0
        %3061 = vmatprep.subr.mxu0 0.0
        %3062 = vmatpush1.msra.mxu0 0.0
        %3063 = vmatprep.subr.mxu0 0.0
        %3064 = vmatpush1.msra.mxu0 0.0
        %3065 = vmatprep.subr.mxu0 0.0
        %3066 = vmatpush1.msra.mxu0 0.0
        %3067 = vmatprep.subr.mxu0 0.0
        %3068 = vmatpush1.msra.mxu0 0.0
        %3069 = vmatprep.subr.mxu0 0.0
        %3070 = vmatpush1.msra.mxu0 0.0
        %3071 = vmatprep.subr.mxu0 0.0
        %3072 = vmatpush1.msra.mxu0 0.0
        %3073 = vmatprep.subr.mxu0 0.0
        %3074 = vmatpush1.msra.mxu0 0.0
        %3075 = vmatprep.subr.mxu0 0.0
        %3076 = vmatpush1.msra.mxu0 0.0
        %3077 = vmatprep.subr.mxu0 0.0
        %3078 = vmatpush1.msra.mxu0 0.0
        %3079 = vmatprep.subr.mxu0 0.0
        %3080 = vmatpush1.msra.mxu0 0.0
        %3081 = vmatprep.subr.mxu0 0.0
        %3082 = vmatpush1.msra.mxu0 0.0
        %3083 = vmatprep.mubr.f32.mxu0 0.0
        %3084 = vmatmul.mubr.f32.gmra.mrb[0].mxu0 %v3017
        %v3085 = vpop.f32.mrb[0].mxu0
        %v3086 = vadd.f32 0.0, %v3085
        %v3087 = vpop.f32.mrb[0].mxu0
        %3088 = vdwg.mxu0
        %3089 = vmatprep.subr.mxu0 0.0
        %3090 = vmatpush1.msra.mxu0 %v1087
        %3091 = vmatprep.subr.mxu0 0.0
        %3092 = vmatpush1.msra.mxu0 %v1088
        %3093 = vmatprep.subr.mxu0 0.0
        %3094 = vmatpush1.msra.mxu0 %v1089
        %3095 = vmatprep.subr.mxu0 0.0
        %3096 = vmatpush1.msra.mxu0 %v1090
        %3097 = vmatprep.subr.mxu0 0.0
        %3098 = vmatpush1.msra.mxu0 %v1091
        %3099 = vmatprep.subr.mxu0 0.0
        %3100 = vmatpush1.msra.mxu0 %v1092
        %3101 = vmatprep.subr.mxu0 0.0
        %3102 = vmatpush1.msra.mxu0 %v1093
        %3103 = vmatprep.subr.mxu0 0.0
        %3104 = vmatpush1.msra.mxu0 0.0
        %3105 = vmatprep.subr.mxu0 0.0
        %3106 = vmatpush1.msra.mxu0 0.0
        %3107 = vmatprep.subr.mxu0 0.0
        %3108 = vmatpush1.msra.mxu0 0.0
        %3109 = vmatprep.subr.mxu0 0.0
        %3110 = vmatpush1.msra.mxu0 0.0
        %3111 = vmatprep.subr.mxu0 0.0
        %3112 = vmatpush1.msra.mxu0 0.0
        %3113 = vmatprep.subr.mxu0 0.0
        %3114 = vmatpush1.msra.mxu0 0.0
        %3115 = vmatprep.subr.mxu0 0.0
        %3116 = vmatpush1.msra.mxu0 0.0
        %3117 = vmatprep.subr.mxu0 0.0
        %3118 = vmatpush1.msra.mxu0 0.0
        %3119 = vmatprep.subr.mxu0 0.0
        %3120 = vmatpush1.msra.mxu0 0.0
        %3121 = vmatprep.subr.mxu0 0.0
        %3122 = vmatpush1.msra.mxu0 0.0
        %3123 = vmatprep.subr.mxu0 0.0
        %3124 = vmatpush1.msra.mxu0 0.0
        %3125 = vmatprep.subr.mxu0 0.0
        %3126 = vmatpush1.msra.mxu0 0.0
        %3127 = vmatprep.subr.mxu0 0.0
        %3128 = vmatpush1.msra.mxu0 0.0
        %3129 = vmatprep.subr.mxu0 0.0
        %3130 = vmatpush1.msra.mxu0 0.0
        %3131 = vmatprep.subr.mxu0 0.0
        %3132 = vmatpush1.msra.mxu0 0.0
        %3133 = vmatprep.subr.mxu0 0.0
        %3134 = vmatpush1.msra.mxu0 0.0
        %3135 = vmatprep.subr.mxu0 0.0
        %3136 = vmatpush1.msra.mxu0 0.0
        %3137 = vmatprep.subr.mxu0 0.0
        %3138 = vmatpush1.msra.mxu0 0.0
        %3139 = vmatprep.subr.mxu0 0.0
        %3140 = vmatpush1.msra.mxu0 0.0
        %3141 = vmatprep.subr.mxu0 0.0
        %3142 = vmatpush1.msra.mxu0 0.0
        %3143 = vmatprep.subr.mxu0 0.0
        %3144 = vmatpush1.msra.mxu0 0.0
        %3145 = vmatprep.subr.mxu0 0.0
        %3146 = vmatpush1.msra.mxu0 0.0
        %3147 = vmatprep.subr.mxu0 0.0
        %3148 = vmatpush1.msra.mxu0 0.0
        %3149 = vmatprep.subr.mxu0 0.0
        %3150 = vmatpush1.msra.mxu0 0.0
        %3151 = vmatprep.subr.mxu0 0.0
        %3152 = vmatpush1.msra.mxu0 0.0
        %3153 = vmatprep.mubr.f32.mxu0 0.0
        %3154 = vmatmul.mubr.f32.gmra.mrb[0].mxu0 %v3017
        %v3155 = vpop.f32.mrb[0].mxu0
        %v3156 = vadd.f32 0.0, %v3155
        %v3157 = vpop.f32.mrb[0].mxu0
        %3158 = vdwg.mxu0
        %v3159 = vmax.f32 %v3086, %v3156
        %v3161 = vrot.slane %v3159, 1
        %3162 = vrot.lane.b32.xlu0 %v3161, 28
        %v3163 = vpop.permute.xlu0 %3162
        %v3165 = vrot.slane %v3159, 2
        %3166 = vrot.lane.b32.xlu0 %v3165, 56
        %v3167 = vpop.permute.xlu0 %3166
        %v3169 = vrot.slane %v3159, 3
        %3170 = vrot.lane.b32.xlu0 %v3169, 84
        %v3171 = vpop.permute.xlu0 %3170
        %v3173 = vrot.slane %v3159, 4
        %3174 = vrot.lane.b32.xlu0 %v3173, 112
        %v3175 = vpop.permute.xlu0 %3174
        %v3177 = vrot.slane %v3159, 5
        %3178 = vrot.lane.b32.xlu0 %v3177, 12
        %v3179 = vpop.permute.xlu0 %3178
        %v3181 = vrot.slane %v3159, 6
        %3182 = vrot.lane.b32.xlu0 %v3181, 40
        %v3183 = vpop.permute.xlu0 %3182
        %v3185 = vsel %vm374, %v3159, %v3163
        %v3186 = vsel %vm379, %v3185, %v3167
        %v3187 = vsel %vm384, %v3186, %v3171
        %v3188 = vsel %vm1269, %v3187, %v3175
        %vm3189 = vcmask 97280
        %v3190 = vsel %vm3189, %v3175, %v3179
        %vm3191 = vcmask 326656
        %v3192 = vsel %vm3191, %v3190, %v3183
        %v3193 = vld [vmem:[#allocation4] sm:$0xff]
        %v3194 = vld [vmem:[#allocation4 + $0x8] sm:$0xff]
        %v3195 = vld [vmem:[#allocation4 + $0x10] sm:$0xff]
        %v3196 = vld [vmem:[#allocation4 + $0x18] sm:$0xff]
        %v3197 = vld [vmem:[#allocation4 + $0x20] sm:$0xff]
        %v3198 = vld [vmem:[#allocation4 + $0x28] sm:$0xff]
        %v3199 = vld [vmem:[#allocation4 + $0x30] sm:$0xff]
        %v3200 = vld [vmem:[#allocation4 + $0x38] sm:$0xff]
        %v3201 = vld [vmem:[#allocation4 + $0x40] sm:$0xff]
        %v3202 = vld [vmem:[#allocation4 + $0x48] sm:$0xff]
        %v3203 = vld [vmem:[#allocation4 + $0x50] sm:$0xff]
        %v3204 = vld [vmem:[#allocation4 + $0x58] sm:$0xff]
        %v3205 = vld [vmem:[#allocation4 + $0x60] sm:$0xff]
        %v3206 = vld [vmem:[#allocation4 + $0x68] sm:$0xff]
        %v3207 = vld [vmem:[#allocation4 + $0x70] sm:$0xff]
        %v3208 = vld [vmem:[#allocation4 + $0x78] sm:$0xff]
        %v3209 = vld [vmem:[#allocation4 + $0x80] sm:$0xff]
        %v3210 = vld [vmem:[#allocation4 + $0x88] sm:$0xff]
        %v3211 = vld [vmem:[#allocation4 + $0x90] sm:$0xff]
        %v3212 = vld [vmem:[#allocation4 + $0x98] sm:$0xff]
        %v3213 = vld [vmem:[#allocation4 + $0xa0] sm:$0xff]
        %v3214 = vld [vmem:[#allocation4 + $0xa8] sm:$0xff]
        %v3215 = vld [vmem:[#allocation4 + $0xb0] sm:$0xff]
        %v3216 = vld [vmem:[#allocation4 + $0xb8] sm:$0xff]
        %v3217 = vld [vmem:[#allocation4 + $0xc0] sm:$0xf]
        %v3218 = vld [vmem:[%s6] sm:$0x1]
        %vm3219 = vcmask 556032
        %v3221 = vsel %vm3219, %v3192, 0
        %v3224 = vsel %vm1107, %v3217, 0
        %3226 = vmatprep.subr.mxu0 0.0
        %3227 = vmatpush1.msra.mxu0 %v3193
        %3228 = vmatprep.subr.mxu0 0.0
        %3229 = vmatpush1.msra.mxu0 %v3194
        %3230 = vmatprep.subr.mxu0 0.0
        %3231 = vmatpush1.msra.mxu0 %v3195
        %3232 = vmatprep.subr.mxu0 0.0
        %3233 = vmatpush1.msra.mxu0 %v3196
        %3234 = vmatprep.subr.mxu0 0.0
        %3235 = vmatpush1.msra.mxu0 %v3197
        %3236 = vmatprep.subr.mxu0 0.0
        %3237 = vmatpush1.msra.mxu0 %v3198
        %3238 = vmatprep.subr.mxu0 0.0
        %3239 = vmatpush1.msra.mxu0 %v3199
        %3240 = vmatprep.subr.mxu0 0.0
        %3241 = vmatpush1.msra.mxu0 %v3200
        %3242 = vmatprep.subr.mxu0 0.0
        %3243 = vmatpush1.msra.mxu0 %v3201
        %3244 = vmatprep.subr.mxu0 0.0
        %3245 = vmatpush1.msra.mxu0 %v3202
        %3246 = vmatprep.subr.mxu0 0.0
        %3247 = vmatpush1.msra.mxu0 %v3203
        %3248 = vmatprep.subr.mxu0 0.0
        %3249 = vmatpush1.msra.mxu0 %v3204
        %3250 = vmatprep.subr.mxu0 0.0
        %3251 = vmatpush1.msra.mxu0 %v3205
        %3252 = vmatprep.subr.mxu0 0.0
        %3253 = vmatpush1.msra.mxu0 %v3206
        %3254 = vmatprep.subr.mxu0 0.0
        %3255 = vmatpush1.msra.mxu0 %v3207
        %3256 = vmatprep.subr.mxu0 0.0
        %3257 = vmatpush1.msra.mxu0 %v3208
        %3258 = vmatprep.subr.mxu0 0.0
        %3259 = vmatpush1.msra.mxu0 %v3209
        %3260 = vmatprep.subr.mxu0 0.0
        %3261 = vmatpush1.msra.mxu0 %v3210
        %3262 = vmatprep.subr.mxu0 0.0
        %3263 = vmatpush1.msra.mxu0 %v3211
        %3264 = vmatprep.subr.mxu0 0.0
        %3265 = vmatpush1.msra.mxu0 %v3212
        %3266 = vmatprep.subr.mxu0 0.0
        %3267 = vmatpush1.msra.mxu0 %v3213
        %3268 = vmatprep.subr.mxu0 0.0
        %3269 = vmatpush1.msra.mxu0 %v3214
        %3270 = vmatprep.subr.mxu0 0.0
        %3271 = vmatpush1.msra.mxu0 %v3215
        %3272 = vmatprep.subr.mxu0 0.0
        %3273 = vmatpush1.msra.mxu0 %v3216
        %3274 = vmatprep.subr.mxu0 0.0
        %3275 = vmatpush1.msra.mxu0 %v3224
        %3276 = vmatprep.subr.mxu0 0.0
        %3277 = vmatpush1.msra.mxu0 0.0
        %3278 = vmatprep.subr.mxu0 0.0
        %3279 = vmatpush1.msra.mxu0 0.0
        %3280 = vmatprep.subr.mxu0 0.0
        %3281 = vmatpush1.msra.mxu0 0.0
        %3282 = vmatprep.subr.mxu0 0.0
        %3283 = vmatpush1.msra.mxu0 0.0
        %3284 = vmatprep.subr.mxu0 0.0
        %3285 = vmatpush1.msra.mxu0 0.0
        %3286 = vmatprep.subr.mxu0 0.0
        %3287 = vmatpush1.msra.mxu0 0.0
        %3288 = vmatprep.subr.mxu0 0.0
        %3289 = vmatpush1.msra.mxu0 0.0
        %3290 = vmatprep.mubr.f32.mxu0 %v3221
        %3291 = vmatmul.mubr.f32.gmra.mrb[0].mxu0 %v3188
        %v3292 = vpop.f32.mrb[0].mxu0
        %v3293 = vadd.f32 %v3218, %v3292
        %v3294 = vpop.f32.mrb[0].mxu0
        %3295 = vdwg.mxu0
        %vm3296 = vcmask 81920
        %3297 = vst.msk [vmem:[%s285] sm:$0x1] %vm3296, %v3293
        %s3298 = sand.u32 %s182, 1
        %s3299 = scalar_lea.sflag [#allocation6], %s3298
        %s3300 = sand.u32 %s182, 1
        %s3301 = scalar_lea.vmem [#allocation7], %s3300
        // Predicated region
        $region53: #{tpu_custom_call.1} parent=47 // pred_check
          %p3302 = pneg %p192
        $region54: #{tpu_custom_call.1} parent=47 // pred_check_branch
          %3304 = sbr.rel (%p3302) target = $region56
        $region55: #{tpu_custom_call.1} parent=47 // pred_region
          %s3306 = ssub.s32 16, 16
          %3307 = vsyncadd %s3299, %s3306
          %s3308 = smul.addr %s22, 16
          %s3309 = scalar_lea.hbm %s7, %s3308
          %s3311 = sshll.u32 %s3301, 4
          %s3312 = int_to_ptr.vmem [resolvable:$true] %s3311
          %3314 = dma.vmem_to_hbm [thread:$0]  %s3312, 16, %s3309, %s3299
        $region56: #{tpu_custom_call.1} parent=47 // pred_fallthru
          _
      $region48: #{tpu_custom_call.1} parent=5 // pred_fallthru
        _
      %p3315 = scmp.le.s32.totalorder 2, %s17
      // Predicated region
      $region57: #{tpu_custom_call.1} parent=5 // pred_check
        %p3316 = pneg %p3315
      $region58: #{tpu_custom_call.1} parent=5 // pred_check_branch
        %3318 = sbr.rel (%p3316) target = $region60
      $region59: #{tpu_custom_call.1} parent=5 // pred_region
        %s3319 = ssub.s32 %s17, 2
        // Predicated region
        $region61: #{tpu_custom_call.1} parent=59 // pred_check
          %p3320 = pneg %p198
        $region62: #{tpu_custom_call.1} parent=59 // pred_check_branch
          %3322 = sbr.rel (%p3320) target = $region64
        $region63: #{tpu_custom_call.1} parent=59 // pred_region
          %s3323 = sand.u32 %s183, 1
          %s3324 = scalar_lea.sflag [#allocation6], %s3323
          %s3325 = sand.u32 %s183, 1
          %s3326 = scalar_lea.vmem [#allocation7], %s3325
          %3327 = dma.done %s3324, 16
        $region64: #{tpu_custom_call.1} parent=59 // pred_fallthru
          _
      $region60: #{tpu_custom_call.1} parent=5 // pred_fallthru
        _
    $region6: #{tpu_custom_call.1} parent=1 // loop_footer
      %s21 = sadd.s32 1, %s17
    $region7: #{tpu_custom_call.1} parent=1 // loop_footer_branch
      %16 = sbr.rel target = $region3
    $region8: #{tpu_custom_call.1} parent=1 // loop_exit
      _
    %3328 = vsyncpa [#allocation5], 1
    %s3329 = scalar_lea.sflag [#allocation5], 1
    %3330 = vsyncpa %s3329, 1
    %3331 = vsyncpa [#allocation6], 1
    %s3332 = scalar_lea.sflag [#allocation6], 1
    %3333 = vsyncpa %s3332, 1

</llo_original>
